<compile_context>
chip_gen: v7x
topology: tpu7x:2x2x1
jax: 0.10.0
libtpu: 0.0.40
codegen_flags: <defaults>
</compile_context>

<pallas_src>
import functools

import jax
import jax.numpy as jnp
from jax.experimental import pallas as pl
from jax.experimental.pallas import tpu as pltpu


# --------------------------- shared numerics helpers ---------------------------


def _bdot(a, b):
    """Matmul with bf16 operands and f32 accumulation (MXU-friendly).

    Shared by the Pallas kernels and the pure-JAX reference so both paths follow
    one dtype policy."""
    return jnp.dot(a.astype(jnp.bfloat16), b.astype(jnp.bfloat16),
                   preferred_element_type=jnp.float32)


def _rowstats(y):
    """Per-channel [sum | sum-of-squares] over rows, lane-packed: (1, 2*C)."""
    return jnp.concatenate(
        [jnp.sum(y, axis=0, keepdims=True),
         jnp.sum(y * y, axis=0, keepdims=True)], axis=-1)


# ------------------------------ Pallas kernels ---------------------------------


def _bn1_stats_kernel(x_ref, w1_ref, stats_ref):
    # Pass 1 of linear1+bn1: y1 = x @ W1 is recomputed later, never stored to HBM.
    y1 = _bdot(x_ref[...], w1_ref[...])
    stats_ref[...] = _rowstats(y1).reshape(stats_ref.shape)


def _qkv_kernel(x_ref, w1_ref, s1_ref, h1_ref, wqkv_ref, bqkv_ref, qkv_ref):
    # x1 = relu(bn1(linear1(x)));  q|k|v = x1 @ [Wq|Wk|Wv] + [bq|bk|bv]  (lane-packed)
    y1 = _bdot(x_ref[...], w1_ref[...])
    x1 = jnp.maximum(y1 * s1_ref[...] + h1_ref[...], 0.0)
    qkv_ref[...] = _bdot(x1, wqkv_ref[...]) + bqkv_ref[...]


def _w_and_pr(kg_ref, t2_ref, q_ref, wp1_ref, bp1_ref):
    # p_r = tail of linear_p (Linear(3->C)) on the precomputed relu(BN(Linear(3->3))).
    # w   = x_k - x_q + p_r   (out_planes // mid_planes == 1, so the .sum(2) is a no-op)
    p_r = _bdot(t2_ref[0], wp1_ref[...]) + bp1_ref[...]
    w = kg_ref[0].astype(jnp.float32) - q_ref[...] + p_r
    return w, p_r


def _w_stats_kernel(kg_ref, t2_ref, q_ref, wp1_ref, bp1_ref, stats_ref):
    w, _ = _w_and_pr(kg_ref, t2_ref, q_ref, wp1_ref, bp1_ref)
    stats_ref[...] = _rowstats(w).reshape(stats_ref.shape)


def _u_stats_kernel(kg_ref, t2_ref, q_ref, wp1_ref, bp1_ref,
                    sw_ref, hw_ref, ww0_ref, bw0_ref, stats_ref):
    w, _ = _w_and_pr(kg_ref, t2_ref, q_ref, wp1_ref, bp1_ref)
    u1 = jnp.maximum(w * sw_ref[...] + hw_ref[...], 0.0)
    u2 = _bdot(u1, ww0_ref[...]) + bw0_ref[...]
    stats_ref[...] = _rowstats(u2).reshape(stats_ref.shape)


def _attn_kernel(kg_ref, vg_ref, t2_ref, q_ref, wp1_ref, bp1_ref,
                 sw_ref, hw_ref, ww0_ref, bw0_ref,
                 su_ref, hu_ref, ww1_ref, bw1_ref,
                 out_ref, stats_ref, m_ref, l_ref, acc_ref, *, nshare):
    # Softmax over the neighbor grid axis (axis 1) via online softmax with resident
    # VMEM accumulators; also emits per-tile partial stats for bn2 at the last step.
    j = pl.program_id(1)

    @pl.when(j == 0)
    def _():
        m_ref[...] = jnp.full(m_ref.shape, -jnp.inf, dtype=m_ref.dtype)
        l_ref[...] = jnp.zeros(l_ref.shape, dtype=l_ref.dtype)
        acc_ref[...] = jnp.zeros(acc_ref.shape, dtype=acc_ref.dtype)

    w, p_r = _w_and_pr(kg_ref, t2_ref, q_ref, wp1_ref, bp1_ref)
    u1 = jnp.maximum(w * sw_ref[...] + hw_ref[...], 0.0)
    u2 = _bdot(u1, ww0_ref[...]) + bw0_ref[...]
    u4 = jnp.maximum(u2 * su_ref[...] + hu_ref[...], 0.0)
    logits = _bdot(u4, ww1_ref[...]) + bw1_ref[...]          # (tg, C // share)
    val = vg_ref[0].astype(jnp.float32) + p_r                # (tg, C)

    m_prev = m_ref[...]
    m_new = jnp.maximum(m_prev, logits)
    alpha = jnp.exp(m_prev - m_new)
    pj = jnp.exp(logits - m_new)
    l_ref[...] = alpha * l_ref[...] + pj
    acc_ref[...] = (acc_ref[...] * jnp.concatenate([alpha] * nshare, axis=-1)
                    + val * jnp.concatenate([pj] * nshare, axis=-1))
    m_ref[...] = m_new

    @pl.when(j == pl.num_programs(1) - 1)
    def _():
        inv_l = 1.0 / l_ref[...]
        out = acc_ref[...] * jnp.concatenate([inv_l] * nshare, axis=-1)
        out_ref[...] = out
        stats_ref[...] = _rowstats(out).reshape(stats_ref.shape)


def _bn3_stats_kernel(ot_ref, s2_ref, h2_ref, w3_ref, stats_ref):
    # stats of linear3(relu(bn2(y)));  linear3 output recomputed in the epilogue.
    x2 = jnp.maximum(ot_ref[...] * s2_ref[...] + h2_ref[...], 0.0)
    y3 = _bdot(x2, w3_ref[...])
    stats_ref[...] = _rowstats(y3).reshape(stats_ref.shape)


def _epilogue_kernel(ot_ref, s2_ref, h2_ref, w3_ref, s3_ref, h3_ref, xid_ref, out_ref):
    # relu( bn3(linear3(relu(bn2(y)))) + identity )
    x2 = jnp.maximum(ot_ref[...] * s2_ref[...] + h2_ref[...], 0.0)
    y3 = _bdot(x2, w3_ref[...])
    out_ref[...] = jnp.maximum(y3 * s3_ref[...] + h3_ref[...] + xid_ref[...], 0.0)


# ------------------------------ JAX wrapper / glue ------------------------------


def _pick_tile(n, target):
    """Largest row-tile that divides n, is <= target and keeps sublane alignment."""
    if n <= target:
        return n
    for d in range(min(target, n), 15, -1):
        if n % d == 0 and d % 16 == 0:
            return d
    return n  # fallback: single block over all rows


def _fold_bn(stats, count, gamma, beta, eps):
    """Fold training-mode BN batch stats (packed [sum|sumsq] partials) into scale/shift."""
    tot = jnp.sum(stats.astype(jnp.float32), axis=(0, 1))
    c = gamma.shape[0]
    mean = tot[:c] / count
    var = jnp.maximum(tot[c:] / count - mean * mean, 0.0)   # clamp: E[x^2]-E[x]^2 can dip < 0
    scale = gamma.astype(jnp.float32) * jax.lax.rsqrt(var + eps)
    shift = beta.astype(jnp.float32) - mean * scale
    return scale.reshape(1, c), shift.reshape(1, c)


def _knn_in_batch(p, o, nsample):
    # TODO(synk): boundaryops.boundaryquery (boundary/edge-constrained neighbor search)
    # is a custom CUDA op whose source is unavailable; approximated by brute-force
    # in-batch KNN, so `edges`/`boundary` are unused.  O(n^2) glue: fine for small clouds.
    n = p.shape[0]
    batch_id = jnp.sum(jnp.arange(n)[:, None] >= o[None, :], axis=1)
    d2 = jnp.sum((p[:, None, :] - p[None, :, :]) ** 2, axis=-1)
    d2 = jnp.where(batch_id[:, None] == batch_id[None, :], d2, jnp.inf)
    _, idx = jax.lax.top_k(-d2, nsample)
    return idx.astype(jnp.int32)


@functools.partial(jax.jit,
                   static_argnames=("nsample", "share", "tile_points", "tile_group", "bn_eps"))
def boundary_transformer_block_forward(p, x, o, edges, boundary, params, *,
                                       nsample, share,
                                       tile_points=4096, tile_group=2048, bn_eps=1e-5):
    del edges, boundary  # consumed only by the CUDA boundary query (see _knn_in_batch TODO)
    f32 = jnp.float32
    p = p.astype(f32)
    x = x.astype(f32)
    n, cin = x.shape
    C = params["w1"].shape[1]
    Cs = C // share
    ns = nsample
    if cin != C:
        raise ValueError("residual connection requires in_planes == planes")

    TN = _pick_tile(n, tile_points)    # per-point kernels
    TG = _pick_tile(n, tile_group)     # grouped (point x neighbor) kernels
    nt = n // TN
    gt = n // TG

    # ---- parameter packing: all weight matrices are (in, out) == PyTorch weight.T ----
    w1 = params["w1"].astype(f32)
    wqkv = jnp.concatenate([params["wq"], params["wk"], params["wv"]], axis=1).astype(f32)
    bqkv = jnp.concatenate([params["bq"], params["bk"], params["bv"]]).reshape(1, 3 * C).astype(f32)
    wp1 = jnp.pad(params["wp1"].astype(f32), ((0, 5), (0, 0)))      # K padded 3 -> 8
    bp1 = params["bp1"].reshape(1, C).astype(f32)
    ww0 = params["ww0"].astype(f32)
    bw0 = params["bw0"].reshape(1, Cs).astype(f32)
    ww1 = params["ww1"].astype(f32)
    bw1 = params["bw1"].reshape(1, Cs).astype(f32)
    w3 = params["w3"].astype(f32)

    parallel1 = pltpu.CompilerParams(dimension_semantics=("parallel",))
    parallel2 = pltpu.CompilerParams(dimension_semantics=("parallel", "parallel"))

    # ---- kernel 1: bn1 batch stats of linear1(x) (recompute pattern, y1 never stored) ----
    stats1 = pl.pallas_call(
        _bn1_stats_kernel,
        out_shape=jax.ShapeDtypeStruct((nt, 1, 2 * C), f32),
        grid_spec=pltpu.PrefetchScalarGridSpec(
            num_scalar_prefetch=0, grid=(nt,),
            in_specs=[pl.BlockSpec((TN, cin), lambda i: (i, 0)),
                      pl.BlockSpec((cin, C), lambda i: (0, 0))],
            out_specs=pl.BlockSpec((1, 1, 2 * C), lambda i: (i, 0, 0))),
        compiler_params=parallel1,
    )(x, w1)
    s1, h1 = _fold_bn(stats1, float(n), params["g1"], params["b1"], bn_eps)

    # ---- kernel 2: x1 = relu(bn1(linear1 x));  lane-packed q|k|v = x1 @ Wqkv + bqkv ----
    qkv = pl.pallas_call(
        _qkv_kernel,
        out_shape=jax.ShapeDtypeStruct((n, 3 * C), f32),
        grid_spec=pltpu.PrefetchScalarGridSpec(
            num_scalar_prefetch=0, grid=(nt,),
            in_specs=[pl.BlockSpec((TN, cin), lambda i: (i, 0)),
                      pl.BlockSpec((cin, C), lambda i: (0, 0)),
                      pl.BlockSpec((1, C), lambda i: (0, 0)),
                      pl.BlockSpec((1, C), lambda i: (0, 0)),
                      pl.BlockSpec((C, 3 * C), lambda i: (0, 0)),
                      pl.BlockSpec((1, 3 * C), lambda i: (0, 0))],
            out_specs=pl.BlockSpec((TN, 3 * C), lambda i: (i, 0))),
        compiler_params=parallel1,
    )(x, w1, s1, h1, wqkv, bqkv)
    q = qkv[:, :C]
    k = qkv[:, C:2 * C]
    v = qkv[:, 2 * C:]

    # ---- glue: boundary grouping (neighbor-major, bf16) + 3-lane linear_p front-end ----
    idx = _knn_in_batch(p, o, ns)
    idx_t = idx.T                                           # (ns, n)
    kg = k.astype(jnp.bfloat16)[idx_t]                      # (ns, n, C)
    vg = v.astype(jnp.bfloat16)[idx_t]                      # (ns, n, C)
    pr0 = p[idx_t] - p[None, :, :]                          # (ns, n, 3) relative xyz
    # linear_p[0:3] (Linear(3,3)+BN(3)+ReLU) is 3-lane-wide work; a kernel would waste
    # 125/128 lanes, so it stays in plain JAX.  Its tiny output feeds the grouped kernels.
    t0 = pr0 @ params["wp0"].astype(f32) + params["bp0"].astype(f32)
    mu = jnp.mean(t0, axis=(0, 1))
    vr = jnp.maximum(jnp.mean(t0 * t0, axis=(0, 1)) - mu * mu, 0.0)
    t2 = jnp.maximum((t0 - mu) * jax.lax.rsqrt(vr + bn_eps) * params["gp"].astype(f32)
                     + params["btp"].astype(f32), 0.0)
    t2p = jnp.pad(t2, ((0, 0), (0, 0), (0, 5))).astype(jnp.bfloat16)   # (ns, n, 8)

    # shared BlockSpecs for the grouped kernels (grid = (point tiles, nsample))
    grpC_spec = pl.BlockSpec((1, TG, C), lambda i, j: (j, i, 0))
    t2_spec = pl.BlockSpec((1, TG, 8), lambda i, j: (j, i, 0))
    q_spec = pl.BlockSpec((TG, C), lambda i, j: (i, 0))
    wp1_spec = pl.BlockSpec((8, C), lambda i, j: (0, 0))
    cvec_spec = pl.BlockSpec((1, C), lambda i, j: (0, 0))
    ww0_spec = pl.BlockSpec((C, Cs), lambda i, j: (0, 0))
    ww1_spec = pl.BlockSpec((Cs, Cs), lambda i, j: (0, 0))
    svec_spec = pl.BlockSpec((1, Cs), lambda i, j: (0, 0))
    gstatC_spec = pl.BlockSpec((1, 1, 2 * C), lambda i, j: (i * ns + j, 0, 0))
    gstatS_spec = pl.BlockSpec((1, 1, 2 * Cs), lambda i, j: (i * ns + j, 0, 0))

    # ---- kernel 3: batch stats of w = x_k - x_q + p_r   (linear_w BN #1) ----
    stats_w = pl.pallas_call(
        _w_stats_kernel,
        out_shape=jax.ShapeDtypeStruct((gt * ns, 1, 2 * C), f32),
        grid_spec=pltpu.PrefetchScalarGridSpec(
            num_scalar_prefetch=0, grid=(gt, ns),
            in_specs=[grpC_spec, t2_spec, q_spec, wp1_spec, cvec_spec],
            out_specs=gstatC_spec),
        compiler_params=parallel2,
    )(kg, t2p, q, wp1, bp1)
    sw, hw = _fold_bn(stats_w, float(n * ns), params["gw0"], params["bw0bn"], bn_eps)

    # ---- kernel 4: batch stats after Linear(C -> C/share)   (linear_w BN #2) ----
    stats_u = pl.pallas_call(
        _u_stats_kernel,
        out_shape=jax.ShapeDtypeStruct((gt * ns, 1, 2 * Cs), f32),
        grid_spec=pltpu.PrefetchScalarGridSpec(
            num_scalar_prefetch=0, grid=(gt, ns),
            in_specs=[grpC_spec, t2_spec, q_spec, wp1_spec, cvec_spec,
                      cvec_spec, cvec_spec, ww0_spec, svec_spec],
            out_specs=gstatS_spec),
        compiler_params=parallel2,
    )(kg, t2p, q, wp1, bp1, sw, hw, ww0, bw0)
    su, hu = _fold_bn(stats_u, float(n * ns), params["gw3"], params["bw3bn"], bn_eps)

    # ---- kernel 5: attention logits + softmax over neighbors + weighted aggregation ----
    out_t, stats2 = pl.pallas_call(
        functools.partial(_attn_kernel, nshare=share),
        out_shape=(jax.ShapeDtypeStruct((n, C), f32),
                   jax.ShapeDtypeStruct((gt, 1, 2 * C), f32)),
        grid_spec=pltpu.PrefetchScalarGridSpec(
            num_scalar_prefetch=0, grid=(gt, ns),
            in_specs=[grpC_spec, grpC_spec, t2_spec, q_spec, wp1_spec, cvec_spec,
                      cvec_spec, cvec_spec, ww0_spec, svec_spec,
                      svec_spec, svec_spec, ww1_spec, svec_spec],
            out_specs=(pl.BlockSpec((TG, C), lambda i, j: (i, 0)),
                       pl.BlockSpec((1, 1, 2 * C), lambda i, j: (i, 0, 0))),
            scratch_shapes=[pltpu.VMEM((TG, Cs), f32),    # running max
                            pltpu.VMEM((TG, Cs), f32),    # running denom
                            pltpu.VMEM((TG, C), f32)]),   # weighted accumulator
        compiler_params=pltpu.CompilerParams(
            dimension_semantics=("parallel", "arbitrary")),
    )(kg, vg, t2p, q, wp1, bp1, sw, hw, ww0, bw0, su, hu, ww1, bw1)
    s2, h2 = _fold_bn(stats2, float(n), params["g2"], params["b2"], bn_eps)

    # ---- kernel 6: bn3 batch stats of linear3(relu(bn2(y)))  (recompute pattern) ----
    stats3 = pl.pallas_call(
        _bn3_stats_kernel,
        out_shape=jax.ShapeDtypeStruct((nt, 1, 2 * C), f32),
        grid_spec=pltpu.PrefetchScalarGridSpec(
            num_scalar_prefetch=0, grid=(nt,),
            in_specs=[pl.BlockSpec((TN, C), lambda i: (i, 0)),
                      pl.BlockSpec((1, C), lambda i: (0, 0)),
                      pl.BlockSpec((1, C), lambda i: (0, 0)),
                      pl.BlockSpec((C, C), lambda i: (0, 0))],
            out_specs=pl.BlockSpec((1, 1, 2 * C), lambda i: (i, 0, 0))),
        compiler_params=parallel1,
    )(out_t, s2, h2, w3)
    s3, h3 = _fold_bn(stats3, float(n), params["g3"], params["b3"], bn_eps)

    # ---- kernel 7: fused bn2 + relu + linear3 + bn3 + residual + relu ----
    xout = pl.pallas_call(
        _epilogue_kernel,
        out_shape=jax.ShapeDtypeStruct((n, C), f32),
        grid_spec=pltpu.PrefetchScalarGridSpec(
            num_scalar_prefetch=0, grid=(nt,),
            in_specs=[pl.BlockSpec((TN, C), lambda i: (i, 0)),
                      pl.BlockSpec((1, C), lambda i: (0, 0)),
                      pl.BlockSpec((1, C), lambda i: (0, 0)),
                      pl.BlockSpec((C, C), lambda i: (0, 0)),
                      pl.BlockSpec((1, C), lambda i: (0, 0)),
                      pl.BlockSpec((1, C), lambda i: (0, 0)),
                      pl.BlockSpec((TN, cin), lambda i: (i, 0))],
            out_specs=pl.BlockSpec((TN, C), lambda i: (i, 0))),
        compiler_params=parallel1,
    )(out_t, s2, h2, w3, s3, h3, x)

    return p, xout, o


# ------------------------------ pure-JAX reference ------------------------------


def _reference(p, x, params, idx, nsample, share, bn_eps=1e-5):
    """Plain-JAX forward of BoundaryTransformerBlock (training-mode BN), mirroring the
    kernels' numerics policy (bf16 matmul operands / bf16 gathered neighbors, f32 math)."""
    f32 = jnp.float32
    n = x.shape[0]
    C = params["w1"].shape[1]
    Cs = C // share
    ns = nsample
    x = x.astype(f32)
    p = p.astype(f32)

    def bn(yv, gamma, beta, axes):
        muv = yv.mean(axes)
        vrv = jnp.maximum((yv * yv).mean(axes) - muv * muv, 0.0)
        return (yv - muv) * jax.lax.rsqrt(vrv + bn_eps) * gamma + beta

    x1 = jnp.maximum(bn(_bdot(x, params["w1"]), params["g1"], params["b1"], 0), 0.0)
    q = _bdot(x1, params["wq"]) + params["bq"]
    k = _bdot(x1, params["wk"]) + params["bk"]
    v = _bdot(x1, params["wv"]) + params["bv"]
    kg = k.astype(jnp.bfloat16).astype(f32)[idx]                 # (n, ns, C)
    vg = v.astype(jnp.bfloat16).astype(f32)[idx]
    pr0 = p[idx] - p[:, None, :]                                 # (n, ns, 3)
    t0 = pr0 @ params["wp0"] + params["bp0"]
    t2 = jnp.maximum(bn(t0, params["gp"], params["btp"], (0, 1)), 0.0)
    p_r = _bdot(t2, params["wp1"]) + params["bp1"]               # (n, ns, C)
    w = kg - q[:, None, :] + p_r
    u1 = jnp.maximum(bn(w, params["gw0"], params["bw0bn"], (0, 1)), 0.0)
    u2 = _bdot(u1, params["ww0"]) + params["bw0"]
    u4 = jnp.maximum(bn(u2, params["gw3"], params["bw3bn"], (0, 1)), 0.0)
    logits = _bdot(u4, params["ww1"]) + params["bw1"]            # (n, ns, Cs)
    attn = jax.nn.softmax(logits, axis=1)
    out_t = ((vg + p_r).reshape(n, ns, share, Cs) * attn[:, :, None, :]).sum(1).reshape(n, C)
    x2 = jnp.maximum(bn(out_t, params["g2"], params["b2"], 0), 0.0)
    x3 = bn(_bdot(x2, params["w3"]), params["g3"], params["b3"], 0)
    return jnp.maximum(x3 + x, 0.0)


# ------------------------------------ main --------------------------------------


if __name__ == "__main__":
    n, planes, share, nsample = 64, 32, 8, 16
    in_planes = planes          # residual (x += identity) requires in_planes == planes
    Cs = planes // share

    kit = iter(jax.random.split(jax.random.PRNGKey(0), 40))

    def nrm(shape, s=0.2):
        return (s * jax.random.normal(next(kit), shape)).astype(jnp.float32)

    def gam(shape):
        return (1.0 + 0.1 * jax.random.uniform(next(kit), shape)).astype(jnp.float32)

    p = jax.random.normal(next(kit), (n, 3), dtype=jnp.float32)
    x = nrm((n, in_planes), 0.5)
    o = jnp.array([n // 2, n], dtype=jnp.int32)                   # two batches of 32 points
    edges = jnp.zeros((n, nsample), dtype=jnp.int32)              # placeholders (see TODO)
    boundary = jnp.zeros((n,), dtype=jnp.int32)

    params = {
        # all weight matrices stored as (in, out) == PyTorch nn.Linear weight transposed
        "w1": nrm((in_planes, planes)),                             # linear1 (bias=False)
        "g1": gam((planes,)), "b1": nrm((planes,), 0.05),           # bn1
        "wq": nrm((planes, planes)), "bq": nrm((planes,), 0.05),
        "wk": nrm((planes, planes)), "bk": nrm((planes,), 0.05),
        "wv": nrm((planes, planes)), "bv": nrm((planes,), 0.05),
        "wp0": nrm((3, 3), 0.5), "bp0": nrm((3,), 0.05),            # linear_p[0]
        "gp": gam((3,)), "btp": nrm((3,), 0.05),                    # linear_p[1] BN(3)
        "wp1": nrm((3, planes), 0.5), "bp1": nrm((planes,), 0.05),  # linear_p[3]
        "gw0": gam((planes,)), "bw0bn": nrm((planes,), 0.05),       # linear_w[0] BN(planes)
        "ww0": nrm((planes, Cs)), "bw0": nrm((Cs,), 0.05),          # linear_w[2]
        "gw3": gam((Cs,)), "bw3bn": nrm((Cs,), 0.05),               # linear_w[3] BN(Cs)
        "ww1": nrm((Cs, Cs)), "bw1": nrm((Cs,), 0.05),              # linear_w[5]
        "g2": gam((planes,)), "b2": nrm((planes,), 0.05),           # bn2
        "w3": nrm((planes, planes)),                                # linear3 (bias=False)
        "g3": gam((planes,)), "b3": nrm((planes,), 0.05),           # bn3
    }

    p_out, x_out, o_out = boundary_transformer_block_forward(
        p, x, o, edges, boundary, params, nsample=nsample, share=share)
    x_out = jax.block_until_ready(x_out)

    idx = _knn_in_batch(p, o, nsample)
    ref = _reference(p, x, params, idx, nsample, share)
    assert x_out.shape == (n, planes)
    err = float(jnp.max(jnp.abs(x_out - ref)))
    assert jnp.allclose(x_out, ref, rtol=5e-3, atol=5e-3), \
        f"mismatch vs reference (max abs err {err})"

    print("KERNEL_OK")
</pallas_src>

<mosaic_0001>
module attributes {stable_mosaic.version = 11 : i64} {
  func.func @_bn1_stats_kernel(%arg0: i32, %arg1: memref<64x32xf32, #tpu.memory_space<vmem>>, %arg2: memref<32x32xf32, #tpu.memory_space<vmem>>, %arg3: memref<1x1x64xf32, #tpu.memory_space<vmem>>) attributes {dimension_semantics = [#tpu.dimension_semantics<parallel>], iteration_bounds = array<i64: 1>, scalar_prefetch = 0 : i64, scratch_operands = 0 : i64, tpu.core_type = #tpu.core_type<tc>, window_params = [{transform_indices = @transform_0, window_bounds = array<i64: 64, 32>}, {pipeline_mode = #tpu.pipeline_mode<synchronous>, transform_indices = @transform_1, window_bounds = array<i64: 32, 32>}, {transform_indices = @transform_2, window_bounds = array<i64: 1, 1, 64>}]} {
    %c0 = arith.constant 0 : index
    %c0_0 = arith.constant 0 : index
    %0 = vector.load %arg1[%c0, %c0_0] : memref<64x32xf32, #tpu.memory_space<vmem>>, vector<64x32xf32>
    %c0_1 = arith.constant 0 : index
    %c0_2 = arith.constant 0 : index
    %1 = vector.load %arg2[%c0_1, %c0_2] : memref<32x32xf32, #tpu.memory_space<vmem>>, vector<32x32xf32>
    %2 = arith.truncf %0 : vector<64x32xf32> to vector<64x32xbf16>
    %3 = arith.truncf %1 : vector<32x32xf32> to vector<32x32xbf16>
    %cst = arith.constant dense<0.000000e+00> : vector<64x32xf32>
    %4 = tpu.matmul %2, %3, %cst {dimension_numbers = #tpu.dot_dimension_numbers<[1], [0], [0], [1], [0, 0, 1, 1], [], []>} : vector<64x32xbf16>, vector<32x32xbf16>, vector<64x32xf32> -> vector<64x32xf32>
    %cst_3 = arith.constant dense<0.000000e+00> : vector<32xf32>
    %5 = vector.multi_reduction <add>, %4, %cst_3 [0] : vector<64x32xf32> to vector<32xf32>
    %6 = vector.shape_cast %5 : vector<32xf32> to vector<1x32xf32>
    %7 = arith.mulf %4, %4 : vector<64x32xf32>
    %cst_4 = arith.constant dense<0.000000e+00> : vector<32xf32>
    %8 = vector.multi_reduction <add>, %7, %cst_4 [0] : vector<64x32xf32> to vector<32xf32>
    %9 = vector.shape_cast %8 : vector<32xf32> to vector<1x32xf32>
    %10 = tpu.concatenate %6, %9 in 1 : vector<1x32xf32>, vector<1x32xf32> -> vector<1x64xf32>
    %11 = vector.shape_cast %10 : vector<1x64xf32> to vector<1x1x64xf32>
    %c0_5 = arith.constant 0 : index
    %c0_6 = arith.constant 0 : index
    %c0_7 = arith.constant 0 : index
    %12 = vector.load %arg3[%c0_5, %c0_6, %c0_7] : memref<1x1x64xf32, #tpu.memory_space<vmem>>, vector<1x1x64xf32>
    tpu.vector_store %arg3[%c0_5, %c0_6, %c0_7], %11 {strides = array<i32>} : memref<1x1x64xf32, #tpu.memory_space<vmem>>, vector<1x1x64xf32>,
    return
  }
  func.func @transform_0(%arg0: i32) -> (i32, i32) {
    %c0_i32 = arith.constant 0 : i32
    %c0_i32_0 = arith.constant 0 : i32
    return %arg0, %c0_i32 : i32, i32
  }
  func.func @transform_1(%arg0: i32) -> (i32, i32) {
    %c0_i32 = arith.constant 0 : i32
    %c0_i32_0 = arith.constant 0 : i32
    %c0_i32_1 = arith.constant 0 : i32
    return %c0_i32, %c0_i32_0 : i32, i32
  }
  func.func @transform_2(%arg0: i32) -> (i32, i32, i32) {
    %c0_i32 = arith.constant 0 : i32
    %c0_i32_0 = arith.constant 0 : i32
    %c0_i32_1 = arith.constant 0 : i32
    return %arg0, %c0_i32, %c0_i32_0 : i32, i32, i32
  }
}

module attributes {stable_mosaic.version = 11 : i64} {
  func.func @_qkv_kernel(%arg0: i32, %arg1: memref<64x32xf32, #tpu.memory_space<vmem>>, %arg2: memref<32x32xf32, #tpu.memory_space<vmem>>, %arg3: memref<1x32xf32, #tpu.memory_space<vmem>>, %arg4: memref<1x32xf32, #tpu.memory_space<vmem>>, %arg5: memref<32x96xf32, #tpu.memory_space<vmem>>, %arg6: memref<1x96xf32, #tpu.memory_space<vmem>>, %arg7: memref<64x96xf32, #tpu.memory_space<vmem>>) attributes {dimension_semantics = [#tpu.dimension_semantics<parallel>], iteration_bounds = array<i64: 1>, scalar_prefetch = 0 : i64, scratch_operands = 0 : i64, tpu.core_type = #tpu.core_type<tc>, window_params = [{transform_indices = @transform_0, window_bounds = array<i64: 64, 32>}, {pipeline_mode = #tpu.pipeline_mode<synchronous>, transform_indices = @transform_1, window_bounds = array<i64: 32, 32>}, {pipeline_mode = #tpu.pipeline_mode<synchronous>, transform_indices = @transform_2, window_bounds = array<i64: 1, 32>}, {pipeline_mode = #tpu.pipeline_mode<synchronous>, transform_indices = @transform_3, window_bounds = array<i64: 1, 32>}, {pipeline_mode = #tpu.pipeline_mode<synchronous>, transform_indices = @transform_4, window_bounds = array<i64: 32, 96>}, {pipeline_mode = #tpu.pipeline_mode<synchronous>, transform_indices = @transform_5, window_bounds = array<i64: 1, 96>}, {transform_indices = @transform_6, window_bounds = array<i64: 64, 96>}]} {
    %c0 = arith.constant 0 : index
    %c0_0 = arith.constant 0 : index
    %0 = vector.load %arg1[%c0, %c0_0] : memref<64x32xf32, #tpu.memory_space<vmem>>, vector<64x32xf32>
    %c0_1 = arith.constant 0 : index
    %c0_2 = arith.constant 0 : index
    %1 = vector.load %arg2[%c0_1, %c0_2] : memref<32x32xf32, #tpu.memory_space<vmem>>, vector<32x32xf32>
    %2 = arith.truncf %0 : vector<64x32xf32> to vector<64x32xbf16>
    %3 = arith.truncf %1 : vector<32x32xf32> to vector<32x32xbf16>
    %cst = arith.constant dense<0.000000e+00> : vector<64x32xf32>
    %4 = tpu.matmul %2, %3, %cst {dimension_numbers = #tpu.dot_dimension_numbers<[1], [0], [0], [1], [0, 0, 1, 1], [], []>} : vector<64x32xbf16>, vector<32x32xbf16>, vector<64x32xf32> -> vector<64x32xf32>
    %c0_3 = arith.constant 0 : index
    %c0_4 = arith.constant 0 : index
    %5 = vector.load %arg3[%c0_3, %c0_4] : memref<1x32xf32, #tpu.memory_space<vmem>>, vector<1x32xf32>
    %6 = vector.broadcast %5 : vector<1x32xf32> to vector<64x32xf32>
    %7 = arith.mulf %4, %6 : vector<64x32xf32>
    %c0_5 = arith.constant 0 : index
    %c0_6 = arith.constant 0 : index
    %8 = vector.load %arg4[%c0_5, %c0_6] : memref<1x32xf32, #tpu.memory_space<vmem>>, vector<1x32xf32>
    %9 = vector.broadcast %8 : vector<1x32xf32> to vector<64x32xf32>
    %10 = arith.addf %7, %9 : vector<64x32xf32>
    %cst_7 = arith.constant 0.000000e+00 : f32
    %11 = vector.broadcast %cst_7 : f32 to vector<64x32xf32>
    %12 = arith.maximumf %10, %11 : vector<64x32xf32>
    %c0_8 = arith.constant 0 : index
    %c0_9 = arith.constant 0 : index
    %13 = vector.load %arg5[%c0_8, %c0_9] : memref<32x96xf32, #tpu.memory_space<vmem>>, vector<32x96xf32>
    %14 = arith.truncf %12 : vector<64x32xf32> to vector<64x32xbf16>
    %15 = arith.truncf %13 : vector<32x96xf32> to vector<32x96xbf16>
    %cst_10 = arith.constant dense<0.000000e+00> : vector<64x96xf32>
    %16 = tpu.matmul %14, %15, %cst_10 {dimension_numbers = #tpu.dot_dimension_numbers<[1], [0], [0], [1], [0, 0, 1, 1], [], []>} : vector<64x32xbf16>, vector<32x96xbf16>, vector<64x96xf32> -> vector<64x96xf32>
    %c0_11 = arith.constant 0 : index
    %c0_12 = arith.constant 0 : index
    %17 = vector.load %arg6[%c0_11, %c0_12] : memref<1x96xf32, #tpu.memory_space<vmem>>, vector<1x96xf32>
    %18 = vector.broadcast %17 : vector<1x96xf32> to vector<64x96xf32>
    %19 = arith.addf %16, %18 : vector<64x96xf32>
    %c0_13 = arith.constant 0 : index
    %c0_14 = arith.constant 0 : index
    %20 = vector.load %arg7[%c0_13, %c0_14] : memref<64x96xf32, #tpu.memory_space<vmem>>, vector<64x96xf32>
    tpu.vector_store %arg7[%c0_13, %c0_14], %19 {strides = array<i32>} : memref<64x96xf32, #tpu.memory_space<vmem>>, vector<64x96xf32>,
    return
  }
  func.func @transform_0(%arg0: i32) -> (i32, i32) {
    %c0_i32 = arith.constant 0 : i32
    %c0_i32_0 = arith.constant 0 : i32
    return %arg0, %c0_i32 : i32, i32
  }
  func.func @transform_1(%arg0: i32) -> (i32, i32) {
    %c0_i32 = arith.constant 0 : i32
    %c0_i32_0 = arith.constant 0 : i32
    %c0_i32_1 = arith.constant 0 : i32
    return %c0_i32, %c0_i32_0 : i32, i32
  }
  func.func @transform_2(%arg0: i32) -> (i32, i32) {
    %c0_i32 = arith.constant 0 : i32
    %c0_i32_0 = arith.constant 0 : i32
    %c0_i32_1 = arith.constant 0 : i32
    return %c0_i32, %c0_i32_0 : i32, i32
  }
  func.func @transform_3(%arg0: i32) -> (i32, i32) {
    %c0_i32 = arith.constant 0 : i32
    %c0_i32_0 = arith.constant 0 : i32
    %c0_i32_1 = arith.constant 0 : i32
    return %c0_i32, %c0_i32_0 : i32, i32
  }
  func.func @transform_4(%arg0: i32) -> (i32, i32) {
    %c0_i32 = arith.constant 0 : i32
    %c0_i32_0 = arith.constant 0 : i32
    %c0_i32_1 = arith.constant 0 : i32
    return %c0_i32, %c0_i32_0 : i32, i32
  }
  func.func @transform_5(%arg0: i32) -> (i32, i32) {
    %c0_i32 = arith.constant 0 : i32
    %c0_i32_0 = arith.constant 0 : i32
    %c0_i32_1 = arith.constant 0 : i32
    return %c0_i32, %c0_i32_0 : i32, i32
  }
  func.func @transform_6(%arg0: i32) -> (i32, i32) {
    %c0_i32 = arith.constant 0 : i32
    %c0_i32_0 = arith.constant 0 : i32
    return %arg0, %c0_i32 : i32, i32
  }
}

module attributes {stable_mosaic.version = 11 : i64} {
  func.func @_w_stats_kernel(%arg0: i32, %arg1: i32, %arg2: memref<1x64x32xbf16, #tpu.memory_space<vmem>>, %arg3: memref<1x64x8xbf16, #tpu.memory_space<vmem>>, %arg4: memref<64x32xf32, #tpu.memory_space<vmem>>, %arg5: memref<8x32xf32, #tpu.memory_space<vmem>>, %arg6: memref<1x32xf32, #tpu.memory_space<vmem>>, %arg7: memref<1x1x64xf32, #tpu.memory_space<vmem>>) attributes {dimension_semantics = [#tpu.dimension_semantics<parallel>, #tpu.dimension_semantics<parallel>], iteration_bounds = array<i64: 1, 16>, scalar_prefetch = 0 : i64, scratch_operands = 0 : i64, tpu.core_type = #tpu.core_type<tc>, window_params = [{transform_indices = @transform_0, window_bounds = array<i64: 1, 64, 32>}, {transform_indices = @transform_1, window_bounds = array<i64: 1, 64, 8>}, {transform_indices = @transform_2, window_bounds = array<i64: 64, 32>}, {pipeline_mode = #tpu.pipeline_mode<synchronous>, transform_indices = @transform_3, window_bounds = array<i64: 8, 32>}, {pipeline_mode = #tpu.pipeline_mode<synchronous>, transform_indices = @transform_4, window_bounds = array<i64: 1, 32>}, {transform_indices = @transform_5, window_bounds = array<i64: 1, 1, 64>}]} {
    %c0 = arith.constant 0 : index
    %c0_0 = arith.constant 0 : index
    %c0_1 = arith.constant 0 : index
    %0 = vector.load %arg3[%c0, %c0_0, %c0_1] : memref<1x64x8xbf16, #tpu.memory_space<vmem>>, vector<1x64x8xbf16>
    %1 = vector.shape_cast %0 : vector<1x64x8xbf16> to vector<64x8xbf16>
    %c0_2 = arith.constant 0 : index
    %c0_3 = arith.constant 0 : index
    %2 = vector.load %arg5[%c0_2, %c0_3] : memref<8x32xf32, #tpu.memory_space<vmem>>, vector<8x32xf32>
    %3 = arith.truncf %2 : vector<8x32xf32> to vector<8x32xbf16>
    %cst = arith.constant dense<0.000000e+00> : vector<64x32xf32>
    %4 = tpu.matmul %1, %3, %cst {dimension_numbers = #tpu.dot_dimension_numbers<[1], [0], [0], [1], [0, 0, 1, 1], [], []>} : vector<64x8xbf16>, vector<8x32xbf16>, vector<64x32xf32> -> vector<64x32xf32>
    %c0_4 = arith.constant 0 : index
    %c0_5 = arith.constant 0 : index
    %5 = vector.load %arg6[%c0_4, %c0_5] : memref<1x32xf32, #tpu.memory_space<vmem>>, vector<1x32xf32>
    %6 = vector.broadcast %5 : vector<1x32xf32> to vector<64x32xf32>
    %7 = arith.addf %4, %6 : vector<64x32xf32>
    %c0_6 = arith.constant 0 : index
    %c0_7 = arith.constant 0 : index
    %c0_8 = arith.constant 0 : index
    %8 = vector.load %arg2[%c0_6, %c0_7, %c0_8] : memref<1x64x32xbf16, #tpu.memory_space<vmem>>, vector<1x64x32xbf16>
    %9 = vector.shape_cast %8 : vector<1x64x32xbf16> to vector<64x32xbf16>
    %10 = arith.extf %9 : vector<64x32xbf16> to vector<64x32xf32>
    %c0_9 = arith.constant 0 : index
    %c0_10 = arith.constant 0 : index
    %11 = vector.load %arg4[%c0_9, %c0_10] : memref<64x32xf32, #tpu.memory_space<vmem>>, vector<64x32xf32>
    %12 = arith.subf %10, %11 : vector<64x32xf32>
    %13 = arith.addf %12, %7 : vector<64x32xf32>
    %cst_11 = arith.constant dense<0.000000e+00> : vector<32xf32>
    %14 = vector.multi_reduction <add>, %13, %cst_11 [0] : vector<64x32xf32> to vector<32xf32>
    %15 = vector.shape_cast %14 : vector<32xf32> to vector<1x32xf32>
    %16 = arith.mulf %13, %13 : vector<64x32xf32>
    %cst_12 = arith.constant dense<0.000000e+00> : vector<32xf32>
    %17 = vector.multi_reduction <add>, %16, %cst_12 [0] : vector<64x32xf32> to vector<32xf32>
    %18 = vector.shape_cast %17 : vector<32xf32> to vector<1x32xf32>
    %19 = tpu.concatenate %15, %18 in 1 : vector<1x32xf32>, vector<1x32xf32> -> vector<1x64xf32>
    %20 = vector.shape_cast %19 : vector<1x64xf32> to vector<1x1x64xf32>
    %c0_13 = arith.constant 0 : index
    %c0_14 = arith.constant 0 : index
    %c0_15 = arith.constant 0 : index
    %21 = vector.load %arg7[%c0_13, %c0_14, %c0_15] : memref<1x1x64xf32, #tpu.memory_space<vmem>>, vector<1x1x64xf32>
    tpu.vector_store %arg7[%c0_13, %c0_14, %c0_15], %20 {strides = array<i32>} : memref<1x1x64xf32, #tpu.memory_space<vmem>>, vector<1x1x64xf32>,
    return
  }
  func.func @transform_0(%arg0: i32, %arg1: i32) -> (i32, i32, i32) {
    %c0_i32 = arith.constant 0 : i32
    %c0_i32_0 = arith.constant 0 : i32
    return %arg1, %arg0, %c0_i32 : i32, i32, i32
  }
  func.func @transform_1(%arg0: i32, %arg1: i32) -> (i32, i32, i32) {
    %c0_i32 = arith.constant 0 : i32
    %c0_i32_0 = arith.constant 0 : i32
    return %arg1, %arg0, %c0_i32 : i32, i32, i32
  }
  func.func @transform_2(%arg0: i32, %arg1: i32) -> (i32, i32) {
    %c0_i32 = arith.constant 0 : i32
    %c0_i32_0 = arith.constant 0 : i32
    return %arg0, %c0_i32 : i32, i32
  }
  func.func @transform_3(%arg0: i32, %arg1: i32) -> (i32, i32) {
    %c0_i32 = arith.constant 0 : i32
    %c0_i32_0 = arith.constant 0 : i32
    %c0_i32_1 = arith.constant 0 : i32
    return %c0_i32, %c0_i32_0 : i32, i32
  }
  func.func @transform_4(%arg0: i32, %arg1: i32) -> (i32, i32) {
    %c0_i32 = arith.constant 0 : i32
    %c0_i32_0 = arith.constant 0 : i32
    %c0_i32_1 = arith.constant 0 : i32
    return %c0_i32, %c0_i32_0 : i32, i32
  }
  func.func @transform_5(%arg0: i32, %arg1: i32) -> (i32, i32, i32) {
    %c16_i32 = arith.constant 16 : i32
    %0 = arith.muli %arg0, %c16_i32 : i32
    %1 = arith.addi %0, %arg1 : i32
    %c0_i32 = arith.constant 0 : i32
    %c0_i32_0 = arith.constant 0 : i32
    %c0_i32_1 = arith.constant 0 : i32
    return %1, %c0_i32, %c0_i32_0 : i32, i32, i32
  }
}

module attributes {stable_mosaic.version = 11 : i64} {
  func.func @_u_stats_kernel(%arg0: i32, %arg1: i32, %arg2: memref<1x64x32xbf16, #tpu.memory_space<vmem>>, %arg3: memref<1x64x8xbf16, #tpu.memory_space<vmem>>, %arg4: memref<64x32xf32, #tpu.memory_space<vmem>>, %arg5: memref<8x32xf32, #tpu.memory_space<vmem>>, %arg6: memref<1x32xf32, #tpu.memory_space<vmem>>, %arg7: memref<1x32xf32, #tpu.memory_space<vmem>>, %arg8: memref<1x32xf32, #tpu.memory_space<vmem>>, %arg9: memref<32x4xf32, #tpu.memory_space<vmem>>, %arg10: memref<1x4xf32, #tpu.memory_space<vmem>>, %arg11: memref<1x1x8xf32, #tpu.memory_space<vmem>>) attributes {dimension_semantics = [#tpu.dimension_semantics<parallel>, #tpu.dimension_semantics<parallel>], iteration_bounds = array<i64: 1, 16>, scalar_prefetch = 0 : i64, scratch_operands = 0 : i64, tpu.core_type = #tpu.core_type<tc>, window_params = [{transform_indices = @transform_0, window_bounds = array<i64: 1, 64, 32>}, {transform_indices = @transform_1, window_bounds = array<i64: 1, 64, 8>}, {transform_indices = @transform_2, window_bounds = array<i64: 64, 32>}, {pipeline_mode = #tpu.pipeline_mode<synchronous>, transform_indices = @transform_3, window_bounds = array<i64: 8, 32>}, {pipeline_mode = #tpu.pipeline_mode<synchronous>, transform_indices = @transform_4, window_bounds = array<i64: 1, 32>}, {pipeline_mode = #tpu.pipeline_mode<synchronous>, transform_indices = @transform_5, window_bounds = array<i64: 1, 32>}, {pipeline_mode = #tpu.pipeline_mode<synchronous>, transform_indices = @transform_6, window_bounds = array<i64: 1, 32>}, {pipeline_mode = #tpu.pipeline_mode<synchronous>, transform_indices = @transform_7, window_bounds = array<i64: 32, 4>}, {pipeline_mode = #tpu.pipeline_mode<synchronous>, transform_indices = @transform_8, window_bounds = array<i64: 1, 4>}, {transform_indices = @transform_9, window_bounds = array<i64: 1, 1, 8>}]} {
    %c0 = arith.constant 0 : index
    %c0_0 = arith.constant 0 : index
    %c0_1 = arith.constant 0 : index
    %0 = vector.load %arg3[%c0, %c0_0, %c0_1] : memref<1x64x8xbf16, #tpu.memory_space<vmem>>, vector<1x64x8xbf16>
    %1 = vector.shape_cast %0 : vector<1x64x8xbf16> to vector<64x8xbf16>
    %c0_2 = arith.constant 0 : index
    %c0_3 = arith.constant 0 : index
    %2 = vector.load %arg5[%c0_2, %c0_3] : memref<8x32xf32, #tpu.memory_space<vmem>>, vector<8x32xf32>
    %3 = arith.truncf %2 : vector<8x32xf32> to vector<8x32xbf16>
    %cst = arith.constant dense<0.000000e+00> : vector<64x32xf32>
    %4 = tpu.matmul %1, %3, %cst {dimension_numbers = #tpu.dot_dimension_numbers<[1], [0], [0], [1], [0, 0, 1, 1], [], []>} : vector<64x8xbf16>, vector<8x32xbf16>, vector<64x32xf32> -> vector<64x32xf32>
    %c0_4 = arith.constant 0 : index
    %c0_5 = arith.constant 0 : index
    %5 = vector.load %arg6[%c0_4, %c0_5] : memref<1x32xf32, #tpu.memory_space<vmem>>, vector<1x32xf32>
    %6 = vector.broadcast %5 : vector<1x32xf32> to vector<64x32xf32>
    %7 = arith.addf %4, %6 : vector<64x32xf32>
    %c0_6 = arith.constant 0 : index
    %c0_7 = arith.constant 0 : index
    %c0_8 = arith.constant 0 : index
    %8 = vector.load %arg2[%c0_6, %c0_7, %c0_8] : memref<1x64x32xbf16, #tpu.memory_space<vmem>>, vector<1x64x32xbf16>
    %9 = vector.shape_cast %8 : vector<1x64x32xbf16> to vector<64x32xbf16>
    %10 = arith.extf %9 : vector<64x32xbf16> to vector<64x32xf32>
    %c0_9 = arith.constant 0 : index
    %c0_10 = arith.constant 0 : index
    %11 = vector.load %arg4[%c0_9, %c0_10] : memref<64x32xf32, #tpu.memory_space<vmem>>, vector<64x32xf32>
    %12 = arith.subf %10, %11 : vector<64x32xf32>
    %13 = arith.addf %12, %7 : vector<64x32xf32>
    %c0_11 = arith.constant 0 : index
    %c0_12 = arith.constant 0 : index
    %14 = vector.load %arg7[%c0_11, %c0_12] : memref<1x32xf32, #tpu.memory_space<vmem>>, vector<1x32xf32>
    %15 = vector.broadcast %14 : vector<1x32xf32> to vector<64x32xf32>
    %16 = arith.mulf %13, %15 : vector<64x32xf32>
    %c0_13 = arith.constant 0 : index
    %c0_14 = arith.constant 0 : index
    %17 = vector.load %arg8[%c0_13, %c0_14] : memref<1x32xf32, #tpu.memory_space<vmem>>, vector<1x32xf32>
    %18 = vector.broadcast %17 : vector<1x32xf32> to vector<64x32xf32>
    %19 = arith.addf %16, %18 : vector<64x32xf32>
    %cst_15 = arith.constant 0.000000e+00 : f32
    %20 = vector.broadcast %cst_15 : f32 to vector<64x32xf32>
    %21 = arith.maximumf %19, %20 : vector<64x32xf32>
    %c0_16 = arith.constant 0 : index
    %c0_17 = arith.constant 0 : index
    %22 = vector.load %arg9[%c0_16, %c0_17] : memref<32x4xf32, #tpu.memory_space<vmem>>, vector<32x4xf32>
    %23 = arith.truncf %21 : vector<64x32xf32> to vector<64x32xbf16>
    %24 = arith.truncf %22 : vector<32x4xf32> to vector<32x4xbf16>
    %cst_18 = arith.constant dense<0.000000e+00> : vector<64x4xf32>
    %25 = tpu.matmul %23, %24, %cst_18 {dimension_numbers = #tpu.dot_dimension_numbers<[1], [0], [0], [1], [0, 0, 1, 1], [], []>} : vector<64x32xbf16>, vector<32x4xbf16>, vector<64x4xf32> -> vector<64x4xf32>
    %c0_19 = arith.constant 0 : index
    %c0_20 = arith.constant 0 : index
    %26 = vector.load %arg10[%c0_19, %c0_20] : memref<1x4xf32, #tpu.memory_space<vmem>>, vector<1x4xf32>
    %27 = vector.broadcast %26 : vector<1x4xf32> to vector<64x4xf32>
    %28 = arith.addf %25, %27 : vector<64x4xf32>
    %cst_21 = arith.constant dense<0.000000e+00> : vector<4xf32>
    %29 = vector.multi_reduction <add>, %28, %cst_21 [0] : vector<64x4xf32> to vector<4xf32>
    %30 = vector.shape_cast %29 : vector<4xf32> to vector<1x4xf32>
    %31 = arith.mulf %28, %28 : vector<64x4xf32>
    %cst_22 = arith.constant dense<0.000000e+00> : vector<4xf32>
    %32 = vector.multi_reduction <add>, %31, %cst_22 [0] : vector<64x4xf32> to vector<4xf32>
    %33 = vector.shape_cast %32 : vector<4xf32> to vector<1x4xf32>
    %34 = tpu.concatenate %30, %33 in 1 : vector<1x4xf32>, vector<1x4xf32> -> vector<1x8xf32>
    %35 = vector.shape_cast %34 : vector<1x8xf32> to vector<1x1x8xf32>
    %c0_23 = arith.constant 0 : index
    %c0_24 = arith.constant 0 : index
    %c0_25 = arith.constant 0 : index
    %36 = vector.load %arg11[%c0_23, %c0_24, %c0_25] : memref<1x1x8xf32, #tpu.memory_space<vmem>>, vector<1x1x8xf32>
    tpu.vector_store %arg11[%c0_23, %c0_24, %c0_25], %35 {strides = array<i32>} : memref<1x1x8xf32, #tpu.memory_space<vmem>>, vector<1x1x8xf32>,
    return
  }
  func.func @transform_0(%arg0: i32, %arg1: i32) -> (i32, i32, i32) {
    %c0_i32 = arith.constant 0 : i32
    %c0_i32_0 = arith.constant 0 : i32
    return %arg1, %arg0, %c0_i32 : i32, i32, i32
  }
  func.func @transform_1(%arg0: i32, %arg1: i32) -> (i32, i32, i32) {
    %c0_i32 = arith.constant 0 : i32
    %c0_i32_0 = arith.constant 0 : i32
    return %arg1, %arg0, %c0_i32 : i32, i32, i32
  }
  func.func @transform_2(%arg0: i32, %arg1: i32) -> (i32, i32) {
    %c0_i32 = arith.constant 0 : i32
    %c0_i32_0 = arith.constant 0 : i32
    return %arg0, %c0_i32 : i32, i32
  }
  func.func @transform_3(%arg0: i32, %arg1: i32) -> (i32, i32) {
    %c0_i32 = arith.constant 0 : i32
    %c0_i32_0 = arith.constant 0 : i32
    %c0_i32_1 = arith.constant 0 : i32
    return %c0_i32, %c0_i32_0 : i32, i32
  }
  func.func @transform_4(%arg0: i32, %arg1: i32) -> (i32, i32) {
    %c0_i32 = arith.constant 0 : i32
    %c0_i32_0 = arith.constant 0 : i32
    %c0_i32_1 = arith.constant 0 : i32
    return %c0_i32, %c0_i32_0 : i32, i32
  }
  func.func @transform_5(%arg0: i32, %arg1: i32) -> (i32, i32) {
    %c0_i32 = arith.constant 0 : i32
    %c0_i32_0 = arith.constant 0 : i32
    %c0_i32_1 = arith.constant 0 : i32
    return %c0_i32, %c0_i32_0 : i32, i32
  }
  func.func @transform_6(%arg0: i32, %arg1: i32) -> (i32, i32) {
    %c0_i32 = arith.constant 0 : i32
    %c0_i32_0 = arith.constant 0 : i32
    %c0_i32_1 = arith.constant 0 : i32
    return %c0_i32, %c0_i32_0 : i32, i32
  }
  func.func @transform_7(%arg0: i32, %arg1: i32) -> (i32, i32) {
    %c0_i32 = arith.constant 0 : i32
    %c0_i32_0 = arith.constant 0 : i32
    %c0_i32_1 = arith.constant 0 : i32
    return %c0_i32, %c0_i32_0 : i32, i32
  }
  func.func @transform_8(%arg0: i32, %arg1: i32) -> (i32, i32) {
    %c0_i32 = arith.constant 0 : i32
    %c0_i32_0 = arith.constant 0 : i32
    %c0_i32_1 = arith.constant 0 : i32
    return %c0_i32, %c0_i32_0 : i32, i32
  }
  func.func @transform_9(%arg0: i32, %arg1: i32) -> (i32, i32, i32) {
    %c16_i32 = arith.constant 16 : i32
    %0 = arith.muli %arg0, %c16_i32 : i32
    %1 = arith.addi %0, %arg1 : i32
    %c0_i32 = arith.constant 0 : i32
    %c0_i32_0 = arith.constant 0 : i32
    %c0_i32_1 = arith.constant 0 : i32
    return %1, %c0_i32, %c0_i32_0 : i32, i32, i32
  }
}

module attributes {stable_mosaic.version = 11 : i64} {
  func.func @_attn_kernel(%arg0: i32, %arg1: i32, %arg2: memref<1x64x32xbf16, #tpu.memory_space<vmem>>, %arg3: memref<1x64x32xbf16, #tpu.memory_space<vmem>>, %arg4: memref<1x64x8xbf16, #tpu.memory_space<vmem>>, %arg5: memref<64x32xf32, #tpu.memory_space<vmem>>, %arg6: memref<8x32xf32, #tpu.memory_space<vmem>>, %arg7: memref<1x32xf32, #tpu.memory_space<vmem>>, %arg8: memref<1x32xf32, #tpu.memory_space<vmem>>, %arg9: memref<1x32xf32, #tpu.memory_space<vmem>>, %arg10: memref<32x4xf32, #tpu.memory_space<vmem>>, %arg11: memref<1x4xf32, #tpu.memory_space<vmem>>, %arg12: memref<1x4xf32, #tpu.memory_space<vmem>>, %arg13: memref<1x4xf32, #tpu.memory_space<vmem>>, %arg14: memref<4x4xf32, #tpu.memory_space<vmem>>, %arg15: memref<1x4xf32, #tpu.memory_space<vmem>>, %arg16: memref<64x32xf32, #tpu.memory_space<vmem>>, %arg17: memref<1x1x64xf32, #tpu.memory_space<vmem>>, %arg18: memref<64x4xf32, #tpu.memory_space<vmem>>, %arg19: memref<64x4xf32, #tpu.memory_space<vmem>>, %arg20: memref<64x32xf32, #tpu.memory_space<vmem>>) attributes {dimension_semantics = [#tpu.dimension_semantics<parallel>, #tpu.dimension_semantics<arbitrary>], iteration_bounds = array<i64: 1, 16>, scalar_prefetch = 0 : i64, scratch_operands = 3 : i64, tpu.core_type = #tpu.core_type<tc>, window_params = [{transform_indices = @transform_0, window_bounds = array<i64: 1, 64, 32>}, {transform_indices = @transform_1, window_bounds = array<i64: 1, 64, 32>}, {transform_indices = @transform_2, window_bounds = array<i64: 1, 64, 8>}, {transform_indices = @transform_3, window_bounds = array<i64: 64, 32>}, {pipeline_mode = #tpu.pipeline_mode<synchronous>, transform_indices = @transform_4, window_bounds = array<i64: 8, 32>}, {pipeline_mode = #tpu.pipeline_mode<synchronous>, transform_indices = @transform_5, window_bounds = array<i64: 1, 32>}, {pipeline_mode = #tpu.pipeline_mode<synchronous>, transform_indices = @transform_6, window_bounds = array<i64: 1, 32>}, {pipeline_mode = #tpu.pipeline_mode<synchronous>, transform_indices = @transform_7, window_bounds = array<i64: 1, 32>}, {pipeline_mode = #tpu.pipeline_mode<synchronous>, transform_indices = @transform_8, window_bounds = array<i64: 32, 4>}, {pipeline_mode = #tpu.pipeline_mode<synchronous>, transform_indices = @transform_9, window_bounds = array<i64: 1, 4>}, {pipeline_mode = #tpu.pipeline_mode<synchronous>, transform_indices = @transform_10, window_bounds = array<i64: 1, 4>}, {pipeline_mode = #tpu.pipeline_mode<synchronous>, transform_indices = @transform_11, window_bounds = array<i64: 1, 4>}, {pipeline_mode = #tpu.pipeline_mode<synchronous>, transform_indices = @transform_12, window_bounds = array<i64: 4, 4>}, {pipeline_mode = #tpu.pipeline_mode<synchronous>, transform_indices = @transform_13, window_bounds = array<i64: 1, 4>}, {transform_indices = @transform_14, window_bounds = array<i64: 64, 32>}, {transform_indices = @transform_15, window_bounds = array<i64: 1, 1, 64>}]} {
    %c0_i32 = arith.constant 0 : i32
    %0 = arith.cmpi eq, %arg1, %c0_i32 : i32
    %1 = arith.extui %0 : i1 to i32
    %c0_i32_0 = arith.constant 0 : i32
    %2 = arith.cmpi ne, %1, %c0_i32_0 : i32
    scf.if %2 {
      %cst_48 = arith.constant 0xFF800000 : f32
      %72 = vector.broadcast %cst_48 : f32 to vector<64x4xf32>
      %c0_49 = arith.constant 0 : index
      %c0_50 = arith.constant 0 : index
      %73 = vector.load %arg18[%c0_49, %c0_50] : memref<64x4xf32, #tpu.memory_space<vmem>>, vector<64x4xf32>
      tpu.vector_store %arg18[%c0_49, %c0_50], %72 {strides = array<i32>} : memref<64x4xf32, #tpu.memory_space<vmem>>, vector<64x4xf32>,
      %cst_51 = arith.constant 0.000000e+00 : f32
      %74 = vector.broadcast %cst_51 : f32 to vector<64x4xf32>
      %c0_52 = arith.constant 0 : index
      %c0_53 = arith.constant 0 : index
      %75 = vector.load %arg19[%c0_52, %c0_53] : memref<64x4xf32, #tpu.memory_space<vmem>>, vector<64x4xf32>
      tpu.vector_store %arg19[%c0_52, %c0_53], %74 {strides = array<i32>} : memref<64x4xf32, #tpu.memory_space<vmem>>, vector<64x4xf32>,
      %cst_54 = arith.constant 0.000000e+00 : f32
      %76 = vector.broadcast %cst_54 : f32 to vector<64x32xf32>
      %c0_55 = arith.constant 0 : index
      %c0_56 = arith.constant 0 : index
      %77 = vector.load %arg20[%c0_55, %c0_56] : memref<64x32xf32, #tpu.memory_space<vmem>>, vector<64x32xf32>
      tpu.vector_store %arg20[%c0_55, %c0_56], %76 {strides = array<i32>} : memref<64x32xf32, #tpu.memory_space<vmem>>, vector<64x32xf32>,
    } else {
    }
    %c0 = arith.constant 0 : index
    %c0_1 = arith.constant 0 : index
    %c0_2 = arith.constant 0 : index
    %3 = vector.load %arg4[%c0, %c0_1, %c0_2] : memref<1x64x8xbf16, #tpu.memory_space<vmem>>, vector<1x64x8xbf16>
    %4 = vector.shape_cast %3 : vector<1x64x8xbf16> to vector<64x8xbf16>
    %c0_3 = arith.constant 0 : index
    %c0_4 = arith.constant 0 : index
    %5 = vector.load %arg6[%c0_3, %c0_4] : memref<8x32xf32, #tpu.memory_space<vmem>>, vector<8x32xf32>
    %6 = arith.truncf %5 : vector<8x32xf32> to vector<8x32xbf16>
    %cst = arith.constant dense<0.000000e+00> : vector<64x32xf32>
    %7 = tpu.matmul %4, %6, %cst {dimension_numbers = #tpu.dot_dimension_numbers<[1], [0], [0], [1], [0, 0, 1, 1], [], []>} : vector<64x8xbf16>, vector<8x32xbf16>, vector<64x32xf32> -> vector<64x32xf32>
    %c0_5 = arith.constant 0 : index
    %c0_6 = arith.constant 0 : index
    %8 = vector.load %arg7[%c0_5, %c0_6] : memref<1x32xf32, #tpu.memory_space<vmem>>, vector<1x32xf32>
    %9 = vector.broadcast %8 : vector<1x32xf32> to vector<64x32xf32>
    %10 = arith.addf %7, %9 : vector<64x32xf32>
    %c0_7 = arith.constant 0 : index
    %c0_8 = arith.constant 0 : index
    %c0_9 = arith.constant 0 : index
    %11 = vector.load %arg2[%c0_7, %c0_8, %c0_9] : memref<1x64x32xbf16, #tpu.memory_space<vmem>>, vector<1x64x32xbf16>
    %12 = vector.shape_cast %11 : vector<1x64x32xbf16> to vector<64x32xbf16>
    %13 = arith.extf %12 : vector<64x32xbf16> to vector<64x32xf32>
    %c0_10 = arith.constant 0 : index
    %c0_11 = arith.constant 0 : index
    %14 = vector.load %arg5[%c0_10, %c0_11] : memref<64x32xf32, #tpu.memory_space<vmem>>, vector<64x32xf32>
    %15 = arith.subf %13, %14 : vector<64x32xf32>
    %16 = arith.addf %15, %10 : vector<64x32xf32>
    %c0_12 = arith.constant 0 : index
    %c0_13 = arith.constant 0 : index
    %17 = vector.load %arg8[%c0_12, %c0_13] : memref<1x32xf32, #tpu.memory_space<vmem>>, vector<1x32xf32>
    %18 = vector.broadcast %17 : vector<1x32xf32> to vector<64x32xf32>
    %19 = arith.mulf %16, %18 : vector<64x32xf32>
    %c0_14 = arith.constant 0 : index
    %c0_15 = arith.constant 0 : index
    %20 = vector.load %arg9[%c0_14, %c0_15] : memref<1x32xf32, #tpu.memory_space<vmem>>, vector<1x32xf32>
    %21 = vector.broadcast %20 : vector<1x32xf32> to vector<64x32xf32>
    %22 = arith.addf %19, %21 : vector<64x32xf32>
    %cst_16 = arith.constant 0.000000e+00 : f32
    %23 = vector.broadcast %cst_16 : f32 to vector<64x32xf32>
    %24 = arith.maximumf %22, %23 : vector<64x32xf32>
    %c0_17 = arith.constant 0 : index
    %c0_18 = arith.constant 0 : index
    %25 = vector.load %arg10[%c0_17, %c0_18] : memref<32x4xf32, #tpu.memory_space<vmem>>, vector<32x4xf32>
    %26 = arith.truncf %24 : vector<64x32xf32> to vector<64x32xbf16>
    %27 = arith.truncf %25 : vector<32x4xf32> to vector<32x4xbf16>
    %cst_19 = arith.constant dense<0.000000e+00> : vector<64x4xf32>
    %28 = tpu.matmul %26, %27, %cst_19 {dimension_numbers = #tpu.dot_dimension_numbers<[1], [0], [0], [1], [0, 0, 1, 1], [], []>} : vector<64x32xbf16>, vector<32x4xbf16>, vector<64x4xf32> -> vector<64x4xf32>
    %c0_20 = arith.constant 0 : index
    %c0_21 = arith.constant 0 : index
    %29 = vector.load %arg11[%c0_20, %c0_21] : memref<1x4xf32, #tpu.memory_space<vmem>>, vector<1x4xf32>
    %30 = vector.broadcast %29 : vector<1x4xf32> to vector<64x4xf32>
    %31 = arith.addf %28, %30 : vector<64x4xf32>
    %c0_22 = arith.constant 0 : index
    %c0_23 = arith.constant 0 : index
    %32 = vector.load %arg12[%c0_22, %c0_23] : memref<1x4xf32, #tpu.memory_space<vmem>>, vector<1x4xf32>
    %33 = vector.broadcast %32 : vector<1x4xf32> to vector<64x4xf32>
    %34 = arith.mulf %31, %33 : vector<64x4xf32>
    %c0_24 = arith.constant 0 : index
    %c0_25 = arith.constant 0 : index
    %35 = vector.load %arg13[%c0_24, %c0_25] : memref<1x4xf32, #tpu.memory_space<vmem>>, vector<1x4xf32>
    %36 = vector.broadcast %35 : vector<1x4xf32> to vector<64x4xf32>
    %37 = arith.addf %34, %36 : vector<64x4xf32>
    %cst_26 = arith.constant 0.000000e+00 : f32
    %38 = vector.broadcast %cst_26 : f32 to vector<64x4xf32>
    %39 = arith.maximumf %37, %38 : vector<64x4xf32>
    %c0_27 = arith.constant 0 : index
    %c0_28 = arith.constant 0 : index
    %40 = vector.load %arg14[%c0_27, %c0_28] : memref<4x4xf32, #tpu.memory_space<vmem>>, vector<4x4xf32>
    %41 = arith.truncf %39 : vector<64x4xf32> to vector<64x4xbf16>
    %42 = arith.truncf %40 : vector<4x4xf32> to vector<4x4xbf16>
    %cst_29 = arith.constant dense<0.000000e+00> : vector<64x4xf32>
    %43 = tpu.matmul %41, %42, %cst_29 {dimension_numbers = #tpu.dot_dimension_numbers<[1], [0], [0], [1], [0, 0, 1, 1], [], []>} : vector<64x4xbf16>, vector<4x4xbf16>, vector<64x4xf32> -> vector<64x4xf32>
    %c0_30 = arith.constant 0 : index
    %c0_31 = arith.constant 0 : index
    %44 = vector.load %arg15[%c0_30, %c0_31] : memref<1x4xf32, #tpu.memory_space<vmem>>, vector<1x4xf32>
    %45 = vector.broadcast %44 : vector<1x4xf32> to vector<64x4xf32>
    %46 = arith.addf %43, %45 : vector<64x4xf32>
    %c0_32 = arith.constant 0 : index
    %c0_33 = arith.constant 0 : index
    %c0_34 = arith.constant 0 : index
    %47 = vector.load %arg3[%c0_32, %c0_33, %c0_34] : memref<1x64x32xbf16, #tpu.memory_space<vmem>>, vector<1x64x32xbf16>
    %48 = vector.shape_cast %47 : vector<1x64x32xbf16> to vector<64x32xbf16>
    %49 = arith.extf %48 : vector<64x32xbf16> to vector<64x32xf32>
    %50 = arith.addf %49, %10 : vector<64x32xf32>
    %c0_35 = arith.constant 0 : index
    %c0_36 = arith.constant 0 : index
    %51 = vector.load %arg18[%c0_35, %c0_36] : memref<64x4xf32, #tpu.memory_space<vmem>>, vector<64x4xf32>
    %52 = arith.maximumf %51, %46 : vector<64x4xf32>
    %53 = arith.subf %51, %52 : vector<64x4xf32>
    %54 = math.exp %53 : vector<64x4xf32>
    %55 = arith.subf %46, %52 : vector<64x4xf32>
    %56 = math.exp %55 : vector<64x4xf32>
    %c0_37 = arith.constant 0 : index
    %c0_38 = arith.constant 0 : index
    %57 = vector.load %arg19[%c0_37, %c0_38] : memref<64x4xf32, #tpu.memory_space<vmem>>, vector<64x4xf32>
    %58 = arith.mulf %54, %57 : vector<64x4xf32>
    %59 = arith.addf %58, %56 : vector<64x4xf32>
    %c0_39 = arith.constant 0 : index
    %c0_40 = arith.constant 0 : index
    %60 = vector.load %arg19[%c0_39, %c0_40] : memref<64x4xf32, #tpu.memory_space<vmem>>, vector<64x4xf32>
    tpu.vector_store %arg19[%c0_39, %c0_40], %59 {strides = array<i32>} : memref<64x4xf32, #tpu.memory_space<vmem>>, vector<64x4xf32>,
    %c0_41 = arith.constant 0 : index
    %c0_42 = arith.constant 0 : index
    %61 = vector.load %arg20[%c0_41, %c0_42] : memref<64x32xf32, #tpu.memory_space<vmem>>, vector<64x32xf32>
    %62 = tpu.concatenate %54, %54, %54, %54, %54, %54, %54, %54 in 1 : vector<64x4xf32>, vector<64x4xf32>, vector<64x4xf32>, vector<64x4xf32>, vector<64x4xf32>, vector<64x4xf32>, vector<64x4xf32>, vector<64x4xf32> -> vector<64x32xf32>
    %63 = arith.mulf %61, %62 : vector<64x32xf32>
    %64 = tpu.concatenate %56, %56, %56, %56, %56, %56, %56, %56 in 1 : vector<64x4xf32>, vector<64x4xf32>, vector<64x4xf32>, vector<64x4xf32>, vector<64x4xf32>, vector<64x4xf32>, vector<64x4xf32>, vector<64x4xf32> -> vector<64x32xf32>
    %65 = arith.mulf %50, %64 : vector<64x32xf32>
    %66 = arith.addf %63, %65 : vector<64x32xf32>
    %c0_43 = arith.constant 0 : index
    %c0_44 = arith.constant 0 : index
    %67 = vector.load %arg20[%c0_43, %c0_44] : memref<64x32xf32, #tpu.memory_space<vmem>>, vector<64x32xf32>
    tpu.vector_store %arg20[%c0_43, %c0_44], %66 {strides = array<i32>} : memref<64x32xf32, #tpu.memory_space<vmem>>, vector<64x32xf32>,
    %c0_45 = arith.constant 0 : index
    %c0_46 = arith.constant 0 : index
    %68 = vector.load %arg18[%c0_45, %c0_46] : memref<64x4xf32, #tpu.memory_space<vmem>>, vector<64x4xf32>
    tpu.vector_store %arg18[%c0_45, %c0_46], %52 {strides = array<i32>} : memref<64x4xf32, #tpu.memory_space<vmem>>, vector<64x4xf32>,
    %c15_i32 = arith.constant 15 : i32
    %69 = arith.cmpi eq, %arg1, %c15_i32 : i32
    %70 = arith.extui %69 : i1 to i32
    %c0_i32_47 = arith.constant 0 : i32
    %71 = arith.cmpi ne, %70, %c0_i32_47 : i32
    scf.if %71 {
      %c0_48 = arith.constant 0 : index
      %c0_49 = arith.constant 0 : index
      %72 = vector.load %arg19[%c0_48, %c0_49] : memref<64x4xf32, #tpu.memory_space<vmem>>, vector<64x4xf32>
      %cst_50 = arith.constant 1.000000e+00 : f32
      %73 = vector.broadcast %cst_50 : f32 to vector<64x4xf32>
      %74 = arith.divf %73, %72 : vector<64x4xf32>
      %c0_51 = arith.constant 0 : index
      %c0_52 = arith.constant 0 : index
      %75 = vector.load %arg20[%c0_51, %c0_52] : memref<64x32xf32, #tpu.memory_space<vmem>>, vector<64x32xf32>
      %76 = tpu.concatenate %74, %74, %74, %74, %74, %74, %74, %74 in 1 : vector<64x4xf32>, vector<64x4xf32>, vector<64x4xf32>, vector<64x4xf32>, vector<64x4xf32>, vector<64x4xf32>, vector<64x4xf32>, vector<64x4xf32> -> vector<64x32xf32>
      %77 = arith.mulf %75, %76 : vector<64x32xf32>
      %c0_53 = arith.constant 0 : index
      %c0_54 = arith.constant 0 : index
      %78 = vector.load %arg16[%c0_53, %c0_54] : memref<64x32xf32, #tpu.memory_space<vmem>>, vector<64x32xf32>
      tpu.vector_store %arg16[%c0_53, %c0_54], %77 {strides = array<i32>} : memref<64x32xf32, #tpu.memory_space<vmem>>, vector<64x32xf32>,
      %cst_55 = arith.constant dense<0.000000e+00> : vector<32xf32>
      %79 = vector.multi_reduction <add>, %77, %cst_55 [0] : vector<64x32xf32> to vector<32xf32>
      %80 = vector.shape_cast %79 : vector<32xf32> to vector<1x32xf32>
      %81 = arith.mulf %77, %77 : vector<64x32xf32>
      %cst_56 = arith.constant dense<0.000000e+00> : vector<32xf32>
      %82 = vector.multi_reduction <add>, %81, %cst_56 [0] : vector<64x32xf32> to vector<32xf32>
      %83 = vector.shape_cast %82 : vector<32xf32> to vector<1x32xf32>
      %84 = tpu.concatenate %80, %83 in 1 : vector<1x32xf32>, vector<1x32xf32> -> vector<1x64xf32>
      %85 = vector.shape_cast %84 : vector<1x64xf32> to vector<1x1x64xf32>
      %c0_57 = arith.constant 0 : index
      %c0_58 = arith.constant 0 : index
      %c0_59 = arith.constant 0 : index
      %86 = vector.load %arg17[%c0_57, %c0_58, %c0_59] : memref<1x1x64xf32, #tpu.memory_space<vmem>>, vector<1x1x64xf32>
      tpu.vector_store %arg17[%c0_57, %c0_58, %c0_59], %85 {strides = array<i32>} : memref<1x1x64xf32, #tpu.memory_space<vmem>>, vector<1x1x64xf32>,
    } else {
    }
    return
  }
  func.func @transform_0(%arg0: i32, %arg1: i32) -> (i32, i32, i32) {
    %c0_i32 = arith.constant 0 : i32
    %c0_i32_0 = arith.constant 0 : i32
    return %arg1, %arg0, %c0_i32 : i32, i32, i32
  }
  func.func @transform_1(%arg0: i32, %arg1: i32) -> (i32, i32, i32) {
    %c0_i32 = arith.constant 0 : i32
    %c0_i32_0 = arith.constant 0 : i32
    return %arg1, %arg0, %c0_i32 : i32, i32, i32
  }
  func.func @transform_2(%arg0: i32, %arg1: i32) -> (i32, i32, i32) {
    %c0_i32 = arith.constant 0 : i32
    %c0_i32_0 = arith.constant 0 : i32
    return %arg1, %arg0, %c0_i32 : i32, i32, i32
  }
  func.func @transform_3(%arg0: i32, %arg1: i32) -> (i32, i32) {
    %c0_i32 = arith.constant 0 : i32
    %c0_i32_0 = arith.constant 0 : i32
    return %arg0, %c0_i32 : i32, i32
  }
  func.func @transform_4(%arg0: i32, %arg1: i32) -> (i32, i32) {
    %c0_i32 = arith.constant 0 : i32
    %c0_i32_0 = arith.constant 0 : i32
    %c0_i32_1 = arith.constant 0 : i32
    return %c0_i32, %c0_i32_0 : i32, i32
  }
  func.func @transform_5(%arg0: i32, %arg1: i32) -> (i32, i32) {
    %c0_i32 = arith.constant 0 : i32
    %c0_i32_0 = arith.constant 0 : i32
    %c0_i32_1 = arith.constant 0 : i32
    return %c0_i32, %c0_i32_0 : i32, i32
  }
  func.func @transform_6(%arg0: i32, %arg1: i32) -> (i32, i32) {
    %c0_i32 = arith.constant 0 : i32
    %c0_i32_0 = arith.constant 0 : i32
    %c0_i32_1 = arith.constant 0 : i32
    return %c0_i32, %c0_i32_0 : i32, i32
  }
  func.func @transform_7(%arg0: i32, %arg1: i32) -> (i32, i32) {
    %c0_i32 = arith.constant 0 : i32
    %c0_i32_0 = arith.constant 0 : i32
    %c0_i32_1 = arith.constant 0 : i32
    return %c0_i32, %c0_i32_0 : i32, i32
  }
  func.func @transform_8(%arg0: i32, %arg1: i32) -> (i32, i32) {
    %c0_i32 = arith.constant 0 : i32
    %c0_i32_0 = arith.constant 0 : i32
    %c0_i32_1 = arith.constant 0 : i32
    return %c0_i32, %c0_i32_0 : i32, i32
  }
  func.func @transform_9(%arg0: i32, %arg1: i32) -> (i32, i32) {
    %c0_i32 = arith.constant 0 : i32
    %c0_i32_0 = arith.constant 0 : i32
    %c0_i32_1 = arith.constant 0 : i32
    return %c0_i32, %c0_i32_0 : i32, i32
  }
  func.func @transform_10(%arg0: i32, %arg1: i32) -> (i32, i32) {
    %c0_i32 = arith.constant 0 : i32
    %c0_i32_0 = arith.constant 0 : i32
    %c0_i32_1 = arith.constant 0 : i32
    return %c0_i32, %c0_i32_0 : i32, i32
  }
  func.func @transform_11(%arg0: i32, %arg1: i32) -> (i32, i32) {
    %c0_i32 = arith.constant 0 : i32
    %c0_i32_0 = arith.constant 0 : i32
    %c0_i32_1 = arith.constant 0 : i32
    return %c0_i32, %c0_i32_0 : i32, i32
  }
  func.func @transform_12(%arg0: i32, %arg1: i32) -> (i32, i32) {
    %c0_i32 = arith.constant 0 : i32
    %c0_i32_0 = arith.constant 0 : i32
    %c0_i32_1 = arith.constant 0 : i32
    return %c0_i32, %c0_i32_0 : i32, i32
  }
  func.func @transform_13(%arg0: i32, %arg1: i32) -> (i32, i32) {
    %c0_i32 = arith.constant 0 : i32
    %c0_i32_0 = arith.constant 0 : i32
    %c0_i32_1 = arith.constant 0 : i32
    return %c0_i32, %c0_i32_0 : i32, i32
  }
  func.func @transform_14(%arg0: i32, %arg1: i32) -> (i32, i32) {
    %c0_i32 = arith.constant 0 : i32
    %c0_i32_0 = arith.constant 0 : i32
    return %arg0, %c0_i32 : i32, i32
  }
  func.func @transform_15(%arg0: i32, %arg1: i32) -> (i32, i32, i32) {
    %c0_i32 = arith.constant 0 : i32
    %c0_i32_0 = arith.constant 0 : i32
    %c0_i32_1 = arith.constant 0 : i32
    return %arg0, %c0_i32, %c0_i32_0 : i32, i32, i32
  }
}

module attributes {stable_mosaic.version = 11 : i64} {
  func.func @_bn3_stats_kernel(%arg0: i32, %arg1: memref<64x32xf32, #tpu.memory_space<vmem>>, %arg2: memref<1x32xf32, #tpu.memory_space<vmem>>, %arg3: memref<1x32xf32, #tpu.memory_space<vmem>>, %arg4: memref<32x32xf32, #tpu.memory_space<vmem>>, %arg5: memref<1x1x64xf32, #tpu.memory_space<vmem>>) attributes {dimension_semantics = [#tpu.dimension_semantics<parallel>], iteration_bounds = array<i64: 1>, scalar_prefetch = 0 : i64, scratch_operands = 0 : i64, tpu.core_type = #tpu.core_type<tc>, window_params = [{transform_indices = @transform_0, window_bounds = array<i64: 64, 32>}, {pipeline_mode = #tpu.pipeline_mode<synchronous>, transform_indices = @transform_1, window_bounds = array<i64: 1, 32>}, {pipeline_mode = #tpu.pipeline_mode<synchronous>, transform_indices = @transform_2, window_bounds = array<i64: 1, 32>}, {pipeline_mode = #tpu.pipeline_mode<synchronous>, transform_indices = @transform_3, window_bounds = array<i64: 32, 32>}, {transform_indices = @transform_4, window_bounds = array<i64: 1, 1, 64>}]} {
    %c0 = arith.constant 0 : index
    %c0_0 = arith.constant 0 : index
    %0 = vector.load %arg1[%c0, %c0_0] : memref<64x32xf32, #tpu.memory_space<vmem>>, vector<64x32xf32>
    %c0_1 = arith.constant 0 : index
    %c0_2 = arith.constant 0 : index
    %1 = vector.load %arg2[%c0_1, %c0_2] : memref<1x32xf32, #tpu.memory_space<vmem>>, vector<1x32xf32>
    %2 = vector.broadcast %1 : vector<1x32xf32> to vector<64x32xf32>
    %3 = arith.mulf %0, %2 : vector<64x32xf32>
    %c0_3 = arith.constant 0 : index
    %c0_4 = arith.constant 0 : index
    %4 = vector.load %arg3[%c0_3, %c0_4] : memref<1x32xf32, #tpu.memory_space<vmem>>, vector<1x32xf32>
    %5 = vector.broadcast %4 : vector<1x32xf32> to vector<64x32xf32>
    %6 = arith.addf %3, %5 : vector<64x32xf32>
    %cst = arith.constant 0.000000e+00 : f32
    %7 = vector.broadcast %cst : f32 to vector<64x32xf32>
    %8 = arith.maximumf %6, %7 : vector<64x32xf32>
    %c0_5 = arith.constant 0 : index
    %c0_6 = arith.constant 0 : index
    %9 = vector.load %arg4[%c0_5, %c0_6] : memref<32x32xf32, #tpu.memory_space<vmem>>, vector<32x32xf32>
    %10 = arith.truncf %8 : vector<64x32xf32> to vector<64x32xbf16>
    %11 = arith.truncf %9 : vector<32x32xf32> to vector<32x32xbf16>
    %cst_7 = arith.constant dense<0.000000e+00> : vector<64x32xf32>
    %12 = tpu.matmul %10, %11, %cst_7 {dimension_numbers = #tpu.dot_dimension_numbers<[1], [0], [0], [1], [0, 0, 1, 1], [], []>} : vector<64x32xbf16>, vector<32x32xbf16>, vector<64x32xf32> -> vector<64x32xf32>
    %cst_8 = arith.constant dense<0.000000e+00> : vector<32xf32>
    %13 = vector.multi_reduction <add>, %12, %cst_8 [0] : vector<64x32xf32> to vector<32xf32>
    %14 = vector.shape_cast %13 : vector<32xf32> to vector<1x32xf32>
    %15 = arith.mulf %12, %12 : vector<64x32xf32>
    %cst_9 = arith.constant dense<0.000000e+00> : vector<32xf32>
    %16 = vector.multi_reduction <add>, %15, %cst_9 [0] : vector<64x32xf32> to vector<32xf32>
    %17 = vector.shape_cast %16 : vector<32xf32> to vector<1x32xf32>
    %18 = tpu.concatenate %14, %17 in 1 : vector<1x32xf32>, vector<1x32xf32> -> vector<1x64xf32>
    %19 = vector.shape_cast %18 : vector<1x64xf32> to vector<1x1x64xf32>
    %c0_10 = arith.constant 0 : index
    %c0_11 = arith.constant 0 : index
    %c0_12 = arith.constant 0 : index
    %20 = vector.load %arg5[%c0_10, %c0_11, %c0_12] : memref<1x1x64xf32, #tpu.memory_space<vmem>>, vector<1x1x64xf32>
    tpu.vector_store %arg5[%c0_10, %c0_11, %c0_12], %19 {strides = array<i32>} : memref<1x1x64xf32, #tpu.memory_space<vmem>>, vector<1x1x64xf32>,
    return
  }
  func.func @transform_0(%arg0: i32) -> (i32, i32) {
    %c0_i32 = arith.constant 0 : i32
    %c0_i32_0 = arith.constant 0 : i32
    return %arg0, %c0_i32 : i32, i32
  }
  func.func @transform_1(%arg0: i32) -> (i32, i32) {
    %c0_i32 = arith.constant 0 : i32
    %c0_i32_0 = arith.constant 0 : i32
    %c0_i32_1 = arith.constant 0 : i32
    return %c0_i32, %c0_i32_0 : i32, i32
  }
  func.func @transform_2(%arg0: i32) -> (i32, i32) {
    %c0_i32 = arith.constant 0 : i32
    %c0_i32_0 = arith.constant 0 : i32
    %c0_i32_1 = arith.constant 0 : i32
    return %c0_i32, %c0_i32_0 : i32, i32
  }
  func.func @transform_3(%arg0: i32) -> (i32, i32) {
    %c0_i32 = arith.constant 0 : i32
    %c0_i32_0 = arith.constant 0 : i32
    %c0_i32_1 = arith.constant 0 : i32
    return %c0_i32, %c0_i32_0 : i32, i32
  }
  func.func @transform_4(%arg0: i32) -> (i32, i32, i32) {
    %c0_i32 = arith.constant 0 : i32
    %c0_i32_0 = arith.constant 0 : i32
    %c0_i32_1 = arith.constant 0 : i32
    return %arg0, %c0_i32, %c0_i32_0 : i32, i32, i32
  }
}

module attributes {stable_mosaic.version = 11 : i64} {
  func.func @_epilogue_kernel(%arg0: i32, %arg1: memref<64x32xf32, #tpu.memory_space<vmem>>, %arg2: memref<1x32xf32, #tpu.memory_space<vmem>>, %arg3: memref<1x32xf32, #tpu.memory_space<vmem>>, %arg4: memref<32x32xf32, #tpu.memory_space<vmem>>, %arg5: memref<1x32xf32, #tpu.memory_space<vmem>>, %arg6: memref<1x32xf32, #tpu.memory_space<vmem>>, %arg7: memref<64x32xf32, #tpu.memory_space<vmem>>, %arg8: memref<64x32xf32, #tpu.memory_space<vmem>>) attributes {dimension_semantics = [#tpu.dimension_semantics<parallel>], iteration_bounds = array<i64: 1>, scalar_prefetch = 0 : i64, scratch_operands = 0 : i64, tpu.core_type = #tpu.core_type<tc>, window_params = [{transform_indices = @transform_0, window_bounds = array<i64: 64, 32>}, {pipeline_mode = #tpu.pipeline_mode<synchronous>, transform_indices = @transform_1, window_bounds = array<i64: 1, 32>}, {pipeline_mode = #tpu.pipeline_mode<synchronous>, transform_indices = @transform_2, window_bounds = array<i64: 1, 32>}, {pipeline_mode = #tpu.pipeline_mode<synchronous>, transform_indices = @transform_3, window_bounds = array<i64: 32, 32>}, {pipeline_mode = #tpu.pipeline_mode<synchronous>, transform_indices = @transform_4, window_bounds = array<i64: 1, 32>}, {pipeline_mode = #tpu.pipeline_mode<synchronous>, transform_indices = @transform_5, window_bounds = array<i64: 1, 32>}, {transform_indices = @transform_6, window_bounds = array<i64: 64, 32>}, {transform_indices = @transform_7, window_bounds = array<i64: 64, 32>}]} {
    %c0 = arith.constant 0 : index
    %c0_0 = arith.constant 0 : index
    %0 = vector.load %arg1[%c0, %c0_0] : memref<64x32xf32, #tpu.memory_space<vmem>>, vector<64x32xf32>
    %c0_1 = arith.constant 0 : index
    %c0_2 = arith.constant 0 : index
    %1 = vector.load %arg2[%c0_1, %c0_2] : memref<1x32xf32, #tpu.memory_space<vmem>>, vector<1x32xf32>
    %2 = vector.broadcast %1 : vector<1x32xf32> to vector<64x32xf32>
    %3 = arith.mulf %0, %2 : vector<64x32xf32>
    %c0_3 = arith.constant 0 : index
    %c0_4 = arith.constant 0 : index
    %4 = vector.load %arg3[%c0_3, %c0_4] : memref<1x32xf32, #tpu.memory_space<vmem>>, vector<1x32xf32>
    %5 = vector.broadcast %4 : vector<1x32xf32> to vector<64x32xf32>
    %6 = arith.addf %3, %5 : vector<64x32xf32>
    %cst = arith.constant 0.000000e+00 : f32
    %7 = vector.broadcast %cst : f32 to vector<64x32xf32>
    %8 = arith.maximumf %6, %7 : vector<64x32xf32>
    %c0_5 = arith.constant 0 : index
    %c0_6 = arith.constant 0 : index
    %9 = vector.load %arg4[%c0_5, %c0_6] : memref<32x32xf32, #tpu.memory_space<vmem>>, vector<32x32xf32>
    %10 = arith.truncf %8 : vector<64x32xf32> to vector<64x32xbf16>
    %11 = arith.truncf %9 : vector<32x32xf32> to vector<32x32xbf16>
    %cst_7 = arith.constant dense<0.000000e+00> : vector<64x32xf32>
    %12 = tpu.matmul %10, %11, %cst_7 {dimension_numbers = #tpu.dot_dimension_numbers<[1], [0], [0], [1], [0, 0, 1, 1], [], []>} : vector<64x32xbf16>, vector<32x32xbf16>, vector<64x32xf32> -> vector<64x32xf32>
    %c0_8 = arith.constant 0 : index
    %c0_9 = arith.constant 0 : index
    %13 = vector.load %arg5[%c0_8, %c0_9] : memref<1x32xf32, #tpu.memory_space<vmem>>, vector<1x32xf32>
    %14 = vector.broadcast %13 : vector<1x32xf32> to vector<64x32xf32>
    %15 = arith.mulf %12, %14 : vector<64x32xf32>
    %c0_10 = arith.constant 0 : index
    %c0_11 = arith.constant 0 : index
    %16 = vector.load %arg6[%c0_10, %c0_11] : memref<1x32xf32, #tpu.memory_space<vmem>>, vector<1x32xf32>
    %17 = vector.broadcast %16 : vector<1x32xf32> to vector<64x32xf32>
    %18 = arith.addf %15, %17 : vector<64x32xf32>
    %c0_12 = arith.constant 0 : index
    %c0_13 = arith.constant 0 : index
    %19 = vector.load %arg7[%c0_12, %c0_13] : memref<64x32xf32, #tpu.memory_space<vmem>>, vector<64x32xf32>
    %20 = arith.addf %18, %19 : vector<64x32xf32>
    %cst_14 = arith.constant 0.000000e+00 : f32
    %21 = vector.broadcast %cst_14 : f32 to vector<64x32xf32>
    %22 = arith.maximumf %20, %21 : vector<64x32xf32>
    %c0_15 = arith.constant 0 : index
    %c0_16 = arith.constant 0 : index
    %23 = vector.load %arg8[%c0_15, %c0_16] : memref<64x32xf32, #tpu.memory_space<vmem>>, vector<64x32xf32>
    tpu.vector_store %arg8[%c0_15, %c0_16], %22 {strides = array<i32>} : memref<64x32xf32, #tpu.memory_space<vmem>>, vector<64x32xf32>,
    return
  }
  func.func @transform_0(%arg0: i32) -> (i32, i32) {
    %c0_i32 = arith.constant 0 : i32
    %c0_i32_0 = arith.constant 0 : i32
    return %arg0, %c0_i32 : i32, i32
  }
  func.func @transform_1(%arg0: i32) -> (i32, i32) {
    %c0_i32 = arith.constant 0 : i32
    %c0_i32_0 = arith.constant 0 : i32
    %c0_i32_1 = arith.constant 0 : i32
    return %c0_i32, %c0_i32_0 : i32, i32
  }
  func.func @transform_2(%arg0: i32) -> (i32, i32) {
    %c0_i32 = arith.constant 0 : i32
    %c0_i32_0 = arith.constant 0 : i32
    %c0_i32_1 = arith.constant 0 : i32
    return %c0_i32, %c0_i32_0 : i32, i32
  }
  func.func @transform_3(%arg0: i32) -> (i32, i32) {
    %c0_i32 = arith.constant 0 : i32
    %c0_i32_0 = arith.constant 0 : i32
    %c0_i32_1 = arith.constant 0 : i32
    return %c0_i32, %c0_i32_0 : i32, i32
  }
  func.func @transform_4(%arg0: i32) -> (i32, i32) {
    %c0_i32 = arith.constant 0 : i32
    %c0_i32_0 = arith.constant 0 : i32
    %c0_i32_1 = arith.constant 0 : i32
    return %c0_i32, %c0_i32_0 : i32, i32
  }
  func.func @transform_5(%arg0: i32) -> (i32, i32) {
    %c0_i32 = arith.constant 0 : i32
    %c0_i32_0 = arith.constant 0 : i32
    %c0_i32_1 = arith.constant 0 : i32
    return %c0_i32, %c0_i32_0 : i32, i32
  }
  func.func @transform_6(%arg0: i32) -> (i32, i32) {
    %c0_i32 = arith.constant 0 : i32
    %c0_i32_0 = arith.constant 0 : i32
    return %arg0, %c0_i32 : i32, i32
  }
  func.func @transform_7(%arg0: i32) -> (i32, i32) {
    %c0_i32 = arith.constant 0 : i32
    %c0_i32_0 = arith.constant 0 : i32
    return %arg0, %c0_i32 : i32, i32
  }
}

</mosaic_0001>

<llo_original>
// kernel: boundary_transformer_block_forward.8
$region0: #{boundary_transformer_block_forward.8}
  #allocation0 [shape = 'u32[]', space=smem, size = 0x4, offset = 0x4, fixed_abs, tag = 'smem constant byte address 0x4 - core index']
  #allocation1 [shape = 'u32[144,128]{1,0:T(1,128)}', space=vmem, size = 0x12000, scoped, tag = 'internal scratch']
  %s0 = inlined_call_operand.vmem [shape: f32[64,32], index: 0, kind: input, shape index: {}]
  %s1 = inlined_call_operand.vmem [shape: f32[32,32], index: 1, kind: input, shape index: {}]
  %s2 = inlined_call_operand.vmem [shape: f32[1,32], index: 2, kind: input, shape index: {}]
  %s3 = inlined_call_operand.vmem [shape: f32[1,32], index: 3, kind: input, shape index: {}]
  %s4 = inlined_call_operand.vmem [shape: f32[32,96], index: 4, kind: input, shape index: {}]
  %s5 = inlined_call_operand.vmem [shape: f32[1,96], index: 5, kind: input, shape index: {}]
  %s6 = inlined_call_operand.vmem [shape: f32[64,96], index: 6, kind: output, shape index: {}]
  %s7 = sld [smem:[#allocation0]]
  $region34: #{boundary_transformer_block_forward.8} parent=0
    _
  %s9 = ssub.s32 1, %s7
  %s10 = scalar_select 0, %s9, %s7
  // Predicated region
  $region2: #{boundary_transformer_block_forward.8} parent=0 // pred_check
    _
  $region3: #{boundary_transformer_block_forward.8} parent=0 // pred_check_branch
    %12 = sbr.rel (0) target = $region5
  $region4: #{boundary_transformer_block_forward.8} parent=0 // pred_region
    _
  $region5: #{boundary_transformer_block_forward.8} parent=0 // pred_fallthru
    _
  // Predicated region
  $region6: #{boundary_transformer_block_forward.8} parent=0 // pred_check
    _
  $region7: #{boundary_transformer_block_forward.8} parent=0 // pred_check_branch
    %14 = sbr.rel (0) target = $region9
  $region8: #{boundary_transformer_block_forward.8} parent=0 // pred_region
    _
  $region9: #{boundary_transformer_block_forward.8} parent=0 // pred_fallthru
    _
  // Predicated region
  $region10: #{boundary_transformer_block_forward.8} parent=0 // pred_check
    _
  $region11: #{boundary_transformer_block_forward.8} parent=0 // pred_check_branch
    %16 = sbr.rel (0) target = $region13
  $region12: #{boundary_transformer_block_forward.8} parent=0 // pred_region
    _
  $region13: #{boundary_transformer_block_forward.8} parent=0 // pred_fallthru
    _
  // Predicated region
  $region14: #{boundary_transformer_block_forward.8} parent=0 // pred_check
    _
  $region15: #{boundary_transformer_block_forward.8} parent=0 // pred_check_branch
    %18 = sbr.rel (0) target = $region17
  $region16: #{boundary_transformer_block_forward.8} parent=0 // pred_region
    _
  $region17: #{boundary_transformer_block_forward.8} parent=0 // pred_fallthru
    _
  // Predicated region
  $region18: #{boundary_transformer_block_forward.8} parent=0 // pred_check
    _
  $region19: #{boundary_transformer_block_forward.8} parent=0 // pred_check_branch
    %20 = sbr.rel (0) target = $region21
  $region20: #{boundary_transformer_block_forward.8} parent=0 // pred_region
    _
  $region21: #{boundary_transformer_block_forward.8} parent=0 // pred_fallthru
    _
  // Predicated region
  $region22: #{boundary_transformer_block_forward.8} parent=0 // pred_check
    _
  $region23: #{boundary_transformer_block_forward.8} parent=0 // pred_check_branch
    %22 = sbr.rel (0) target = $region25
  $region24: #{boundary_transformer_block_forward.8} parent=0 // pred_region
    _
  $region25: #{boundary_transformer_block_forward.8} parent=0 // pred_fallthru
    _
  %v24 = vld [vmem:[%s0] sm:$0xff]
  %v25 = vld [vmem:[%s0 + $0x8] sm:$0xff]
  %v26 = vld [vmem:[%s0 + $0x10] sm:$0xff]
  %v27 = vld [vmem:[%s0 + $0x18] sm:$0xff]
  %v28 = vld [vmem:[%s0 + $0x20] sm:$0xff]
  %v29 = vld [vmem:[%s0 + $0x28] sm:$0xff]
  %v30 = vld [vmem:[%s0 + $0x30] sm:$0xff]
  %v31 = vld [vmem:[%s0 + $0x38] sm:$0xff]
  %v32 = vld [vmem:[%s1] sm:$0xff]
  %v33 = vld [vmem:[%s1 + $0x8] sm:$0xff]
  %v34 = vld [vmem:[%s1 + $0x10] sm:$0xff]
  %v35 = vld [vmem:[%s1 + $0x18] sm:$0xff]
  %v36 = vpack.c.bf16 %v25, %v24
  %v37 = vpack.c.bf16 %v27, %v26
  %v38 = vpack.c.bf16 %v29, %v28
  %v39 = vpack.c.bf16 %v31, %v30
  %v40 = vpack.c.bf16 %v33, %v32
  %v41 = vpack.c.bf16 %v35, %v34
  %vm42 = vcmask 261120
  %v44 = vsel %vm42, %v36, 0
  %v47 = vsel %vm42, %v37, 0
  %v50 = vsel %vm42, %v38, 0
  %v53 = vsel %vm42, %v39, 0
  %55 = vmatprep.subr.bf16.mxu0 0
  %56 = vmatpush1.bf16.msra.mxu0 %v40
  %57 = vmatprep.subr.bf16.mxu0 0
  %58 = vmatpush1.bf16.msra.mxu0 %v41
  %59 = vmatprep.subr.bf16.mxu0 0
  %60 = vmatpush1.bf16.msra.mxu0 0
  %61 = vmatprep.subr.bf16.mxu0 0
  %62 = vmatpush1.bf16.msra.mxu0 0
  %63 = vmatprep.subr.bf16.mxu0 0
  %64 = vmatpush1.bf16.msra.mxu0 0
  %65 = vmatprep.subr.bf16.mxu0 0
  %66 = vmatpush1.bf16.msra.mxu0 0
  %67 = vmatprep.subr.bf16.mxu0 0
  %68 = vmatpush1.bf16.msra.mxu0 0
  %69 = vmatprep.subr.bf16.mxu0 0
  %70 = vmatpush1.bf16.msra.mxu0 0
  %71 = vmatprep.subr.bf16.mxu0 0
  %72 = vmatpush1.bf16.msra.mxu0 0
  %73 = vmatprep.subr.bf16.mxu0 0
  %74 = vmatpush1.bf16.msra.mxu0 0
  %75 = vmatprep.subr.bf16.mxu0 0
  %76 = vmatpush1.bf16.msra.mxu0 0
  %77 = vmatprep.subr.bf16.mxu0 0
  %78 = vmatpush1.bf16.msra.mxu0 0
  %79 = vmatprep.subr.bf16.mxu0 0
  %80 = vmatpush1.bf16.msra.mxu0 0
  %81 = vmatprep.subr.bf16.mxu0 0
  %82 = vmatpush1.bf16.msra.mxu0 0
  %83 = vmatprep.subr.bf16.mxu0 0
  %84 = vmatpush1.bf16.msra.mxu0 0
  %85 = vmatprep.subr.bf16.mxu0 0
  %86 = vmatpush1.bf16.msra.mxu0 0
  %87 = vmatprep.mubr.bf16.mxu0 0
  %88 = vmatmul.mubr.bf16.gmra.mrb[0].mxu0 %v44
  %v89 = vpop.f32.mrb[0].mxu0
  %v90 = vadd.f32 0.0, %v89
  %v91 = vpop.f32.mrb[0].mxu0
  %v92 = vpop.f32.mrb[0].mxu0
  %v93 = vadd.f32 0.0, %v92
  %v94 = vpop.f32.mrb[0].mxu0
  %95 = vmatprep.mubr.bf16.mxu0 0
  %96 = vmatmul.mubr.bf16.gmra.mrb[0].mxu0 %v47
  %v97 = vpop.f32.mrb[0].mxu0
  %v98 = vadd.f32 0.0, %v97
  %v99 = vpop.f32.mrb[0].mxu0
  %v100 = vpop.f32.mrb[0].mxu0
  %v101 = vadd.f32 0.0, %v100
  %v102 = vpop.f32.mrb[0].mxu0
  %103 = vmatprep.mubr.bf16.mxu0 0
  %104 = vmatmul.mubr.bf16.gmra.mrb[0].mxu0 %v50
  %v105 = vpop.f32.mrb[0].mxu0
  %v106 = vadd.f32 0.0, %v105
  %v107 = vpop.f32.mrb[0].mxu0
  %v108 = vpop.f32.mrb[0].mxu0
  %v109 = vadd.f32 0.0, %v108
  %v110 = vpop.f32.mrb[0].mxu0
  %111 = vmatprep.mubr.bf16.mxu0 0
  %112 = vmatmul.mubr.bf16.gmra.mrb[0].mxu0 %v53
  %v113 = vpop.f32.mrb[0].mxu0
  %v114 = vadd.f32 0.0, %v113
  %v115 = vpop.f32.mrb[0].mxu0
  %v116 = vpop.f32.mrb[0].mxu0
  %v117 = vadd.f32 0.0, %v116
  %v118 = vpop.f32.mrb[0].mxu0
  %119 = vdwg.mxu0
  %v120 = vld [vmem:[%s2] sm:$0x1]
  %v122 = vlaneseq
  %v123 = vshrl.u32 %v122, 7
  %v124 = vsub.s32 0, %v123
  %v125 = vrot.slane %v120, %v124
  %v127 = vmul.f32 %v90, %v125
  %v128 = vmul.f32 %v93, %v125
  %v129 = vmul.f32 %v98, %v125
  %v130 = vmul.f32 %v101, %v125
  %v131 = vmul.f32 %v106, %v125
  %v132 = vmul.f32 %v109, %v125
  %v133 = vmul.f32 %v114, %v125
  %v134 = vmul.f32 %v117, %v125
  %v135 = vld [vmem:[%s3] sm:$0x1]
  %v137 = vlaneseq
  %v138 = vshrl.u32 %v137, 7
  %v139 = vsub.s32 0, %v138
  %v140 = vrot.slane %v135, %v139
  %v142 = vadd.f32 %v127, %v140
  %v143 = vadd.f32 %v128, %v140
  %v144 = vadd.f32 %v129, %v140
  %v145 = vadd.f32 %v130, %v140
  %v146 = vadd.f32 %v131, %v140
  %v147 = vadd.f32 %v132, %v140
  %v148 = vadd.f32 %v133, %v140
  %v149 = vadd.f32 %v134, %v140
  %v150 = vmax.f32 %v142, 0.0
  %v151 = vmax.f32 %v143, 0.0
  %v152 = vmax.f32 %v144, 0.0
  %v153 = vmax.f32 %v145, 0.0
  %v154 = vmax.f32 %v146, 0.0
  %v155 = vmax.f32 %v147, 0.0
  %v156 = vmax.f32 %v148, 0.0
  %v157 = vmax.f32 %v149, 0.0
  %v158 = vld [vmem:[%s4] sm:$0xff]
  %v159 = vld [vmem:[%s4 + $0x8] sm:$0xff]
  %v160 = vld [vmem:[%s4 + $0x10] sm:$0xff]
  %v161 = vld [vmem:[%s4 + $0x18] sm:$0xff]
  %v162 = vpack.c.bf16 %v151, %v150
  %v163 = vpack.c.bf16 %v153, %v152
  %v164 = vpack.c.bf16 %v155, %v154
  %v165 = vpack.c.bf16 %v157, %v156
  %v166 = vpack.c.bf16 %v159, %v158
  %v167 = vpack.c.bf16 %v161, %v160
  %v168 = vld [vmem:[%s5] sm:$0x1]
  %v170 = vlaneseq
  %v171 = vshrl.u32 %v170, 7
  %v172 = vsub.s32 0, %v171
  %v173 = vrot.slane %v168, %v172
  %v176 = vsel %vm42, %v162, 0
  %v179 = vsel %vm42, %v163, 0
  %v182 = vsel %vm42, %v164, 0
  %v185 = vsel %vm42, %v165, 0
  %187 = vmatprep.subr.bf16.mxu0 0
  %188 = vmatpush1.bf16.msra.mxu0 %v166
  %189 = vmatprep.subr.bf16.mxu0 0
  %190 = vmatpush1.bf16.msra.mxu0 %v167
  %191 = vmatprep.subr.bf16.mxu0 0
  %192 = vmatpush1.bf16.msra.mxu0 0
  %193 = vmatprep.subr.bf16.mxu0 0
  %194 = vmatpush1.bf16.msra.mxu0 0
  %195 = vmatprep.subr.bf16.mxu0 0
  %196 = vmatpush1.bf16.msra.mxu0 0
  %197 = vmatprep.subr.bf16.mxu0 0
  %198 = vmatpush1.bf16.msra.mxu0 0
  %199 = vmatprep.subr.bf16.mxu0 0
  %200 = vmatpush1.bf16.msra.mxu0 0
  %201 = vmatprep.subr.bf16.mxu0 0
  %202 = vmatpush1.bf16.msra.mxu0 0
  %203 = vmatprep.subr.bf16.mxu0 0
  %204 = vmatpush1.bf16.msra.mxu0 0
  %205 = vmatprep.subr.bf16.mxu0 0
  %206 = vmatpush1.bf16.msra.mxu0 0
  %207 = vmatprep.subr.bf16.mxu0 0
  %208 = vmatpush1.bf16.msra.mxu0 0
  %209 = vmatprep.subr.bf16.mxu0 0
  %210 = vmatpush1.bf16.msra.mxu0 0
  %211 = vmatprep.subr.bf16.mxu0 0
  %212 = vmatpush1.bf16.msra.mxu0 0
  %213 = vmatprep.subr.bf16.mxu0 0
  %214 = vmatpush1.bf16.msra.mxu0 0
  %215 = vmatprep.subr.bf16.mxu0 0
  %216 = vmatpush1.bf16.msra.mxu0 0
  %217 = vmatprep.subr.bf16.mxu0 0
  %218 = vmatpush1.bf16.msra.mxu0 0
  %219 = vmatprep.mubr.bf16.mxu0 0
  %220 = vmatmul.mubr.bf16.gmra.mrb[0].mxu0 %v176
  %v221 = vpop.f32.mrb[0].mxu0
  %v222 = vadd.f32 %v173, %v221
  %v223 = vpop.f32.mrb[0].mxu0
  %v224 = vpop.f32.mrb[0].mxu0
  %v225 = vadd.f32 %v173, %v224
  %v226 = vpop.f32.mrb[0].mxu0
  %227 = vmatprep.mubr.bf16.mxu0 0
  %228 = vmatmul.mubr.bf16.gmra.mrb[0].mxu0 %v179
  %v229 = vpop.f32.mrb[0].mxu0
  %v230 = vadd.f32 %v173, %v229
  %v231 = vpop.f32.mrb[0].mxu0
  %v232 = vpop.f32.mrb[0].mxu0
  %v233 = vadd.f32 %v173, %v232
  %v234 = vpop.f32.mrb[0].mxu0
  %235 = vmatprep.mubr.bf16.mxu0 0
  %236 = vmatmul.mubr.bf16.gmra.mrb[0].mxu0 %v182
  %v237 = vpop.f32.mrb[0].mxu0
  %v238 = vadd.f32 %v173, %v237
  %v239 = vpop.f32.mrb[0].mxu0
  %v240 = vpop.f32.mrb[0].mxu0
  %v241 = vadd.f32 %v173, %v240
  %v242 = vpop.f32.mrb[0].mxu0
  %243 = vmatprep.mubr.bf16.mxu0 0
  %244 = vmatmul.mubr.bf16.gmra.mrb[0].mxu0 %v185
  %v245 = vpop.f32.mrb[0].mxu0
  %v246 = vadd.f32 %v173, %v245
  %v247 = vpop.f32.mrb[0].mxu0
  %v248 = vpop.f32.mrb[0].mxu0
  %v249 = vadd.f32 %v173, %v248
  %v250 = vpop.f32.mrb[0].mxu0
  %251 = vdwg.mxu0
  %vm252 = vcmask 785408
  %253 = vst.msk [vmem:[%s6] sm:$0xff] %vm252, %v222
  %254 = vst.msk [vmem:[%s6 + $0x8] sm:$0xff] %vm252, %v225
  %255 = vst.msk [vmem:[%s6 + $0x10] sm:$0xff] %vm252, %v230
  %256 = vst.msk [vmem:[%s6 + $0x18] sm:$0xff] %vm252, %v233
  %257 = vst.msk [vmem:[%s6 + $0x20] sm:$0xff] %vm252, %v238
  %258 = vst.msk [vmem:[%s6 + $0x28] sm:$0xff] %vm252, %v241
  %259 = vst.msk [vmem:[%s6 + $0x30] sm:$0xff] %vm252, %v246
  %260 = vst.msk [vmem:[%s6 + $0x38] sm:$0xff] %vm252, %v249
  // Predicated region
  $region26: #{boundary_transformer_block_forward.8} parent=0 // pred_check
    _
  $region27: #{boundary_transformer_block_forward.8} parent=0 // pred_check_branch
    %262 = sbr.rel (0) target = $region29
  $region28: #{boundary_transformer_block_forward.8} parent=0 // pred_region
    _
  $region29: #{boundary_transformer_block_forward.8} parent=0 // pred_fallthru
    _
  // Predicated region
  $region30: #{boundary_transformer_block_forward.8} parent=0 // pred_check
    _
  $region31: #{boundary_transformer_block_forward.8} parent=0 // pred_check_branch
    %264 = sbr.rel (0) target = $region33
  $region32: #{boundary_transformer_block_forward.8} parent=0 // pred_region
    _
  $region33: #{boundary_transformer_block_forward.8} parent=0 // pred_fallthru
    _

// kernel: boundary_transformer_block_forward.7
$region0: #{boundary_transformer_block_forward.7}
  #allocation0 [shape = 'u32[]', space=smem, size = 0x4, offset = 0x4, fixed_abs, tag = 'smem constant byte address 0x4 - core index']
  #allocation1 [shape = 'u32[144,128]{1,0:T(1,128)}', space=vmem, size = 0x12000, scoped, tag = 'internal scratch']
  %s0 = inlined_call_operand.vmem [shape: f32[64,32], index: 0, kind: input, shape index: {}]
  %s1 = inlined_call_operand.vmem [shape: f32[32,32], index: 1, kind: input, shape index: {}]
  %s2 = inlined_call_operand.vmem [shape: f32[1,1,64], index: 2, kind: output, shape index: {}]
  %s3 = sld [smem:[#allocation0]]
  $region18: #{boundary_transformer_block_forward.7} parent=0
    _
  %s5 = ssub.s32 1, %s3
  %s6 = scalar_select 0, %s5, %s3
  // Predicated region
  $region2: #{boundary_transformer_block_forward.7} parent=0 // pred_check
    _
  $region3: #{boundary_transformer_block_forward.7} parent=0 // pred_check_branch
    %8 = sbr.rel (0) target = $region5
  $region4: #{boundary_transformer_block_forward.7} parent=0 // pred_region
    _
  $region5: #{boundary_transformer_block_forward.7} parent=0 // pred_fallthru
    _
  // Predicated region
  $region6: #{boundary_transformer_block_forward.7} parent=0 // pred_check
    _
  $region7: #{boundary_transformer_block_forward.7} parent=0 // pred_check_branch
    %10 = sbr.rel (0) target = $region9
  $region8: #{boundary_transformer_block_forward.7} parent=0 // pred_region
    _
  $region9: #{boundary_transformer_block_forward.7} parent=0 // pred_fallthru
    _
  %v12 = vld [vmem:[%s0] sm:$0xff]
  %v13 = vld [vmem:[%s0 + $0x8] sm:$0xff]
  %v14 = vld [vmem:[%s0 + $0x10] sm:$0xff]
  %v15 = vld [vmem:[%s0 + $0x18] sm:$0xff]
  %v16 = vld [vmem:[%s0 + $0x20] sm:$0xff]
  %v17 = vld [vmem:[%s0 + $0x28] sm:$0xff]
  %v18 = vld [vmem:[%s0 + $0x30] sm:$0xff]
  %v19 = vld [vmem:[%s0 + $0x38] sm:$0xff]
  %v20 = vld [vmem:[%s1] sm:$0xff]
  %v21 = vld [vmem:[%s1 + $0x8] sm:$0xff]
  %v22 = vld [vmem:[%s1 + $0x10] sm:$0xff]
  %v23 = vld [vmem:[%s1 + $0x18] sm:$0xff]
  %v24 = vpack.c.bf16 %v13, %v12
  %v25 = vpack.c.bf16 %v15, %v14
  %v26 = vpack.c.bf16 %v17, %v16
  %v27 = vpack.c.bf16 %v19, %v18
  %v28 = vpack.c.bf16 %v21, %v20
  %v29 = vpack.c.bf16 %v23, %v22
  %vm30 = vcmask 261120
  %v32 = vsel %vm30, %v24, 0
  %v35 = vsel %vm30, %v25, 0
  %v38 = vsel %vm30, %v26, 0
  %v41 = vsel %vm30, %v27, 0
  %43 = vmatprep.subr.bf16.mxu0 0
  %44 = vmatpush1.bf16.msra.mxu0 %v28
  %45 = vmatprep.subr.bf16.mxu0 0
  %46 = vmatpush1.bf16.msra.mxu0 %v29
  %47 = vmatprep.subr.bf16.mxu0 0
  %48 = vmatpush1.bf16.msra.mxu0 0
  %49 = vmatprep.subr.bf16.mxu0 0
  %50 = vmatpush1.bf16.msra.mxu0 0
  %51 = vmatprep.subr.bf16.mxu0 0
  %52 = vmatpush1.bf16.msra.mxu0 0
  %53 = vmatprep.subr.bf16.mxu0 0
  %54 = vmatpush1.bf16.msra.mxu0 0
  %55 = vmatprep.subr.bf16.mxu0 0
  %56 = vmatpush1.bf16.msra.mxu0 0
  %57 = vmatprep.subr.bf16.mxu0 0
  %58 = vmatpush1.bf16.msra.mxu0 0
  %59 = vmatprep.subr.bf16.mxu0 0
  %60 = vmatpush1.bf16.msra.mxu0 0
  %61 = vmatprep.subr.bf16.mxu0 0
  %62 = vmatpush1.bf16.msra.mxu0 0
  %63 = vmatprep.subr.bf16.mxu0 0
  %64 = vmatpush1.bf16.msra.mxu0 0
  %65 = vmatprep.subr.bf16.mxu0 0
  %66 = vmatpush1.bf16.msra.mxu0 0
  %67 = vmatprep.subr.bf16.mxu0 0
  %68 = vmatpush1.bf16.msra.mxu0 0
  %69 = vmatprep.subr.bf16.mxu0 0
  %70 = vmatpush1.bf16.msra.mxu0 0
  %71 = vmatprep.subr.bf16.mxu0 0
  %72 = vmatpush1.bf16.msra.mxu0 0
  %73 = vmatprep.subr.bf16.mxu0 0
  %74 = vmatpush1.bf16.msra.mxu0 0
  %75 = vmatprep.mubr.bf16.mxu0 0
  %76 = vmatmul.mubr.bf16.gmra.mrb[0].mxu0 %v32
  %v77 = vpop.f32.mrb[0].mxu0
  %v78 = vadd.f32 0.0, %v77
  %v79 = vpop.f32.mrb[0].mxu0
  %v80 = vpop.f32.mrb[0].mxu0
  %v81 = vadd.f32 0.0, %v80
  %v82 = vpop.f32.mrb[0].mxu0
  %83 = vmatprep.mubr.bf16.mxu0 0
  %84 = vmatmul.mubr.bf16.gmra.mrb[0].mxu0 %v35
  %v85 = vpop.f32.mrb[0].mxu0
  %v86 = vadd.f32 0.0, %v85
  %v87 = vpop.f32.mrb[0].mxu0
  %v88 = vpop.f32.mrb[0].mxu0
  %v89 = vadd.f32 0.0, %v88
  %v90 = vpop.f32.mrb[0].mxu0
  %91 = vmatprep.mubr.bf16.mxu0 0
  %92 = vmatmul.mubr.bf16.gmra.mrb[0].mxu0 %v38
  %v93 = vpop.f32.mrb[0].mxu0
  %v94 = vadd.f32 0.0, %v93
  %v95 = vpop.f32.mrb[0].mxu0
  %v96 = vpop.f32.mrb[0].mxu0
  %v97 = vadd.f32 0.0, %v96
  %v98 = vpop.f32.mrb[0].mxu0
  %99 = vmatprep.mubr.bf16.mxu0 0
  %100 = vmatmul.mubr.bf16.gmra.mrb[0].mxu0 %v41
  %v101 = vpop.f32.mrb[0].mxu0
  %v102 = vadd.f32 0.0, %v101
  %v103 = vpop.f32.mrb[0].mxu0
  %v104 = vpop.f32.mrb[0].mxu0
  %v105 = vadd.f32 0.0, %v104
  %v106 = vpop.f32.mrb[0].mxu0
  %107 = vdwg.mxu0
  %v108 = vsel %vm30, %v78, 0.0
  %v109 = vsel %vm30, %v81, 0.0
  %v110 = vadd.f32 %v108, %v109
  %v111 = vsel %vm30, %v86, 0.0
  %v112 = vadd.f32 %v110, %v111
  %v113 = vsel %vm30, %v89, 0.0
  %v114 = vadd.f32 %v112, %v113
  %v115 = vsel %vm30, %v94, 0.0
  %v116 = vadd.f32 %v114, %v115
  %v117 = vsel %vm30, %v97, 0.0
  %v118 = vadd.f32 %v116, %v117
  %v119 = vsel %vm30, %v102, 0.0
  %v120 = vadd.f32 %v118, %v119
  %v121 = vsel %vm30, %v105, 0.0
  %v122 = vadd.f32 %v120, %v121
  %v123 = vrot.slane %v122, 4
  %v124 = vadd.f32 %v122, %v123
  %v125 = vrot.slane %v124, 2
  %v126 = vadd.f32 %v124, %v125
  %v127 = vrot.slane %v126, 1
  %v128 = vadd.f32 %v126, %v127
  %v129 = vmul.f32 %v78, %v78
  %v130 = vmul.f32 %v81, %v81
  %v131 = vmul.f32 %v86, %v86
  %v132 = vmul.f32 %v89, %v89
  %v133 = vmul.f32 %v94, %v94
  %v134 = vmul.f32 %v97, %v97
  %v135 = vmul.f32 %v102, %v102
  %v136 = vmul.f32 %v105, %v105
  %v137 = vsel %vm30, %v129, 0.0
  %v138 = vsel %vm30, %v130, 0.0
  %v139 = vadd.f32 %v137, %v138
  %v140 = vsel %vm30, %v131, 0.0
  %v141 = vadd.f32 %v139, %v140
  %v142 = vsel %vm30, %v132, 0.0
  %v143 = vadd.f32 %v141, %v142
  %v144 = vsel %vm30, %v133, 0.0
  %v145 = vadd.f32 %v143, %v144
  %v146 = vsel %vm30, %v134, 0.0
  %v147 = vadd.f32 %v145, %v146
  %v148 = vsel %vm30, %v135, 0.0
  %v149 = vadd.f32 %v147, %v148
  %v150 = vsel %vm30, %v136, 0.0
  %v151 = vadd.f32 %v149, %v150
  %v152 = vrot.slane %v151, 4
  %v153 = vadd.f32 %v151, %v152
  %v154 = vrot.slane %v153, 2
  %v155 = vadd.f32 %v153, %v154
  %v156 = vrot.slane %v155, 1
  %v157 = vadd.f32 %v155, %v156
  %159 = vrot.lane.b32.xlu0 %v157, 32
  %v160 = vpop.permute.xlu0 %159
  %v162 = vsel %vm30, %v128, %v160
  %vm163 = vcmask 516096
  %164 = vst.msk [vmem:[%s2] sm:$0x1] %vm163, %v162
  // Predicated region
  $region10: #{boundary_transformer_block_forward.7} parent=0 // pred_check
    _
  $region11: #{boundary_transformer_block_forward.7} parent=0 // pred_check_branch
    %166 = sbr.rel (0) target = $region13
  $region12: #{boundary_transformer_block_forward.7} parent=0 // pred_region
    _
  $region13: #{boundary_transformer_block_forward.7} parent=0 // pred_fallthru
    _
  // Predicated region
  $region14: #{boundary_transformer_block_forward.7} parent=0 // pred_check
    _
  $region15: #{boundary_transformer_block_forward.7} parent=0 // pred_check_branch
    %168 = sbr.rel (0) target = $region17
  $region16: #{boundary_transformer_block_forward.7} parent=0 // pred_region
    _
  $region17: #{boundary_transformer_block_forward.7} parent=0 // pred_fallthru
    _

// kernel: boundary_transformer_block_forward.9
$region0: #{boundary_transformer_block_forward.9}
  #allocation0 [shape = 'u32[]', space=smem, size = 0x4, offset = 0x4, fixed_abs, tag = 'smem constant byte address 0x4 - core index']
  #allocation1 [shape = 'u32[144,128]{1,0:T(1,128)}', space=vmem, size = 0x12000, scoped, tag = 'internal scratch']
  %s0 = inlined_call_operand.vmem [shape: bf16[16,64,32], index: 0, kind: input, shape index: {}]
  %s1 = inlined_call_operand.vmem [shape: bf16[16,64,8], index: 1, kind: input, shape index: {}]
  %s2 = inlined_call_operand.vmem [shape: f32[64,32], index: 2, kind: input, shape index: {}]
  %s3 = inlined_call_operand.vmem [shape: f32[8,32], index: 3, kind: input, shape index: {}]
  %s4 = inlined_call_operand.vmem [shape: f32[1,32], index: 4, kind: input, shape index: {}]
  %s5 = inlined_call_operand.vmem [shape: f32[16,1,64], index: 5, kind: output, shape index: {}]
  %s6 = sld [smem:[#allocation0]]
  $region53: #{boundary_transformer_block_forward.9} parent=0
    _
  %s8 = ssub.s32 1, %s6
  %s9 = scalar_select 0, %s8, %s6
  loop: start=0, step=1, limit=18
  $region2: #{boundary_transformer_block_forward.9} parent=0 // loop_pre_header
    _
  $region3: #{boundary_transformer_block_forward.9} parent=0 // loop_header
    %s11 = sphi 0, %s15
    %p12 = scmp.ge.s32.totalorder %s11, 18
    %s18 = sphi 0, %s30
    %s19 = sphi 0, %s26
    %s20 = sphi 0, %s18
    %s21 = sphi 0, %s19
    %s22 = sphi 0, %s20
    %s23 = sphi 0, %s21
    %s35 = sphi 0, %s37
    %s38 = sphi 0, %s35
    %s39 = sphi 0, %s38
    %s55 = sphi 0, %s39
    %s63 = sphi 0, %s65
    %s66 = sphi 0, %s63
    %s67 = sphi 0, %s66
    %s83 = sphi 0, %s67
    %s89 = sphi 0, %s91
    %s92 = sphi 0, %s89
    %s93 = sphi 0, %s92
    %s109 = sphi 0, %s93
    %s113 = sphi 0, %s113
    %s115 = sphi 0, %s113
    %s116 = sphi 0, %s115
    %s130 = sphi 0, %s116
    %s134 = sphi 0, %s134
    %s136 = sphi 0, %s134
    %s137 = sphi 0, %s136
    %s151 = sphi 0, %s137
    %s161 = sphi 0, %s163
    %s164 = sphi 0, %s161
    %s165 = sphi 0, %s164
    %s181 = sphi 0, %s165
  $region4: #{boundary_transformer_block_forward.9} parent=0 // loop_header_branch
    %14 = sbr.rel (%p12) target = $region8
  $region5: #{boundary_transformer_block_forward.9} parent=0 // loop_body
    %s16 = ssub.s32 %s11, 1
    %s17 = ssub.s32 %s11, 2
    %s24 = sadd.s32 1, %s19
    %p25 = scmp.ge.s32.totalorder %s24, 16
    %s26 = scalar_select %p25, 0, %s24
    %s27 = sadd.s32 1, %s18
    %s28 = scalar_select %p25, %s27, %s18
    %p29 = scmp.ge.s32.totalorder %s28, 1
    %s30 = scalar_select %p29, 0, %s28
    %s31 = ssub.s32 %s19, %s26
    %s32 = ssub.s32 %s18, %s30
    %s33 = sor.u32 %s31, %s32
    %p34 = scmp.eq.s32.totalorder %s33, 0
    %s36 = sadd.s32 %s35, 1
    %s37 = scalar_select %p34, %s35, %s36
    %p40 = pneg %p34
    %p41 = scmp.eq.s32.totalorder %s11, 15
    %p42 = por %p40, %p41
    %p43 = scmp.ne.s32.totalorder %s35, %s38
    %p44 = scmp.eq.s32.totalorder %s11, 0
    %p45 = por %p43, %p44
    %p46 = scmp.ne.s32.totalorder %s35, %s38
    %p47 = scmp.eq.s32.totalorder %s16, 15
    %p48 = por %p46, %p47
    %p49 = scmp.ne.s32.totalorder %s38, %s39
    %p50 = scmp.eq.s32.totalorder %s16, 0
    %p51 = por %p49, %p50
    %p52 = scmp.ne.s32.totalorder %s38, %s39
    %p53 = scmp.eq.s32.totalorder %s17, 15
    %p54 = por %p52, %p53
    %p56 = scmp.ne.s32.totalorder %s39, %s55
    %p57 = scmp.eq.s32.totalorder %s17, 0
    %p58 = por %p56, %p57
    %s59 = ssub.s32 %s19, %s26
    %s60 = ssub.s32 %s18, %s30
    %s61 = sor.u32 %s59, %s60
    %p62 = scmp.eq.s32.totalorder %s61, 0
    %s64 = sadd.s32 %s63, 1
    %s65 = scalar_select %p62, %s63, %s64
    %p68 = pneg %p62
    %p69 = scmp.eq.s32.totalorder %s11, 15
    %p70 = por %p68, %p69
    %p71 = scmp.ne.s32.totalorder %s63, %s66
    %p72 = scmp.eq.s32.totalorder %s11, 0
    %p73 = por %p71, %p72
    %p74 = scmp.ne.s32.totalorder %s63, %s66
    %p75 = scmp.eq.s32.totalorder %s16, 15
    %p76 = por %p74, %p75
    %p77 = scmp.ne.s32.totalorder %s66, %s67
    %p78 = scmp.eq.s32.totalorder %s16, 0
    %p79 = por %p77, %p78
    %p80 = scmp.ne.s32.totalorder %s66, %s67
    %p81 = scmp.eq.s32.totalorder %s17, 15
    %p82 = por %p80, %p81
    %p84 = scmp.ne.s32.totalorder %s67, %s83
    %p85 = scmp.eq.s32.totalorder %s17, 0
    %p86 = por %p84, %p85
    %s87 = ssub.s32 %s18, %s30
    %p88 = scmp.eq.s32.totalorder %s87, 0
    %s90 = sadd.s32 %s89, 1
    %s91 = scalar_select %p88, %s89, %s90
    %p94 = pneg %p88
    %p95 = scmp.eq.s32.totalorder %s11, 15
    %p96 = por %p94, %p95
    %p97 = scmp.ne.s32.totalorder %s89, %s92
    %p98 = scmp.eq.s32.totalorder %s11, 0
    %p99 = por %p97, %p98
    %p100 = scmp.ne.s32.totalorder %s89, %s92
    %p101 = scmp.eq.s32.totalorder %s16, 15
    %p102 = por %p100, %p101
    %p103 = scmp.ne.s32.totalorder %s92, %s93
    %p104 = scmp.eq.s32.totalorder %s16, 0
    %p105 = por %p103, %p104
    %p106 = scmp.ne.s32.totalorder %s92, %s93
    %p107 = scmp.eq.s32.totalorder %s17, 15
    %p108 = por %p106, %p107
    %p110 = scmp.ne.s32.totalorder %s93, %s109
    %p111 = scmp.eq.s32.totalorder %s17, 0
    %p112 = por %p110, %p111
    %s114 = sadd.s32 %s113, 1
    %p117 = scmp.eq.s32.totalorder %s11, 15
    %p118 = scmp.ne.s32.totalorder %s113, %s115
    %p119 = scmp.eq.s32.totalorder %s11, 0
    %p120 = por %p118, %p119
    %p121 = scmp.ne.s32.totalorder %s113, %s115
    %p122 = scmp.eq.s32.totalorder %s16, 15
    %p123 = por %p121, %p122
    %p124 = scmp.ne.s32.totalorder %s115, %s116
    %p125 = scmp.eq.s32.totalorder %s16, 0
    %p126 = por %p124, %p125
    %p127 = scmp.ne.s32.totalorder %s115, %s116
    %p128 = scmp.eq.s32.totalorder %s17, 15
    %p129 = por %p127, %p128
    %p131 = scmp.ne.s32.totalorder %s116, %s130
    %p132 = scmp.eq.s32.totalorder %s17, 0
    %p133 = por %p131, %p132
    %s135 = sadd.s32 %s134, 1
    %p138 = scmp.eq.s32.totalorder %s11, 15
    %p139 = scmp.ne.s32.totalorder %s134, %s136
    %p140 = scmp.eq.s32.totalorder %s11, 0
    %p141 = por %p139, %p140
    %p142 = scmp.ne.s32.totalorder %s134, %s136
    %p143 = scmp.eq.s32.totalorder %s16, 15
    %p144 = por %p142, %p143
    %p145 = scmp.ne.s32.totalorder %s136, %s137
    %p146 = scmp.eq.s32.totalorder %s16, 0
    %p147 = por %p145, %p146
    %p148 = scmp.ne.s32.totalorder %s136, %s137
    %p149 = scmp.eq.s32.totalorder %s17, 15
    %p150 = por %p148, %p149
    %p152 = scmp.ne.s32.totalorder %s137, %s151
    %p153 = scmp.eq.s32.totalorder %s17, 0
    %p154 = por %p152, %p153
    %s155 = smul.u32 %s18, 16
    %s156 = sadd.s32 %s155, %s19
    %s157 = smul.u32 %s30, 16
    %s158 = sadd.s32 %s157, %s26
    %s159 = ssub.s32 %s156, %s158
    %p160 = scmp.eq.s32.totalorder %s159, 0
    %s162 = sadd.s32 %s161, 1
    %s163 = scalar_select %p160, %s161, %s162
    %p166 = pneg %p160
    %p167 = scmp.eq.s32.totalorder %s11, 15
    %p168 = por %p166, %p167
    %p169 = scmp.ne.s32.totalorder %s161, %s164
    %p170 = scmp.eq.s32.totalorder %s11, 0
    %p171 = por %p169, %p170
    %p172 = scmp.ne.s32.totalorder %s161, %s164
    %p173 = scmp.eq.s32.totalorder %s16, 15
    %p174 = por %p172, %p173
    %p175 = scmp.ne.s32.totalorder %s164, %s165
    %p176 = scmp.eq.s32.totalorder %s16, 0
    %p177 = por %p175, %p176
    %p178 = scmp.ne.s32.totalorder %s164, %s165
    %p179 = scmp.eq.s32.totalorder %s17, 15
    %p180 = por %p178, %p179
    %p182 = scmp.ne.s32.totalorder %s165, %s181
    %p183 = scmp.eq.s32.totalorder %s17, 0
    %p184 = por %p182, %p183
    %p185 = scmp.le.s32.totalorder 1, %s11
    %p186 = scmp.lt.s32.totalorder %s11, 17
    %p187 = pnand %p185, %p186
    %p188 = pneg %p187
    // Predicated region
    $region9: #{boundary_transformer_block_forward.9} parent=5 // pred_check
      _
    $region10: #{boundary_transformer_block_forward.9} parent=5 // pred_check_branch
      %190 = sbr.rel (%p187) target = $region12
    $region11: #{boundary_transformer_block_forward.9} parent=5 // pred_region
      %s191 = ssub.s32 %s11, 1
      // Predicated region
      $region13: #{boundary_transformer_block_forward.9} parent=11 // pred_check
        %p192 = pneg %p105
      $region14: #{boundary_transformer_block_forward.9} parent=11 // pred_check_branch
        %194 = sbr.rel (%p192) target = $region16
      $region15: #{boundary_transformer_block_forward.9} parent=11 // pred_region
        %s195 = smul.u32 8, %s20
        %p196 = scmp.lt.s32.totalorder %s195, 7
        %s197 = scalar_select %p196, %s195, 7
        %s198 = smul.addr %s197, 8
        %s199 = scalar_lea.vmem %s2, %s198
        %s200 = smul.u32 8, %s20
      $region16: #{boundary_transformer_block_forward.9} parent=11 // pred_fallthru
        _
      // Predicated region
      $region17: #{boundary_transformer_block_forward.9} parent=11 // pred_check
        %p201 = pneg %p126
      $region18: #{boundary_transformer_block_forward.9} parent=11 // pred_check_branch
        %203 = sbr.rel (%p201) target = $region20
      $region19: #{boundary_transformer_block_forward.9} parent=11 // pred_region
        _
      $region20: #{boundary_transformer_block_forward.9} parent=11 // pred_fallthru
        _
      // Predicated region
      $region21: #{boundary_transformer_block_forward.9} parent=11 // pred_check
        %p204 = pneg %p147
      $region22: #{boundary_transformer_block_forward.9} parent=11 // pred_check_branch
        %206 = sbr.rel (%p204) target = $region24
      $region23: #{boundary_transformer_block_forward.9} parent=11 // pred_region
        _
      $region24: #{boundary_transformer_block_forward.9} parent=11 // pred_fallthru
        _
    $region12: #{boundary_transformer_block_forward.9} parent=5 // pred_fallthru
      _
    %p207 = scmp.lt.s32.totalorder %s11, 16
    // Predicated region
    $region25: #{boundary_transformer_block_forward.9} parent=5 // pred_check
      %p208 = pneg %p207
    $region26: #{boundary_transformer_block_forward.9} parent=5 // pred_check_branch
      %210 = sbr.rel (%p208) target = $region28
    $region27: #{boundary_transformer_block_forward.9} parent=5 // pred_region
      // Predicated region
      $region29: #{boundary_transformer_block_forward.9} parent=27 // pred_check
        %p211 = pneg %p45
      $region30: #{boundary_transformer_block_forward.9} parent=27 // pred_check_branch
        %213 = sbr.rel (%p211) target = $region32
      $region31: #{boundary_transformer_block_forward.9} parent=27 // pred_region
        %s214 = smul.u32 8, %s18
        %p215 = scmp.lt.s32.totalorder %s19, 15
        %s216 = scalar_select %p215, %s19, 15
        %p217 = scmp.lt.s32.totalorder %s214, 7
        %s218 = scalar_select %p217, %s214, 7
        %s219 = smul.addr %s216, 8
        %s220 = sadd.s32 %s218, %s219
        %s221 = smul.addr %s220, 4
        %s222 = scalar_lea.vmem %s0, %s221
        %s223 = smul.u32 8, %s18
      $region32: #{boundary_transformer_block_forward.9} parent=27 // pred_fallthru
        _
      // Predicated region
      $region33: #{boundary_transformer_block_forward.9} parent=27 // pred_check
        %p224 = pneg %p73
      $region34: #{boundary_transformer_block_forward.9} parent=27 // pred_check_branch
        %226 = sbr.rel (%p224) target = $region36
      $region35: #{boundary_transformer_block_forward.9} parent=27 // pred_region
        %s227 = smul.u32 8, %s18
        %p228 = scmp.lt.s32.totalorder %s19, 15
        %s229 = scalar_select %p228, %s19, 15
        %p230 = scmp.lt.s32.totalorder %s227, 7
        %s231 = scalar_select %p230, %s227, 7
        %s232 = smul.addr %s229, 8
        %s233 = sadd.s32 %s231, %s232
        %s234 = smul.addr %s233, 4
        %s235 = scalar_lea.vmem %s1, %s234
        %s236 = smul.u32 8, %s18
      $region36: #{boundary_transformer_block_forward.9} parent=27 // pred_fallthru
        _
    $region28: #{boundary_transformer_block_forward.9} parent=5 // pred_fallthru
      _
    %p237 = scmp.le.s32.totalorder 1, %s11
    %p238 = scmp.lt.s32.totalorder %s11, 17
    %p239 = pnand %p237, %p238
    %p240 = pneg %p239
    // Predicated region
    $region37: #{boundary_transformer_block_forward.9} parent=5 // pred_check
      _
    $region38: #{boundary_transformer_block_forward.9} parent=5 // pred_check_branch
      %242 = sbr.rel (%p239) target = $region40
    $region39: #{boundary_transformer_block_forward.9} parent=5 // pred_region
      %s243 = ssub.s32 %s11, 1
      %s244 = smul.u32 8, %s20
      %p245 = scmp.lt.s32.totalorder %s21, 15
      %s246 = scalar_select %p245, %s21, 15
      %p247 = scmp.lt.s32.totalorder %s244, 7
      %s248 = scalar_select %p247, %s244, 7
      %s249 = smul.addr %s246, 8
      %s250 = sadd.s32 %s248, %s249
      %s251 = smul.addr %s250, 4
      %s252 = scalar_lea.vmem %s0, %s251
      %p253 = pneg %p51
      %p254 = pneg %p48
      %s255 = smul.u32 8, %s20
      %p256 = scmp.lt.s32.totalorder %s21, 15
      %s257 = scalar_select %p256, %s21, 15
      %p258 = scmp.lt.s32.totalorder %s255, 7
      %s259 = scalar_select %p258, %s255, 7
      %s260 = smul.addr %s257, 8
      %s261 = sadd.s32 %s259, %s260
      %s262 = smul.addr %s261, 4
      %s263 = scalar_lea.vmem %s1, %s262
      %p264 = pneg %p79
      %p265 = pneg %p76
      %s266 = smul.u32 8, %s20
      %p267 = scmp.lt.s32.totalorder %s266, 7
      %s268 = scalar_select %p267, %s266, 7
      %s269 = smul.addr %s268, 8
      %s270 = scalar_lea.vmem %s2, %s269
      %p271 = pneg %p105
      %p272 = pneg %p102
      %p273 = pneg %p126
      %p274 = pneg %p123
      %p275 = pneg %p147
      %p276 = pneg %p144
      %p277 = pneg %p177
      %p278 = pneg %p174
      %s279 = smul.u32 %s20, 16
      %s280 = sadd.s32 %s279, %s21
      %p281 = scmp.lt.s32.totalorder %s280, 15
      %s282 = scalar_select %p281, %s280, 15
      %s283 = scalar_lea.vmem %s5, %s282
      %s284 = smul.u32 8, %s20
      %p285 = scmp.lt.s32.totalorder %s21, 15
      %s286 = scalar_select %p285, %s21, 15
      %p287 = scmp.lt.s32.totalorder %s284, 7
      %s288 = scalar_select %p287, %s284, 7
      %s289 = smul.addr %s286, 8
      %s290 = sadd.s32 %s288, %s289
      %s291 = smul.addr %s290, 4
      %s292 = scalar_lea.vmem %s0, %s291
      %s293 = smul.u32 8, %s20
      %s294 = smul.u32 8, %s20
      %p295 = scmp.lt.s32.totalorder %s21, 15
      %s296 = scalar_select %p295, %s21, 15
      %p297 = scmp.lt.s32.totalorder %s294, 7
      %s298 = scalar_select %p297, %s294, 7
      %s299 = smul.addr %s296, 8
      %s300 = sadd.s32 %s298, %s299
      %s301 = smul.addr %s300, 4
      %s302 = scalar_lea.vmem %s1, %s301
      %s303 = smul.u32 8, %s20
      %s304 = smul.u32 8, %s20
      %p305 = scmp.lt.s32.totalorder %s304, 7
      %s306 = scalar_select %p305, %s304, 7
      %s307 = smul.addr %s306, 8
      %s308 = scalar_lea.vmem %s2, %s307
      %s309 = smul.u32 8, %s20
      %s310 = smul.u32 %s20, 16
      %s311 = sadd.s32 %s310, %s21
      %p312 = scmp.lt.s32.totalorder %s311, 15
      %s313 = scalar_select %p312, %s311, 15
      %s314 = scalar_lea.vmem %s5, %s313
      %s315 = smul.u32 %s20, 16
      %s316 = sadd.s32 %s315, %s21
      %v318 = vld [vmem:[%s302] sm:$0xf]
      %v319 = vld [vmem:[%s302 + $0x4] sm:$0xf]
      %v320 = vld [vmem:[%s302 + $0x8] sm:$0xf]
      %v321 = vld [vmem:[%s302 + $0xc] sm:$0xf]
      %v322 = vld [vmem:[%s302 + $0x10] sm:$0xf]
      %v323 = vld [vmem:[%s302 + $0x14] sm:$0xf]
      %v324 = vld [vmem:[%s302 + $0x18] sm:$0xf]
      %v325 = vld [vmem:[%s302 + $0x1c] sm:$0xf]
      %v326 = vld [vmem:[%s3] sm:$0xff]
      %v327 = vpack.c.bf16 %v326, %v326
      %v328 = vld [vmem:[%s4] sm:$0x1]
      %v330 = vlaneseq
      %v331 = vshrl.u32 %v330, 7
      %v332 = vsub.s32 0, %v331
      %v333 = vrot.slane %v328, %v332
      %v343 = vunpack.c.l.b16 %v318
      %v344 = vunpack.c.l.b16 %v319
      %v345 = vunpack.c.l.b16 %v320
      %v346 = vunpack.c.l.b16 %v321
      %v347 = vunpack.c.l.b16 %v322
      %v348 = vunpack.c.l.b16 %v323
      %v349 = vunpack.c.l.b16 %v324
      %v350 = vunpack.c.l.b16 %v325
      %v351 = vpack.c.b16 %v344, %v343
      %v352 = vpack.c.b16 %v346, %v345
      %v353 = vpack.c.b16 %v348, %v347
      %v354 = vpack.c.b16 %v350, %v349
      %vm355 = vcmask 64512
      %v357 = vsel %vm355, %v351, 0
      %v360 = vsel %vm355, %v352, 0
      %v363 = vsel %vm355, %v353, 0
      %v366 = vsel %vm355, %v354, 0
      %vm368 = vcmask 1043456
      %v370 = vsel %vm368, %v327, 0
      %372 = vmatprep.subr.bf16.mxu0 0
      %373 = vmatpush1.bf16.msra.mxu0 %v370
      %374 = vmatprep.subr.bf16.mxu0 0
      %375 = vmatpush1.bf16.msra.mxu0 0
      %376 = vmatprep.subr.bf16.mxu0 0
      %377 = vmatpush1.bf16.msra.mxu0 0
      %378 = vmatprep.subr.bf16.mxu0 0
      %379 = vmatpush1.bf16.msra.mxu0 0
      %380 = vmatprep.subr.bf16.mxu0 0
      %381 = vmatpush1.bf16.msra.mxu0 0
      %382 = vmatprep.subr.bf16.mxu0 0
      %383 = vmatpush1.bf16.msra.mxu0 0
      %384 = vmatprep.subr.bf16.mxu0 0
      %385 = vmatpush1.bf16.msra.mxu0 0
      %386 = vmatprep.subr.bf16.mxu0 0
      %387 = vmatpush1.bf16.msra.mxu0 0
      %388 = vmatprep.subr.bf16.mxu0 0
      %389 = vmatpush1.bf16.msra.mxu0 0
      %390 = vmatprep.subr.bf16.mxu0 0
      %391 = vmatpush1.bf16.msra.mxu0 0
      %392 = vmatprep.subr.bf16.mxu0 0
      %393 = vmatpush1.bf16.msra.mxu0 0
      %394 = vmatprep.subr.bf16.mxu0 0
      %395 = vmatpush1.bf16.msra.mxu0 0
      %396 = vmatprep.subr.bf16.mxu0 0
      %397 = vmatpush1.bf16.msra.mxu0 0
      %398 = vmatprep.subr.bf16.mxu0 0
      %399 = vmatpush1.bf16.msra.mxu0 0
      %400 = vmatprep.subr.bf16.mxu0 0
      %401 = vmatpush1.bf16.msra.mxu0 0
      %402 = vmatprep.subr.bf16.mxu0 0
      %403 = vmatpush1.bf16.msra.mxu0 0
      %404 = vmatprep.mubr.bf16.mxu0 0
      %405 = vmatmul.mubr.bf16.gmra.mrb[0].mxu0 %v357
      %v406 = vpop.f32.mrb[0].mxu0
      %v407 = vadd.f32 %v333, %v406
      %v408 = vpop.f32.mrb[0].mxu0
      %v409 = vpop.f32.mrb[0].mxu0
      %v410 = vadd.f32 %v333, %v409
      %v411 = vpop.f32.mrb[0].mxu0
      %412 = vmatprep.mubr.bf16.mxu0 0
      %413 = vmatmul.mubr.bf16.gmra.mrb[0].mxu0 %v360
      %v414 = vpop.f32.mrb[0].mxu0
      %v415 = vadd.f32 %v333, %v414
      %v416 = vpop.f32.mrb[0].mxu0
      %v417 = vpop.f32.mrb[0].mxu0
      %v418 = vadd.f32 %v333, %v417
      %v419 = vpop.f32.mrb[0].mxu0
      %420 = vmatprep.mubr.bf16.mxu0 0
      %421 = vmatmul.mubr.bf16.gmra.mrb[0].mxu0 %v363
      %v422 = vpop.f32.mrb[0].mxu0
      %v423 = vadd.f32 %v333, %v422
      %v424 = vpop.f32.mrb[0].mxu0
      %v425 = vpop.f32.mrb[0].mxu0
      %v426 = vadd.f32 %v333, %v425
      %v427 = vpop.f32.mrb[0].mxu0
      %428 = vmatprep.mubr.bf16.mxu0 0
      %429 = vmatmul.mubr.bf16.gmra.mrb[0].mxu0 %v366
      %v430 = vpop.f32.mrb[0].mxu0
      %v431 = vadd.f32 %v333, %v430
      %v432 = vpop.f32.mrb[0].mxu0
      %v433 = vpop.f32.mrb[0].mxu0
      %v434 = vadd.f32 %v333, %v433
      %v435 = vpop.f32.mrb[0].mxu0
      %436 = vdwg.mxu0
      %v437 = vld [vmem:[%s292] sm:$0xf]
      %v438 = vld [vmem:[%s292 + $0x4] sm:$0xf]
      %v439 = vld [vmem:[%s292 + $0x8] sm:$0xf]
      %v440 = vld [vmem:[%s292 + $0xc] sm:$0xf]
      %v441 = vld [vmem:[%s292 + $0x10] sm:$0xf]
      %v442 = vld [vmem:[%s292 + $0x14] sm:$0xf]
      %v443 = vld [vmem:[%s292 + $0x18] sm:$0xf]
      %v444 = vld [vmem:[%s292 + $0x1c] sm:$0xf]
      %v445 = vunpack.c.l.bf16 %v437
      %v446 = vunpack.c.l.bf16 %v438
      %v447 = vunpack.c.l.bf16 %v439
      %v448 = vunpack.c.l.bf16 %v440
      %v449 = vunpack.c.l.bf16 %v441
      %v450 = vunpack.c.l.bf16 %v442
      %v451 = vunpack.c.l.bf16 %v443
      %v452 = vunpack.c.l.bf16 %v444
      %v453 = vld [vmem:[%s308] sm:$0xff]
      %v454 = vld [vmem:[%s308 + $0x8] sm:$0xff]
      %v455 = vld [vmem:[%s308 + $0x10] sm:$0xff]
      %v456 = vld [vmem:[%s308 + $0x18] sm:$0xff]
      %v457 = vld [vmem:[%s308 + $0x20] sm:$0xff]
      %v458 = vld [vmem:[%s308 + $0x28] sm:$0xff]
      %v459 = vld [vmem:[%s308 + $0x30] sm:$0xff]
      %v460 = vld [vmem:[%s308 + $0x38] sm:$0xff]
      %v461 = vsub.f32 %v445, %v453
      %v462 = vsub.f32 %v446, %v454
      %v463 = vsub.f32 %v447, %v455
      %v464 = vsub.f32 %v448, %v456
      %v465 = vsub.f32 %v449, %v457
      %v466 = vsub.f32 %v450, %v458
      %v467 = vsub.f32 %v451, %v459
      %v468 = vsub.f32 %v452, %v460
      %v469 = vadd.f32 %v461, %v407
      %v470 = vadd.f32 %v462, %v410
      %v471 = vadd.f32 %v463, %v415
      %v472 = vadd.f32 %v464, %v418
      %v473 = vadd.f32 %v465, %v423
      %v474 = vadd.f32 %v466, %v426
      %v475 = vadd.f32 %v467, %v431
      %v476 = vadd.f32 %v468, %v434
      %vm477 = vcmask 261120
      %v478 = vsel %vm477, %v469, 0.0
      %v479 = vsel %vm477, %v470, 0.0
      %v480 = vadd.f32 %v478, %v479
      %v481 = vsel %vm477, %v471, 0.0
      %v482 = vadd.f32 %v480, %v481
      %v483 = vsel %vm477, %v472, 0.0
      %v484 = vadd.f32 %v482, %v483
      %v485 = vsel %vm477, %v473, 0.0
      %v486 = vadd.f32 %v484, %v485
      %v487 = vsel %vm477, %v474, 0.0
      %v488 = vadd.f32 %v486, %v487
      %v489 = vsel %vm477, %v475, 0.0
      %v490 = vadd.f32 %v488, %v489
      %v491 = vsel %vm477, %v476, 0.0
      %v492 = vadd.f32 %v490, %v491
      %v493 = vrot.slane %v492, 4
      %v494 = vadd.f32 %v492, %v493
      %v495 = vrot.slane %v494, 2
      %v496 = vadd.f32 %v494, %v495
      %v497 = vrot.slane %v496, 1
      %v498 = vadd.f32 %v496, %v497
      %v499 = vmul.f32 %v469, %v469
      %v500 = vmul.f32 %v470, %v470
      %v501 = vmul.f32 %v471, %v471
      %v502 = vmul.f32 %v472, %v472
      %v503 = vmul.f32 %v473, %v473
      %v504 = vmul.f32 %v474, %v474
      %v505 = vmul.f32 %v475, %v475
      %v506 = vmul.f32 %v476, %v476
      %v507 = vsel %vm477, %v499, 0.0
      %v508 = vsel %vm477, %v500, 0.0
      %v509 = vadd.f32 %v507, %v508
      %v510 = vsel %vm477, %v501, 0.0
      %v511 = vadd.f32 %v509, %v510
      %v512 = vsel %vm477, %v502, 0.0
      %v513 = vadd.f32 %v511, %v512
      %v514 = vsel %vm477, %v503, 0.0
      %v515 = vadd.f32 %v513, %v514
      %v516 = vsel %vm477, %v504, 0.0
      %v517 = vadd.f32 %v515, %v516
      %v518 = vsel %vm477, %v505, 0.0
      %v519 = vadd.f32 %v517, %v518
      %v520 = vsel %vm477, %v506, 0.0
      %v521 = vadd.f32 %v519, %v520
      %v522 = vrot.slane %v521, 4
      %v523 = vadd.f32 %v521, %v522
      %v524 = vrot.slane %v523, 2
      %v525 = vadd.f32 %v523, %v524
      %v526 = vrot.slane %v525, 1
      %v527 = vadd.f32 %v525, %v526
      %529 = vrot.lane.b32.xlu0 %v527, 32
      %v530 = vpop.permute.xlu0 %529
      %v532 = vsel %vm477, %v498, %v530
      %vm533 = vcmask 516096
      %534 = vst.msk [vmem:[%s314] sm:$0x1] %vm533, %v532
      %s535 = smul.u32 %s20, 16
      %s536 = sadd.s32 %s535, %s21
      %p537 = scmp.lt.s32.totalorder %s536, 15
      %s538 = scalar_select %p537, %s536, 15
      %s539 = scalar_lea.vmem %s5, %s538
      // Predicated region
      $region41: #{boundary_transformer_block_forward.9} parent=39 // pred_check
        %p540 = pneg %p174
      $region42: #{boundary_transformer_block_forward.9} parent=39 // pred_check_branch
        %542 = sbr.rel (%p540) target = $region44
      $region43: #{boundary_transformer_block_forward.9} parent=39 // pred_region
        %s543 = smul.u32 %s20, 16
        %s544 = sadd.s32 %s543, %s21
      $region44: #{boundary_transformer_block_forward.9} parent=39 // pred_fallthru
        _
    $region40: #{boundary_transformer_block_forward.9} parent=5 // pred_fallthru
      _
    %p545 = scmp.le.s32.totalorder 2, %s11
    // Predicated region
    $region45: #{boundary_transformer_block_forward.9} parent=5 // pred_check
      %p546 = pneg %p545
    $region46: #{boundary_transformer_block_forward.9} parent=5 // pred_check_branch
      %548 = sbr.rel (%p546) target = $region48
    $region47: #{boundary_transformer_block_forward.9} parent=5 // pred_region
      %s549 = ssub.s32 %s11, 2
      // Predicated region
      $region49: #{boundary_transformer_block_forward.9} parent=47 // pred_check
        %p550 = pneg %p180
      $region50: #{boundary_transformer_block_forward.9} parent=47 // pred_check_branch
        %552 = sbr.rel (%p550) target = $region52
      $region51: #{boundary_transformer_block_forward.9} parent=47 // pred_region
        %s553 = smul.u32 %s22, 16
        %s554 = sadd.s32 %s553, %s23
        %p555 = scmp.lt.s32.totalorder %s554, 15
        %s556 = scalar_select %p555, %s554, 15
        %s557 = scalar_lea.vmem %s5, %s556
      $region52: #{boundary_transformer_block_forward.9} parent=47 // pred_fallthru
        _
    $region48: #{boundary_transformer_block_forward.9} parent=5 // pred_fallthru
      _
  $region6: #{boundary_transformer_block_forward.9} parent=0 // loop_footer
    %s15 = sadd.s32 1, %s11
  $region7: #{boundary_transformer_block_forward.9} parent=0 // loop_footer_branch
    %10 = sbr.rel target = $region3
  $region8: #{boundary_transformer_block_forward.9} parent=0 // loop_exit
    _

// kernel: boundary_transformer_block_forward.10
$region0: #{boundary_transformer_block_forward.10}
  #allocation0 [shape = 'u32[]', space=smem, size = 0x4, offset = 0x4, fixed_abs, tag = 'smem constant byte address 0x4 - core index']
  #allocation1 [shape = 'u32[144,128]{1,0:T(1,128)}', space=vmem, size = 0x12000, scoped, tag = 'internal scratch']
  %s0 = inlined_call_operand.vmem [shape: bf16[16,64,32], index: 0, kind: input, shape index: {}]
  %s1 = inlined_call_operand.vmem [shape: bf16[16,64,8], index: 1, kind: input, shape index: {}]
  %s2 = inlined_call_operand.vmem [shape: f32[64,32], index: 2, kind: input, shape index: {}]
  %s3 = inlined_call_operand.vmem [shape: f32[8,32], index: 3, kind: input, shape index: {}]
  %s4 = inlined_call_operand.vmem [shape: f32[1,32], index: 4, kind: input, shape index: {}]
  %s5 = inlined_call_operand.vmem [shape: f32[1,32], index: 5, kind: input, shape index: {}]
  %s6 = inlined_call_operand.vmem [shape: f32[1,32], index: 6, kind: input, shape index: {}]
  %s7 = inlined_call_operand.vmem [shape: f32[32,4], index: 7, kind: input, shape index: {}]
  %s8 = inlined_call_operand.vmem [shape: f32[1,4], index: 8, kind: input, shape index: {}]
  %s9 = inlined_call_operand.vmem [shape: f32[16,1,8], index: 9, kind: output, shape index: {}]
  %s10 = sld [smem:[#allocation0]]
  $region69: #{boundary_transformer_block_forward.10} parent=0
    _
  %s12 = ssub.s32 1, %s10
  %s13 = scalar_select 0, %s12, %s10
  loop: start=0, step=1, limit=18
  $region2: #{boundary_transformer_block_forward.10} parent=0 // loop_pre_header
    _
  $region3: #{boundary_transformer_block_forward.10} parent=0 // loop_header
    %s15 = sphi 0, %s19
    %p16 = scmp.ge.s32.totalorder %s15, 18
    %s22 = sphi 0, %s34
    %s23 = sphi 0, %s30
    %s24 = sphi 0, %s22
    %s25 = sphi 0, %s23
    %s26 = sphi 0, %s24
    %s27 = sphi 0, %s25
    %s39 = sphi 0, %s41
    %s42 = sphi 0, %s39
    %s43 = sphi 0, %s42
    %s59 = sphi 0, %s43
    %s67 = sphi 0, %s69
    %s70 = sphi 0, %s67
    %s71 = sphi 0, %s70
    %s87 = sphi 0, %s71
    %s93 = sphi 0, %s95
    %s96 = sphi 0, %s93
    %s97 = sphi 0, %s96
    %s113 = sphi 0, %s97
    %s117 = sphi 0, %s117
    %s119 = sphi 0, %s117
    %s120 = sphi 0, %s119
    %s134 = sphi 0, %s120
    %s138 = sphi 0, %s138
    %s140 = sphi 0, %s138
    %s141 = sphi 0, %s140
    %s155 = sphi 0, %s141
    %s159 = sphi 0, %s159
    %s161 = sphi 0, %s159
    %s162 = sphi 0, %s161
    %s176 = sphi 0, %s162
    %s180 = sphi 0, %s180
    %s182 = sphi 0, %s180
    %s183 = sphi 0, %s182
    %s197 = sphi 0, %s183
    %s201 = sphi 0, %s201
    %s203 = sphi 0, %s201
    %s204 = sphi 0, %s203
    %s218 = sphi 0, %s204
    %s222 = sphi 0, %s222
    %s224 = sphi 0, %s222
    %s225 = sphi 0, %s224
    %s239 = sphi 0, %s225
    %s249 = sphi 0, %s251
    %s252 = sphi 0, %s249
    %s253 = sphi 0, %s252
    %s269 = sphi 0, %s253
  $region4: #{boundary_transformer_block_forward.10} parent=0 // loop_header_branch
    %18 = sbr.rel (%p16) target = $region8
  $region5: #{boundary_transformer_block_forward.10} parent=0 // loop_body
    %s20 = ssub.s32 %s15, 1
    %s21 = ssub.s32 %s15, 2
    %s28 = sadd.s32 1, %s23
    %p29 = scmp.ge.s32.totalorder %s28, 16
    %s30 = scalar_select %p29, 0, %s28
    %s31 = sadd.s32 1, %s22
    %s32 = scalar_select %p29, %s31, %s22
    %p33 = scmp.ge.s32.totalorder %s32, 1
    %s34 = scalar_select %p33, 0, %s32
    %s35 = ssub.s32 %s23, %s30
    %s36 = ssub.s32 %s22, %s34
    %s37 = sor.u32 %s35, %s36
    %p38 = scmp.eq.s32.totalorder %s37, 0
    %s40 = sadd.s32 %s39, 1
    %s41 = scalar_select %p38, %s39, %s40
    %p44 = pneg %p38
    %p45 = scmp.eq.s32.totalorder %s15, 15
    %p46 = por %p44, %p45
    %p47 = scmp.ne.s32.totalorder %s39, %s42
    %p48 = scmp.eq.s32.totalorder %s15, 0
    %p49 = por %p47, %p48
    %p50 = scmp.ne.s32.totalorder %s39, %s42
    %p51 = scmp.eq.s32.totalorder %s20, 15
    %p52 = por %p50, %p51
    %p53 = scmp.ne.s32.totalorder %s42, %s43
    %p54 = scmp.eq.s32.totalorder %s20, 0
    %p55 = por %p53, %p54
    %p56 = scmp.ne.s32.totalorder %s42, %s43
    %p57 = scmp.eq.s32.totalorder %s21, 15
    %p58 = por %p56, %p57
    %p60 = scmp.ne.s32.totalorder %s43, %s59
    %p61 = scmp.eq.s32.totalorder %s21, 0
    %p62 = por %p60, %p61
    %s63 = ssub.s32 %s23, %s30
    %s64 = ssub.s32 %s22, %s34
    %s65 = sor.u32 %s63, %s64
    %p66 = scmp.eq.s32.totalorder %s65, 0
    %s68 = sadd.s32 %s67, 1
    %s69 = scalar_select %p66, %s67, %s68
    %p72 = pneg %p66
    %p73 = scmp.eq.s32.totalorder %s15, 15
    %p74 = por %p72, %p73
    %p75 = scmp.ne.s32.totalorder %s67, %s70
    %p76 = scmp.eq.s32.totalorder %s15, 0
    %p77 = por %p75, %p76
    %p78 = scmp.ne.s32.totalorder %s67, %s70
    %p79 = scmp.eq.s32.totalorder %s20, 15
    %p80 = por %p78, %p79
    %p81 = scmp.ne.s32.totalorder %s70, %s71
    %p82 = scmp.eq.s32.totalorder %s20, 0
    %p83 = por %p81, %p82
    %p84 = scmp.ne.s32.totalorder %s70, %s71
    %p85 = scmp.eq.s32.totalorder %s21, 15
    %p86 = por %p84, %p85
    %p88 = scmp.ne.s32.totalorder %s71, %s87
    %p89 = scmp.eq.s32.totalorder %s21, 0
    %p90 = por %p88, %p89
    %s91 = ssub.s32 %s22, %s34
    %p92 = scmp.eq.s32.totalorder %s91, 0
    %s94 = sadd.s32 %s93, 1
    %s95 = scalar_select %p92, %s93, %s94
    %p98 = pneg %p92
    %p99 = scmp.eq.s32.totalorder %s15, 15
    %p100 = por %p98, %p99
    %p101 = scmp.ne.s32.totalorder %s93, %s96
    %p102 = scmp.eq.s32.totalorder %s15, 0
    %p103 = por %p101, %p102
    %p104 = scmp.ne.s32.totalorder %s93, %s96
    %p105 = scmp.eq.s32.totalorder %s20, 15
    %p106 = por %p104, %p105
    %p107 = scmp.ne.s32.totalorder %s96, %s97
    %p108 = scmp.eq.s32.totalorder %s20, 0
    %p109 = por %p107, %p108
    %p110 = scmp.ne.s32.totalorder %s96, %s97
    %p111 = scmp.eq.s32.totalorder %s21, 15
    %p112 = por %p110, %p111
    %p114 = scmp.ne.s32.totalorder %s97, %s113
    %p115 = scmp.eq.s32.totalorder %s21, 0
    %p116 = por %p114, %p115
    %s118 = sadd.s32 %s117, 1
    %p121 = scmp.eq.s32.totalorder %s15, 15
    %p122 = scmp.ne.s32.totalorder %s117, %s119
    %p123 = scmp.eq.s32.totalorder %s15, 0
    %p124 = por %p122, %p123
    %p125 = scmp.ne.s32.totalorder %s117, %s119
    %p126 = scmp.eq.s32.totalorder %s20, 15
    %p127 = por %p125, %p126
    %p128 = scmp.ne.s32.totalorder %s119, %s120
    %p129 = scmp.eq.s32.totalorder %s20, 0
    %p130 = por %p128, %p129
    %p131 = scmp.ne.s32.totalorder %s119, %s120
    %p132 = scmp.eq.s32.totalorder %s21, 15
    %p133 = por %p131, %p132
    %p135 = scmp.ne.s32.totalorder %s120, %s134
    %p136 = scmp.eq.s32.totalorder %s21, 0
    %p137 = por %p135, %p136
    %s139 = sadd.s32 %s138, 1
    %p142 = scmp.eq.s32.totalorder %s15, 15
    %p143 = scmp.ne.s32.totalorder %s138, %s140
    %p144 = scmp.eq.s32.totalorder %s15, 0
    %p145 = por %p143, %p144
    %p146 = scmp.ne.s32.totalorder %s138, %s140
    %p147 = scmp.eq.s32.totalorder %s20, 15
    %p148 = por %p146, %p147
    %p149 = scmp.ne.s32.totalorder %s140, %s141
    %p150 = scmp.eq.s32.totalorder %s20, 0
    %p151 = por %p149, %p150
    %p152 = scmp.ne.s32.totalorder %s140, %s141
    %p153 = scmp.eq.s32.totalorder %s21, 15
    %p154 = por %p152, %p153
    %p156 = scmp.ne.s32.totalorder %s141, %s155
    %p157 = scmp.eq.s32.totalorder %s21, 0
    %p158 = por %p156, %p157
    %s160 = sadd.s32 %s159, 1
    %p163 = scmp.eq.s32.totalorder %s15, 15
    %p164 = scmp.ne.s32.totalorder %s159, %s161
    %p165 = scmp.eq.s32.totalorder %s15, 0
    %p166 = por %p164, %p165
    %p167 = scmp.ne.s32.totalorder %s159, %s161
    %p168 = scmp.eq.s32.totalorder %s20, 15
    %p169 = por %p167, %p168
    %p170 = scmp.ne.s32.totalorder %s161, %s162
    %p171 = scmp.eq.s32.totalorder %s20, 0
    %p172 = por %p170, %p171
    %p173 = scmp.ne.s32.totalorder %s161, %s162
    %p174 = scmp.eq.s32.totalorder %s21, 15
    %p175 = por %p173, %p174
    %p177 = scmp.ne.s32.totalorder %s162, %s176
    %p178 = scmp.eq.s32.totalorder %s21, 0
    %p179 = por %p177, %p178
    %s181 = sadd.s32 %s180, 1
    %p184 = scmp.eq.s32.totalorder %s15, 15
    %p185 = scmp.ne.s32.totalorder %s180, %s182
    %p186 = scmp.eq.s32.totalorder %s15, 0
    %p187 = por %p185, %p186
    %p188 = scmp.ne.s32.totalorder %s180, %s182
    %p189 = scmp.eq.s32.totalorder %s20, 15
    %p190 = por %p188, %p189
    %p191 = scmp.ne.s32.totalorder %s182, %s183
    %p192 = scmp.eq.s32.totalorder %s20, 0
    %p193 = por %p191, %p192
    %p194 = scmp.ne.s32.totalorder %s182, %s183
    %p195 = scmp.eq.s32.totalorder %s21, 15
    %p196 = por %p194, %p195
    %p198 = scmp.ne.s32.totalorder %s183, %s197
    %p199 = scmp.eq.s32.totalorder %s21, 0
    %p200 = por %p198, %p199
    %s202 = sadd.s32 %s201, 1
    %p205 = scmp.eq.s32.totalorder %s15, 15
    %p206 = scmp.ne.s32.totalorder %s201, %s203
    %p207 = scmp.eq.s32.totalorder %s15, 0
    %p208 = por %p206, %p207
    %p209 = scmp.ne.s32.totalorder %s201, %s203
    %p210 = scmp.eq.s32.totalorder %s20, 15
    %p211 = por %p209, %p210
    %p212 = scmp.ne.s32.totalorder %s203, %s204
    %p213 = scmp.eq.s32.totalorder %s20, 0
    %p214 = por %p212, %p213
    %p215 = scmp.ne.s32.totalorder %s203, %s204
    %p216 = scmp.eq.s32.totalorder %s21, 15
    %p217 = por %p215, %p216
    %p219 = scmp.ne.s32.totalorder %s204, %s218
    %p220 = scmp.eq.s32.totalorder %s21, 0
    %p221 = por %p219, %p220
    %s223 = sadd.s32 %s222, 1
    %p226 = scmp.eq.s32.totalorder %s15, 15
    %p227 = scmp.ne.s32.totalorder %s222, %s224
    %p228 = scmp.eq.s32.totalorder %s15, 0
    %p229 = por %p227, %p228
    %p230 = scmp.ne.s32.totalorder %s222, %s224
    %p231 = scmp.eq.s32.totalorder %s20, 15
    %p232 = por %p230, %p231
    %p233 = scmp.ne.s32.totalorder %s224, %s225
    %p234 = scmp.eq.s32.totalorder %s20, 0
    %p235 = por %p233, %p234
    %p236 = scmp.ne.s32.totalorder %s224, %s225
    %p237 = scmp.eq.s32.totalorder %s21, 15
    %p238 = por %p236, %p237
    %p240 = scmp.ne.s32.totalorder %s225, %s239
    %p241 = scmp.eq.s32.totalorder %s21, 0
    %p242 = por %p240, %p241
    %s243 = smul.u32 %s22, 16
    %s244 = sadd.s32 %s243, %s23
    %s245 = smul.u32 %s34, 16
    %s246 = sadd.s32 %s245, %s30
    %s247 = ssub.s32 %s244, %s246
    %p248 = scmp.eq.s32.totalorder %s247, 0
    %s250 = sadd.s32 %s249, 1
    %s251 = scalar_select %p248, %s249, %s250
    %p254 = pneg %p248
    %p255 = scmp.eq.s32.totalorder %s15, 15
    %p256 = por %p254, %p255
    %p257 = scmp.ne.s32.totalorder %s249, %s252
    %p258 = scmp.eq.s32.totalorder %s15, 0
    %p259 = por %p257, %p258
    %p260 = scmp.ne.s32.totalorder %s249, %s252
    %p261 = scmp.eq.s32.totalorder %s20, 15
    %p262 = por %p260, %p261
    %p263 = scmp.ne.s32.totalorder %s252, %s253
    %p264 = scmp.eq.s32.totalorder %s20, 0
    %p265 = por %p263, %p264
    %p266 = scmp.ne.s32.totalorder %s252, %s253
    %p267 = scmp.eq.s32.totalorder %s21, 15
    %p268 = por %p266, %p267
    %p270 = scmp.ne.s32.totalorder %s253, %s269
    %p271 = scmp.eq.s32.totalorder %s21, 0
    %p272 = por %p270, %p271
    %p273 = scmp.le.s32.totalorder 1, %s15
    %p274 = scmp.lt.s32.totalorder %s15, 17
    %p275 = pnand %p273, %p274
    %p276 = pneg %p275
    // Predicated region
    $region9: #{boundary_transformer_block_forward.10} parent=5 // pred_check
      _
    $region10: #{boundary_transformer_block_forward.10} parent=5 // pred_check_branch
      %278 = sbr.rel (%p275) target = $region12
    $region11: #{boundary_transformer_block_forward.10} parent=5 // pred_region
      %s279 = ssub.s32 %s15, 1
      // Predicated region
      $region13: #{boundary_transformer_block_forward.10} parent=11 // pred_check
        %p280 = pneg %p109
      $region14: #{boundary_transformer_block_forward.10} parent=11 // pred_check_branch
        %282 = sbr.rel (%p280) target = $region16
      $region15: #{boundary_transformer_block_forward.10} parent=11 // pred_region
        %s283 = smul.u32 8, %s24
        %p284 = scmp.lt.s32.totalorder %s283, 7
        %s285 = scalar_select %p284, %s283, 7
        %s286 = smul.addr %s285, 8
        %s287 = scalar_lea.vmem %s2, %s286
        %s288 = smul.u32 8, %s24
      $region16: #{boundary_transformer_block_forward.10} parent=11 // pred_fallthru
        _
      // Predicated region
      $region17: #{boundary_transformer_block_forward.10} parent=11 // pred_check
        %p289 = pneg %p130
      $region18: #{boundary_transformer_block_forward.10} parent=11 // pred_check_branch
        %291 = sbr.rel (%p289) target = $region20
      $region19: #{boundary_transformer_block_forward.10} parent=11 // pred_region
        _
      $region20: #{boundary_transformer_block_forward.10} parent=11 // pred_fallthru
        _
      // Predicated region
      $region21: #{boundary_transformer_block_forward.10} parent=11 // pred_check
        %p292 = pneg %p151
      $region22: #{boundary_transformer_block_forward.10} parent=11 // pred_check_branch
        %294 = sbr.rel (%p292) target = $region24
      $region23: #{boundary_transformer_block_forward.10} parent=11 // pred_region
        _
      $region24: #{boundary_transformer_block_forward.10} parent=11 // pred_fallthru
        _
      // Predicated region
      $region25: #{boundary_transformer_block_forward.10} parent=11 // pred_check
        %p295 = pneg %p172
      $region26: #{boundary_transformer_block_forward.10} parent=11 // pred_check_branch
        %297 = sbr.rel (%p295) target = $region28
      $region27: #{boundary_transformer_block_forward.10} parent=11 // pred_region
        _
      $region28: #{boundary_transformer_block_forward.10} parent=11 // pred_fallthru
        _
      // Predicated region
      $region29: #{boundary_transformer_block_forward.10} parent=11 // pred_check
        %p298 = pneg %p193
      $region30: #{boundary_transformer_block_forward.10} parent=11 // pred_check_branch
        %300 = sbr.rel (%p298) target = $region32
      $region31: #{boundary_transformer_block_forward.10} parent=11 // pred_region
        _
      $region32: #{boundary_transformer_block_forward.10} parent=11 // pred_fallthru
        _
      // Predicated region
      $region33: #{boundary_transformer_block_forward.10} parent=11 // pred_check
        %p301 = pneg %p214
      $region34: #{boundary_transformer_block_forward.10} parent=11 // pred_check_branch
        %303 = sbr.rel (%p301) target = $region36
      $region35: #{boundary_transformer_block_forward.10} parent=11 // pred_region
        _
      $region36: #{boundary_transformer_block_forward.10} parent=11 // pred_fallthru
        _
      // Predicated region
      $region37: #{boundary_transformer_block_forward.10} parent=11 // pred_check
        %p304 = pneg %p235
      $region38: #{boundary_transformer_block_forward.10} parent=11 // pred_check_branch
        %306 = sbr.rel (%p304) target = $region40
      $region39: #{boundary_transformer_block_forward.10} parent=11 // pred_region
        _
      $region40: #{boundary_transformer_block_forward.10} parent=11 // pred_fallthru
        _
    $region12: #{boundary_transformer_block_forward.10} parent=5 // pred_fallthru
      _
    %p307 = scmp.lt.s32.totalorder %s15, 16
    // Predicated region
    $region41: #{boundary_transformer_block_forward.10} parent=5 // pred_check
      %p308 = pneg %p307
    $region42: #{boundary_transformer_block_forward.10} parent=5 // pred_check_branch
      %310 = sbr.rel (%p308) target = $region44
    $region43: #{boundary_transformer_block_forward.10} parent=5 // pred_region
      // Predicated region
      $region45: #{boundary_transformer_block_forward.10} parent=43 // pred_check
        %p311 = pneg %p49
      $region46: #{boundary_transformer_block_forward.10} parent=43 // pred_check_branch
        %313 = sbr.rel (%p311) target = $region48
      $region47: #{boundary_transformer_block_forward.10} parent=43 // pred_region
        %s314 = smul.u32 8, %s22
        %p315 = scmp.lt.s32.totalorder %s23, 15
        %s316 = scalar_select %p315, %s23, 15
        %p317 = scmp.lt.s32.totalorder %s314, 7
        %s318 = scalar_select %p317, %s314, 7
        %s319 = smul.addr %s316, 8
        %s320 = sadd.s32 %s318, %s319
        %s321 = smul.addr %s320, 4
        %s322 = scalar_lea.vmem %s0, %s321
        %s323 = smul.u32 8, %s22
      $region48: #{boundary_transformer_block_forward.10} parent=43 // pred_fallthru
        _
      // Predicated region
      $region49: #{boundary_transformer_block_forward.10} parent=43 // pred_check
        %p324 = pneg %p77
      $region50: #{boundary_transformer_block_forward.10} parent=43 // pred_check_branch
        %326 = sbr.rel (%p324) target = $region52
      $region51: #{boundary_transformer_block_forward.10} parent=43 // pred_region
        %s327 = smul.u32 8, %s22
        %p328 = scmp.lt.s32.totalorder %s23, 15
        %s329 = scalar_select %p328, %s23, 15
        %p330 = scmp.lt.s32.totalorder %s327, 7
        %s331 = scalar_select %p330, %s327, 7
        %s332 = smul.addr %s329, 8
        %s333 = sadd.s32 %s331, %s332
        %s334 = smul.addr %s333, 4
        %s335 = scalar_lea.vmem %s1, %s334
        %s336 = smul.u32 8, %s22
      $region52: #{boundary_transformer_block_forward.10} parent=43 // pred_fallthru
        _
    $region44: #{boundary_transformer_block_forward.10} parent=5 // pred_fallthru
      _
    %p337 = scmp.le.s32.totalorder 1, %s15
    %p338 = scmp.lt.s32.totalorder %s15, 17
    %p339 = pnand %p337, %p338
    %p340 = pneg %p339
    // Predicated region
    $region53: #{boundary_transformer_block_forward.10} parent=5 // pred_check
      _
    $region54: #{boundary_transformer_block_forward.10} parent=5 // pred_check_branch
      %342 = sbr.rel (%p339) target = $region56
    $region55: #{boundary_transformer_block_forward.10} parent=5 // pred_region
      %s343 = ssub.s32 %s15, 1
      %s344 = smul.u32 8, %s24
      %p345 = scmp.lt.s32.totalorder %s25, 15
      %s346 = scalar_select %p345, %s25, 15
      %p347 = scmp.lt.s32.totalorder %s344, 7
      %s348 = scalar_select %p347, %s344, 7
      %s349 = smul.addr %s346, 8
      %s350 = sadd.s32 %s348, %s349
      %s351 = smul.addr %s350, 4
      %s352 = scalar_lea.vmem %s0, %s351
      %p353 = pneg %p55
      %p354 = pneg %p52
      %s355 = smul.u32 8, %s24
      %p356 = scmp.lt.s32.totalorder %s25, 15
      %s357 = scalar_select %p356, %s25, 15
      %p358 = scmp.lt.s32.totalorder %s355, 7
      %s359 = scalar_select %p358, %s355, 7
      %s360 = smul.addr %s357, 8
      %s361 = sadd.s32 %s359, %s360
      %s362 = smul.addr %s361, 4
      %s363 = scalar_lea.vmem %s1, %s362
      %p364 = pneg %p83
      %p365 = pneg %p80
      %s366 = smul.u32 8, %s24
      %p367 = scmp.lt.s32.totalorder %s366, 7
      %s368 = scalar_select %p367, %s366, 7
      %s369 = smul.addr %s368, 8
      %s370 = scalar_lea.vmem %s2, %s369
      %p371 = pneg %p109
      %p372 = pneg %p106
      %p373 = pneg %p130
      %p374 = pneg %p127
      %p375 = pneg %p151
      %p376 = pneg %p148
      %p377 = pneg %p172
      %p378 = pneg %p169
      %p379 = pneg %p193
      %p380 = pneg %p190
      %p381 = pneg %p214
      %p382 = pneg %p211
      %p383 = pneg %p235
      %p384 = pneg %p232
      %p385 = pneg %p265
      %p386 = pneg %p262
      %s387 = smul.u32 %s24, 16
      %s388 = sadd.s32 %s387, %s25
      %p389 = scmp.lt.s32.totalorder %s388, 15
      %s390 = scalar_select %p389, %s388, 15
      %s391 = scalar_lea.vmem %s9, %s390
      %s392 = smul.u32 8, %s24
      %p393 = scmp.lt.s32.totalorder %s25, 15
      %s394 = scalar_select %p393, %s25, 15
      %p395 = scmp.lt.s32.totalorder %s392, 7
      %s396 = scalar_select %p395, %s392, 7
      %s397 = smul.addr %s394, 8
      %s398 = sadd.s32 %s396, %s397
      %s399 = smul.addr %s398, 4
      %s400 = scalar_lea.vmem %s0, %s399
      %s401 = smul.u32 8, %s24
      %s402 = smul.u32 8, %s24
      %p403 = scmp.lt.s32.totalorder %s25, 15
      %s404 = scalar_select %p403, %s25, 15
      %p405 = scmp.lt.s32.totalorder %s402, 7
      %s406 = scalar_select %p405, %s402, 7
      %s407 = smul.addr %s404, 8
      %s408 = sadd.s32 %s406, %s407
      %s409 = smul.addr %s408, 4
      %s410 = scalar_lea.vmem %s1, %s409
      %s411 = smul.u32 8, %s24
      %s412 = smul.u32 8, %s24
      %p413 = scmp.lt.s32.totalorder %s412, 7
      %s414 = scalar_select %p413, %s412, 7
      %s415 = smul.addr %s414, 8
      %s416 = scalar_lea.vmem %s2, %s415
      %s417 = smul.u32 8, %s24
      %s418 = smul.u32 %s24, 16
      %s419 = sadd.s32 %s418, %s25
      %p420 = scmp.lt.s32.totalorder %s419, 15
      %s421 = scalar_select %p420, %s419, 15
      %s422 = scalar_lea.vmem %s9, %s421
      %s423 = smul.u32 %s24, 16
      %s424 = sadd.s32 %s423, %s25
      %v426 = vld [vmem:[%s410] sm:$0xf]
      %v427 = vld [vmem:[%s410 + $0x4] sm:$0xf]
      %v428 = vld [vmem:[%s410 + $0x8] sm:$0xf]
      %v429 = vld [vmem:[%s410 + $0xc] sm:$0xf]
      %v430 = vld [vmem:[%s410 + $0x10] sm:$0xf]
      %v431 = vld [vmem:[%s410 + $0x14] sm:$0xf]
      %v432 = vld [vmem:[%s410 + $0x18] sm:$0xf]
      %v433 = vld [vmem:[%s410 + $0x1c] sm:$0xf]
      %v434 = vld [vmem:[%s3] sm:$0xff]
      %v435 = vpack.c.bf16 %v434, %v434
      %v436 = vld [vmem:[%s4] sm:$0x1]
      %v438 = vlaneseq
      %v439 = vshrl.u32 %v438, 7
      %v440 = vsub.s32 0, %v439
      %v441 = vrot.slane %v436, %v440
      %v451 = vunpack.c.l.b16 %v426
      %v452 = vunpack.c.l.b16 %v427
      %v453 = vunpack.c.l.b16 %v428
      %v454 = vunpack.c.l.b16 %v429
      %v455 = vunpack.c.l.b16 %v430
      %v456 = vunpack.c.l.b16 %v431
      %v457 = vunpack.c.l.b16 %v432
      %v458 = vunpack.c.l.b16 %v433
      %v459 = vpack.c.b16 %v452, %v451
      %v460 = vpack.c.b16 %v454, %v453
      %v461 = vpack.c.b16 %v456, %v455
      %v462 = vpack.c.b16 %v458, %v457
      %vm463 = vcmask 64512
      %v465 = vsel %vm463, %v459, 0
      %v468 = vsel %vm463, %v460, 0
      %v471 = vsel %vm463, %v461, 0
      %v474 = vsel %vm463, %v462, 0
      %vm476 = vcmask 1043456
      %v478 = vsel %vm476, %v435, 0
      %480 = vmatprep.subr.bf16.mxu0 0
      %481 = vmatpush1.bf16.msra.mxu0 %v478
      %482 = vmatprep.subr.bf16.mxu0 0
      %483 = vmatpush1.bf16.msra.mxu0 0
      %484 = vmatprep.subr.bf16.mxu0 0
      %485 = vmatpush1.bf16.msra.mxu0 0
      %486 = vmatprep.subr.bf16.mxu0 0
      %487 = vmatpush1.bf16.msra.mxu0 0
      %488 = vmatprep.subr.bf16.mxu0 0
      %489 = vmatpush1.bf16.msra.mxu0 0
      %490 = vmatprep.subr.bf16.mxu0 0
      %491 = vmatpush1.bf16.msra.mxu0 0
      %492 = vmatprep.subr.bf16.mxu0 0
      %493 = vmatpush1.bf16.msra.mxu0 0
      %494 = vmatprep.subr.bf16.mxu0 0
      %495 = vmatpush1.bf16.msra.mxu0 0
      %496 = vmatprep.subr.bf16.mxu0 0
      %497 = vmatpush1.bf16.msra.mxu0 0
      %498 = vmatprep.subr.bf16.mxu0 0
      %499 = vmatpush1.bf16.msra.mxu0 0
      %500 = vmatprep.subr.bf16.mxu0 0
      %501 = vmatpush1.bf16.msra.mxu0 0
      %502 = vmatprep.subr.bf16.mxu0 0
      %503 = vmatpush1.bf16.msra.mxu0 0
      %504 = vmatprep.subr.bf16.mxu0 0
      %505 = vmatpush1.bf16.msra.mxu0 0
      %506 = vmatprep.subr.bf16.mxu0 0
      %507 = vmatpush1.bf16.msra.mxu0 0
      %508 = vmatprep.subr.bf16.mxu0 0
      %509 = vmatpush1.bf16.msra.mxu0 0
      %510 = vmatprep.subr.bf16.mxu0 0
      %511 = vmatpush1.bf16.msra.mxu0 0
      %512 = vmatprep.mubr.bf16.mxu0 0
      %513 = vmatmul.mubr.bf16.gmra.mrb[0].mxu0 %v465
      %v514 = vpop.f32.mrb[0].mxu0
      %v515 = vadd.f32 %v441, %v514
      %v516 = vpop.f32.mrb[0].mxu0
      %v517 = vpop.f32.mrb[0].mxu0
      %v518 = vadd.f32 %v441, %v517
      %v519 = vpop.f32.mrb[0].mxu0
      %520 = vmatprep.mubr.bf16.mxu0 0
      %521 = vmatmul.mubr.bf16.gmra.mrb[0].mxu0 %v468
      %v522 = vpop.f32.mrb[0].mxu0
      %v523 = vadd.f32 %v441, %v522
      %v524 = vpop.f32.mrb[0].mxu0
      %v525 = vpop.f32.mrb[0].mxu0
      %v526 = vadd.f32 %v441, %v525
      %v527 = vpop.f32.mrb[0].mxu0
      %528 = vmatprep.mubr.bf16.mxu0 0
      %529 = vmatmul.mubr.bf16.gmra.mrb[0].mxu0 %v471
      %v530 = vpop.f32.mrb[0].mxu0
      %v531 = vadd.f32 %v441, %v530
      %v532 = vpop.f32.mrb[0].mxu0
      %v533 = vpop.f32.mrb[0].mxu0
      %v534 = vadd.f32 %v441, %v533
      %v535 = vpop.f32.mrb[0].mxu0
      %536 = vmatprep.mubr.bf16.mxu0 0
      %537 = vmatmul.mubr.bf16.gmra.mrb[0].mxu0 %v474
      %v538 = vpop.f32.mrb[0].mxu0
      %v539 = vadd.f32 %v441, %v538
      %v540 = vpop.f32.mrb[0].mxu0
      %v541 = vpop.f32.mrb[0].mxu0
      %v542 = vadd.f32 %v441, %v541
      %v543 = vpop.f32.mrb[0].mxu0
      %544 = vdwg.mxu0
      %v545 = vld [vmem:[%s400] sm:$0xf]
      %v546 = vld [vmem:[%s400 + $0x4] sm:$0xf]
      %v547 = vld [vmem:[%s400 + $0x8] sm:$0xf]
      %v548 = vld [vmem:[%s400 + $0xc] sm:$0xf]
      %v549 = vld [vmem:[%s400 + $0x10] sm:$0xf]
      %v550 = vld [vmem:[%s400 + $0x14] sm:$0xf]
      %v551 = vld [vmem:[%s400 + $0x18] sm:$0xf]
      %v552 = vld [vmem:[%s400 + $0x1c] sm:$0xf]
      %v553 = vunpack.c.l.bf16 %v545
      %v554 = vunpack.c.l.bf16 %v546
      %v555 = vunpack.c.l.bf16 %v547
      %v556 = vunpack.c.l.bf16 %v548
      %v557 = vunpack.c.l.bf16 %v549
      %v558 = vunpack.c.l.bf16 %v550
      %v559 = vunpack.c.l.bf16 %v551
      %v560 = vunpack.c.l.bf16 %v552
      %v561 = vld [vmem:[%s416] sm:$0xff]
      %v562 = vld [vmem:[%s416 + $0x8] sm:$0xff]
      %v563 = vld [vmem:[%s416 + $0x10] sm:$0xff]
      %v564 = vld [vmem:[%s416 + $0x18] sm:$0xff]
      %v565 = vld [vmem:[%s416 + $0x20] sm:$0xff]
      %v566 = vld [vmem:[%s416 + $0x28] sm:$0xff]
      %v567 = vld [vmem:[%s416 + $0x30] sm:$0xff]
      %v568 = vld [vmem:[%s416 + $0x38] sm:$0xff]
      %v569 = vsub.f32 %v553, %v561
      %v570 = vsub.f32 %v554, %v562
      %v571 = vsub.f32 %v555, %v563
      %v572 = vsub.f32 %v556, %v564
      %v573 = vsub.f32 %v557, %v565
      %v574 = vsub.f32 %v558, %v566
      %v575 = vsub.f32 %v559, %v567
      %v576 = vsub.f32 %v560, %v568
      %v577 = vadd.f32 %v569, %v515
      %v578 = vadd.f32 %v570, %v518
      %v579 = vadd.f32 %v571, %v523
      %v580 = vadd.f32 %v572, %v526
      %v581 = vadd.f32 %v573, %v531
      %v582 = vadd.f32 %v574, %v534
      %v583 = vadd.f32 %v575, %v539
      %v584 = vadd.f32 %v576, %v542
      %v585 = vld [vmem:[%s5] sm:$0x1]
      %v587 = vlaneseq
      %v588 = vshrl.u32 %v587, 7
      %v589 = vsub.s32 0, %v588
      %v590 = vrot.slane %v585, %v589
      %v592 = vmul.f32 %v577, %v590
      %v593 = vmul.f32 %v578, %v590
      %v594 = vmul.f32 %v579, %v590
      %v595 = vmul.f32 %v580, %v590
      %v596 = vmul.f32 %v581, %v590
      %v597 = vmul.f32 %v582, %v590
      %v598 = vmul.f32 %v583, %v590
      %v599 = vmul.f32 %v584, %v590
      %v600 = vld [vmem:[%s6] sm:$0x1]
      %v602 = vlaneseq
      %v603 = vshrl.u32 %v602, 7
      %v604 = vsub.s32 0, %v603
      %v605 = vrot.slane %v600, %v604
      %v607 = vadd.f32 %v592, %v605
      %v608 = vadd.f32 %v593, %v605
      %v609 = vadd.f32 %v594, %v605
      %v610 = vadd.f32 %v595, %v605
      %v611 = vadd.f32 %v596, %v605
      %v612 = vadd.f32 %v597, %v605
      %v613 = vadd.f32 %v598, %v605
      %v614 = vadd.f32 %v599, %v605
      %v615 = vmax.f32 %v607, 0.0
      %v616 = vmax.f32 %v608, 0.0
      %v617 = vmax.f32 %v609, 0.0
      %v618 = vmax.f32 %v610, 0.0
      %v619 = vmax.f32 %v611, 0.0
      %v620 = vmax.f32 %v612, 0.0
      %v621 = vmax.f32 %v613, 0.0
      %v622 = vmax.f32 %v614, 0.0
      %v623 = vld [vmem:[%s7] sm:$0xff]
      %v624 = vld [vmem:[%s7 + $0x8] sm:$0xff]
      %v625 = vld [vmem:[%s7 + $0x10] sm:$0xff]
      %v626 = vld [vmem:[%s7 + $0x18] sm:$0xff]
      %v627 = vpack.c.bf16 %v616, %v615
      %v628 = vpack.c.bf16 %v618, %v617
      %v629 = vpack.c.bf16 %v620, %v619
      %v630 = vpack.c.bf16 %v622, %v621
      %v631 = vpack.c.bf16 %v624, %v623
      %v632 = vpack.c.bf16 %v626, %v625
      %v633 = vld [vmem:[%s8] sm:$0x1]
      %v635 = vlaneseq
      %v636 = vshrl.u32 %v635, 7
      %v637 = vsub.s32 0, %v636
      %v638 = vrot.slane %v633, %v637
      %vm640 = vcmask 261120
      %v642 = vsel %vm640, %v627, 0
      %v645 = vsel %vm640, %v628, 0
      %v648 = vsel %vm640, %v629, 0
      %v651 = vsel %vm640, %v630, 0
      %653 = vmatprep.subr.bf16.mxu0 0
      %654 = vmatpush1.bf16.msra.mxu0 %v631
      %655 = vmatprep.subr.bf16.mxu0 0
      %656 = vmatpush1.bf16.msra.mxu0 %v632
      %657 = vmatprep.subr.bf16.mxu0 0
      %658 = vmatpush1.bf16.msra.mxu0 0
      %659 = vmatprep.subr.bf16.mxu0 0
      %660 = vmatpush1.bf16.msra.mxu0 0
      %661 = vmatprep.subr.bf16.mxu0 0
      %662 = vmatpush1.bf16.msra.mxu0 0
      %663 = vmatprep.subr.bf16.mxu0 0
      %664 = vmatpush1.bf16.msra.mxu0 0
      %665 = vmatprep.subr.bf16.mxu0 0
      %666 = vmatpush1.bf16.msra.mxu0 0
      %667 = vmatprep.subr.bf16.mxu0 0
      %668 = vmatpush1.bf16.msra.mxu0 0
      %669 = vmatprep.subr.bf16.mxu0 0
      %670 = vmatpush1.bf16.msra.mxu0 0
      %671 = vmatprep.subr.bf16.mxu0 0
      %672 = vmatpush1.bf16.msra.mxu0 0
      %673 = vmatprep.subr.bf16.mxu0 0
      %674 = vmatpush1.bf16.msra.mxu0 0
      %675 = vmatprep.subr.bf16.mxu0 0
      %676 = vmatpush1.bf16.msra.mxu0 0
      %677 = vmatprep.subr.bf16.mxu0 0
      %678 = vmatpush1.bf16.msra.mxu0 0
      %679 = vmatprep.subr.bf16.mxu0 0
      %680 = vmatpush1.bf16.msra.mxu0 0
      %681 = vmatprep.subr.bf16.mxu0 0
      %682 = vmatpush1.bf16.msra.mxu0 0
      %683 = vmatprep.subr.bf16.mxu0 0
      %684 = vmatpush1.bf16.msra.mxu0 0
      %685 = vmatprep.mubr.bf16.mxu0 0
      %686 = vmatmul.mubr.bf16.gmra.mrb[0].mxu0 %v642
      %v687 = vpop.f32.mrb[0].mxu0
      %v688 = vadd.f32 %v638, %v687
      %v689 = vpop.f32.mrb[0].mxu0
      %v690 = vpop.f32.mrb[0].mxu0
      %v691 = vadd.f32 %v638, %v690
      %v692 = vpop.f32.mrb[0].mxu0
      %693 = vmatprep.mubr.bf16.mxu0 0
      %694 = vmatmul.mubr.bf16.gmra.mrb[0].mxu0 %v645
      %v695 = vpop.f32.mrb[0].mxu0
      %v696 = vadd.f32 %v638, %v695
      %v697 = vpop.f32.mrb[0].mxu0
      %v698 = vpop.f32.mrb[0].mxu0
      %v699 = vadd.f32 %v638, %v698
      %v700 = vpop.f32.mrb[0].mxu0
      %701 = vmatprep.mubr.bf16.mxu0 0
      %702 = vmatmul.mubr.bf16.gmra.mrb[0].mxu0 %v648
      %v703 = vpop.f32.mrb[0].mxu0
      %v704 = vadd.f32 %v638, %v703
      %v705 = vpop.f32.mrb[0].mxu0
      %v706 = vpop.f32.mrb[0].mxu0
      %v707 = vadd.f32 %v638, %v706
      %v708 = vpop.f32.mrb[0].mxu0
      %709 = vmatprep.mubr.bf16.mxu0 0
      %710 = vmatmul.mubr.bf16.gmra.mrb[0].mxu0 %v651
      %v711 = vpop.f32.mrb[0].mxu0
      %v712 = vadd.f32 %v638, %v711
      %v713 = vpop.f32.mrb[0].mxu0
      %v714 = vpop.f32.mrb[0].mxu0
      %v715 = vadd.f32 %v638, %v714
      %v716 = vpop.f32.mrb[0].mxu0
      %717 = vdwg.mxu0
      %vm718 = vcmask 31744
      %v719 = vsel %vm718, %v688, 0.0
      %v720 = vsel %vm718, %v691, 0.0
      %v721 = vadd.f32 %v719, %v720
      %v722 = vsel %vm718, %v696, 0.0
      %v723 = vadd.f32 %v721, %v722
      %v724 = vsel %vm718, %v699, 0.0
      %v725 = vadd.f32 %v723, %v724
      %v726 = vsel %vm718, %v704, 0.0
      %v727 = vadd.f32 %v725, %v726
      %v728 = vsel %vm718, %v707, 0.0
      %v729 = vadd.f32 %v727, %v728
      %v730 = vsel %vm718, %v712, 0.0
      %v731 = vadd.f32 %v729, %v730
      %v732 = vsel %vm718, %v715, 0.0
      %v733 = vadd.f32 %v731, %v732
      %v734 = vrot.slane %v733, 4
      %v735 = vadd.f32 %v733, %v734
      %v736 = vrot.slane %v735, 2
      %v737 = vadd.f32 %v735, %v736
      %v738 = vrot.slane %v737, 1
      %v739 = vadd.f32 %v737, %v738
      %v740 = vmul.f32 %v688, %v688
      %v741 = vmul.f32 %v691, %v691
      %v742 = vmul.f32 %v696, %v696
      %v743 = vmul.f32 %v699, %v699
      %v744 = vmul.f32 %v704, %v704
      %v745 = vmul.f32 %v707, %v707
      %v746 = vmul.f32 %v712, %v712
      %v747 = vmul.f32 %v715, %v715
      %v748 = vsel %vm718, %v740, 0.0
      %v749 = vsel %vm718, %v741, 0.0
      %v750 = vadd.f32 %v748, %v749
      %v751 = vsel %vm718, %v742, 0.0
      %v752 = vadd.f32 %v750, %v751
      %v753 = vsel %vm718, %v743, 0.0
      %v754 = vadd.f32 %v752, %v753
      %v755 = vsel %vm718, %v744, 0.0
      %v756 = vadd.f32 %v754, %v755
      %v757 = vsel %vm718, %v745, 0.0
      %v758 = vadd.f32 %v756, %v757
      %v759 = vsel %vm718, %v746, 0.0
      %v760 = vadd.f32 %v758, %v759
      %v761 = vsel %vm718, %v747, 0.0
      %v762 = vadd.f32 %v760, %v761
      %v763 = vrot.slane %v762, 4
      %v764 = vadd.f32 %v762, %v763
      %v765 = vrot.slane %v764, 2
      %v766 = vadd.f32 %v764, %v765
      %v767 = vrot.slane %v766, 1
      %v768 = vadd.f32 %v766, %v767
      %770 = vrot.lane.b32.xlu0 %v768, 4
      %v771 = vpop.permute.xlu0 %770
      %v773 = vsel %vm718, %v739, %v771
      %vm774 = vcmask 57344
      %775 = vst.msk [vmem:[%s422] sm:$0x1] %vm774, %v773
      %s776 = smul.u32 %s24, 16
      %s777 = sadd.s32 %s776, %s25
      %p778 = scmp.lt.s32.totalorder %s777, 15
      %s779 = scalar_select %p778, %s777, 15
      %s780 = scalar_lea.vmem %s9, %s779
      // Predicated region
      $region57: #{boundary_transformer_block_forward.10} parent=55 // pred_check
        %p781 = pneg %p262
      $region58: #{boundary_transformer_block_forward.10} parent=55 // pred_check_branch
        %783 = sbr.rel (%p781) target = $region60
      $region59: #{boundary_transformer_block_forward.10} parent=55 // pred_region
        %s784 = smul.u32 %s24, 16
        %s785 = sadd.s32 %s784, %s25
      $region60: #{boundary_transformer_block_forward.10} parent=55 // pred_fallthru
        _
    $region56: #{boundary_transformer_block_forward.10} parent=5 // pred_fallthru
      _
    %p786 = scmp.le.s32.totalorder 2, %s15
    // Predicated region
    $region61: #{boundary_transformer_block_forward.10} parent=5 // pred_check
      %p787 = pneg %p786
    $region62: #{boundary_transformer_block_forward.10} parent=5 // pred_check_branch
      %789 = sbr.rel (%p787) target = $region64
    $region63: #{boundary_transformer_block_forward.10} parent=5 // pred_region
      %s790 = ssub.s32 %s15, 2
      // Predicated region
      $region65: #{boundary_transformer_block_forward.10} parent=63 // pred_check
        %p791 = pneg %p268
      $region66: #{boundary_transformer_block_forward.10} parent=63 // pred_check_branch
        %793 = sbr.rel (%p791) target = $region68
      $region67: #{boundary_transformer_block_forward.10} parent=63 // pred_region
        %s794 = smul.u32 %s26, 16
        %s795 = sadd.s32 %s794, %s27
        %p796 = scmp.lt.s32.totalorder %s795, 15
        %s797 = scalar_select %p796, %s795, 15
        %s798 = scalar_lea.vmem %s9, %s797
      $region68: #{boundary_transformer_block_forward.10} parent=63 // pred_fallthru
        _
    $region64: #{boundary_transformer_block_forward.10} parent=5 // pred_fallthru
      _
  $region6: #{boundary_transformer_block_forward.10} parent=0 // loop_footer
    %s19 = sadd.s32 1, %s15
  $region7: #{boundary_transformer_block_forward.10} parent=0 // loop_footer_branch
    %14 = sbr.rel target = $region3
  $region8: #{boundary_transformer_block_forward.10} parent=0 // loop_exit
    _

// kernel: boundary_transformer_block_forward.13
$region0: #{boundary_transformer_block_forward.13}
  #allocation0 [shape = 'u32[]', space=smem, size = 0x4, offset = 0x4, fixed_abs, tag = 'smem constant byte address 0x4 - core index']
  #allocation1 [shape = 'u32[144,128]{1,0:T(1,128)}', space=vmem, size = 0x12000, scoped, tag = 'internal scratch']
  %s0 = inlined_call_operand.vmem [shape: f32[64,32], index: 0, kind: input, shape index: {}]
  %s1 = inlined_call_operand.vmem [shape: f32[1,32], index: 1, kind: input, shape index: {}]
  %s2 = inlined_call_operand.vmem [shape: f32[1,32], index: 2, kind: input, shape index: {}]
  %s3 = inlined_call_operand.vmem [shape: f32[32,32], index: 3, kind: input, shape index: {}]
  %s4 = inlined_call_operand.vmem [shape: f32[1,32], index: 4, kind: input, shape index: {}]
  %s5 = inlined_call_operand.vmem [shape: f32[1,32], index: 5, kind: input, shape index: {}]
  %s6 = inlined_call_operand.vmem [shape: f32[64,32], index: 6, kind: input, shape index: {}]
  %s7 = inlined_call_operand.vmem [shape: f32[64,32], index: 7, kind: output, shape index: {}]
  %s8 = sld [smem:[#allocation0]]
  $region38: #{boundary_transformer_block_forward.13} parent=0
    _
  %s10 = ssub.s32 1, %s8
  %s11 = scalar_select 0, %s10, %s8
  // Predicated region
  $region2: #{boundary_transformer_block_forward.13} parent=0 // pred_check
    _
  $region3: #{boundary_transformer_block_forward.13} parent=0 // pred_check_branch
    %13 = sbr.rel (0) target = $region5
  $region4: #{boundary_transformer_block_forward.13} parent=0 // pred_region
    _
  $region5: #{boundary_transformer_block_forward.13} parent=0 // pred_fallthru
    _
  // Predicated region
  $region6: #{boundary_transformer_block_forward.13} parent=0 // pred_check
    _
  $region7: #{boundary_transformer_block_forward.13} parent=0 // pred_check_branch
    %15 = sbr.rel (0) target = $region9
  $region8: #{boundary_transformer_block_forward.13} parent=0 // pred_region
    _
  $region9: #{boundary_transformer_block_forward.13} parent=0 // pred_fallthru
    _
  // Predicated region
  $region10: #{boundary_transformer_block_forward.13} parent=0 // pred_check
    _
  $region11: #{boundary_transformer_block_forward.13} parent=0 // pred_check_branch
    %17 = sbr.rel (0) target = $region13
  $region12: #{boundary_transformer_block_forward.13} parent=0 // pred_region
    _
  $region13: #{boundary_transformer_block_forward.13} parent=0 // pred_fallthru
    _
  // Predicated region
  $region14: #{boundary_transformer_block_forward.13} parent=0 // pred_check
    _
  $region15: #{boundary_transformer_block_forward.13} parent=0 // pred_check_branch
    %19 = sbr.rel (0) target = $region17
  $region16: #{boundary_transformer_block_forward.13} parent=0 // pred_region
    _
  $region17: #{boundary_transformer_block_forward.13} parent=0 // pred_fallthru
    _
  // Predicated region
  $region18: #{boundary_transformer_block_forward.13} parent=0 // pred_check
    _
  $region19: #{boundary_transformer_block_forward.13} parent=0 // pred_check_branch
    %21 = sbr.rel (0) target = $region21
  $region20: #{boundary_transformer_block_forward.13} parent=0 // pred_region
    _
  $region21: #{boundary_transformer_block_forward.13} parent=0 // pred_fallthru
    _
  // Predicated region
  $region22: #{boundary_transformer_block_forward.13} parent=0 // pred_check
    _
  $region23: #{boundary_transformer_block_forward.13} parent=0 // pred_check_branch
    %23 = sbr.rel (0) target = $region25
  $region24: #{boundary_transformer_block_forward.13} parent=0 // pred_region
    _
  $region25: #{boundary_transformer_block_forward.13} parent=0 // pred_fallthru
    _
  // Predicated region
  $region26: #{boundary_transformer_block_forward.13} parent=0 // pred_check
    _
  $region27: #{boundary_transformer_block_forward.13} parent=0 // pred_check_branch
    %25 = sbr.rel (0) target = $region29
  $region28: #{boundary_transformer_block_forward.13} parent=0 // pred_region
    _
  $region29: #{boundary_transformer_block_forward.13} parent=0 // pred_fallthru
    _
  %v27 = vld [vmem:[%s0] sm:$0xff]
  %v28 = vld [vmem:[%s0 + $0x8] sm:$0xff]
  %v29 = vld [vmem:[%s0 + $0x10] sm:$0xff]
  %v30 = vld [vmem:[%s0 + $0x18] sm:$0xff]
  %v31 = vld [vmem:[%s0 + $0x20] sm:$0xff]
  %v32 = vld [vmem:[%s0 + $0x28] sm:$0xff]
  %v33 = vld [vmem:[%s0 + $0x30] sm:$0xff]
  %v34 = vld [vmem:[%s0 + $0x38] sm:$0xff]
  %v35 = vld [vmem:[%s1] sm:$0x1]
  %v37 = vlaneseq
  %v38 = vshrl.u32 %v37, 7
  %v39 = vsub.s32 0, %v38
  %v40 = vrot.slane %v35, %v39
  %v42 = vmul.f32 %v27, %v40
  %v43 = vmul.f32 %v28, %v40
  %v44 = vmul.f32 %v29, %v40
  %v45 = vmul.f32 %v30, %v40
  %v46 = vmul.f32 %v31, %v40
  %v47 = vmul.f32 %v32, %v40
  %v48 = vmul.f32 %v33, %v40
  %v49 = vmul.f32 %v34, %v40
  %v50 = vld [vmem:[%s2] sm:$0x1]
  %v52 = vlaneseq
  %v53 = vshrl.u32 %v52, 7
  %v54 = vsub.s32 0, %v53
  %v55 = vrot.slane %v50, %v54
  %v57 = vadd.f32 %v42, %v55
  %v58 = vadd.f32 %v43, %v55
  %v59 = vadd.f32 %v44, %v55
  %v60 = vadd.f32 %v45, %v55
  %v61 = vadd.f32 %v46, %v55
  %v62 = vadd.f32 %v47, %v55
  %v63 = vadd.f32 %v48, %v55
  %v64 = vadd.f32 %v49, %v55
  %v65 = vmax.f32 %v57, 0.0
  %v66 = vmax.f32 %v58, 0.0
  %v67 = vmax.f32 %v59, 0.0
  %v68 = vmax.f32 %v60, 0.0
  %v69 = vmax.f32 %v61, 0.0
  %v70 = vmax.f32 %v62, 0.0
  %v71 = vmax.f32 %v63, 0.0
  %v72 = vmax.f32 %v64, 0.0
  %v73 = vld [vmem:[%s3] sm:$0xff]
  %v74 = vld [vmem:[%s3 + $0x8] sm:$0xff]
  %v75 = vld [vmem:[%s3 + $0x10] sm:$0xff]
  %v76 = vld [vmem:[%s3 + $0x18] sm:$0xff]
  %v77 = vpack.c.bf16 %v66, %v65
  %v78 = vpack.c.bf16 %v68, %v67
  %v79 = vpack.c.bf16 %v70, %v69
  %v80 = vpack.c.bf16 %v72, %v71
  %v81 = vpack.c.bf16 %v74, %v73
  %v82 = vpack.c.bf16 %v76, %v75
  %vm83 = vcmask 261120
  %v85 = vsel %vm83, %v77, 0
  %v88 = vsel %vm83, %v78, 0
  %v91 = vsel %vm83, %v79, 0
  %v94 = vsel %vm83, %v80, 0
  %96 = vmatprep.subr.bf16.mxu0 0
  %97 = vmatpush1.bf16.msra.mxu0 %v81
  %98 = vmatprep.subr.bf16.mxu0 0
  %99 = vmatpush1.bf16.msra.mxu0 %v82
  %100 = vmatprep.subr.bf16.mxu0 0
  %101 = vmatpush1.bf16.msra.mxu0 0
  %102 = vmatprep.subr.bf16.mxu0 0
  %103 = vmatpush1.bf16.msra.mxu0 0
  %104 = vmatprep.subr.bf16.mxu0 0
  %105 = vmatpush1.bf16.msra.mxu0 0
  %106 = vmatprep.subr.bf16.mxu0 0
  %107 = vmatpush1.bf16.msra.mxu0 0
  %108 = vmatprep.subr.bf16.mxu0 0
  %109 = vmatpush1.bf16.msra.mxu0 0
  %110 = vmatprep.subr.bf16.mxu0 0
  %111 = vmatpush1.bf16.msra.mxu0 0
  %112 = vmatprep.subr.bf16.mxu0 0
  %113 = vmatpush1.bf16.msra.mxu0 0
  %114 = vmatprep.subr.bf16.mxu0 0
  %115 = vmatpush1.bf16.msra.mxu0 0
  %116 = vmatprep.subr.bf16.mxu0 0
  %117 = vmatpush1.bf16.msra.mxu0 0
  %118 = vmatprep.subr.bf16.mxu0 0
  %119 = vmatpush1.bf16.msra.mxu0 0
  %120 = vmatprep.subr.bf16.mxu0 0
  %121 = vmatpush1.bf16.msra.mxu0 0
  %122 = vmatprep.subr.bf16.mxu0 0
  %123 = vmatpush1.bf16.msra.mxu0 0
  %124 = vmatprep.subr.bf16.mxu0 0
  %125 = vmatpush1.bf16.msra.mxu0 0
  %126 = vmatprep.subr.bf16.mxu0 0
  %127 = vmatpush1.bf16.msra.mxu0 0
  %128 = vmatprep.mubr.bf16.mxu0 0
  %129 = vmatmul.mubr.bf16.gmra.mrb[0].mxu0 %v85
  %v130 = vpop.f32.mrb[0].mxu0
  %v131 = vadd.f32 0.0, %v130
  %v132 = vpop.f32.mrb[0].mxu0
  %v133 = vpop.f32.mrb[0].mxu0
  %v134 = vadd.f32 0.0, %v133
  %v135 = vpop.f32.mrb[0].mxu0
  %136 = vmatprep.mubr.bf16.mxu0 0
  %137 = vmatmul.mubr.bf16.gmra.mrb[0].mxu0 %v88
  %v138 = vpop.f32.mrb[0].mxu0
  %v139 = vadd.f32 0.0, %v138
  %v140 = vpop.f32.mrb[0].mxu0
  %v141 = vpop.f32.mrb[0].mxu0
  %v142 = vadd.f32 0.0, %v141
  %v143 = vpop.f32.mrb[0].mxu0
  %144 = vmatprep.mubr.bf16.mxu0 0
  %145 = vmatmul.mubr.bf16.gmra.mrb[0].mxu0 %v91
  %v146 = vpop.f32.mrb[0].mxu0
  %v147 = vadd.f32 0.0, %v146
  %v148 = vpop.f32.mrb[0].mxu0
  %v149 = vpop.f32.mrb[0].mxu0
  %v150 = vadd.f32 0.0, %v149
  %v151 = vpop.f32.mrb[0].mxu0
  %152 = vmatprep.mubr.bf16.mxu0 0
  %153 = vmatmul.mubr.bf16.gmra.mrb[0].mxu0 %v94
  %v154 = vpop.f32.mrb[0].mxu0
  %v155 = vadd.f32 0.0, %v154
  %v156 = vpop.f32.mrb[0].mxu0
  %v157 = vpop.f32.mrb[0].mxu0
  %v158 = vadd.f32 0.0, %v157
  %v159 = vpop.f32.mrb[0].mxu0
  %160 = vdwg.mxu0
  %v161 = vld [vmem:[%s4] sm:$0x1]
  %v163 = vlaneseq
  %v164 = vshrl.u32 %v163, 7
  %v165 = vsub.s32 0, %v164
  %v166 = vrot.slane %v161, %v165
  %v168 = vmul.f32 %v131, %v166
  %v169 = vmul.f32 %v134, %v166
  %v170 = vmul.f32 %v139, %v166
  %v171 = vmul.f32 %v142, %v166
  %v172 = vmul.f32 %v147, %v166
  %v173 = vmul.f32 %v150, %v166
  %v174 = vmul.f32 %v155, %v166
  %v175 = vmul.f32 %v158, %v166
  %v176 = vld [vmem:[%s5] sm:$0x1]
  %v178 = vlaneseq
  %v179 = vshrl.u32 %v178, 7
  %v180 = vsub.s32 0, %v179
  %v181 = vrot.slane %v176, %v180
  %v183 = vadd.f32 %v168, %v181
  %v184 = vadd.f32 %v169, %v181
  %v185 = vadd.f32 %v170, %v181
  %v186 = vadd.f32 %v171, %v181
  %v187 = vadd.f32 %v172, %v181
  %v188 = vadd.f32 %v173, %v181
  %v189 = vadd.f32 %v174, %v181
  %v190 = vadd.f32 %v175, %v181
  %v191 = vld [vmem:[%s6] sm:$0xff]
  %v192 = vld [vmem:[%s6 + $0x8] sm:$0xff]
  %v193 = vld [vmem:[%s6 + $0x10] sm:$0xff]
  %v194 = vld [vmem:[%s6 + $0x18] sm:$0xff]
  %v195 = vld [vmem:[%s6 + $0x20] sm:$0xff]
  %v196 = vld [vmem:[%s6 + $0x28] sm:$0xff]
  %v197 = vld [vmem:[%s6 + $0x30] sm:$0xff]
  %v198 = vld [vmem:[%s6 + $0x38] sm:$0xff]
  %v199 = vadd.f32 %v183, %v191
  %v200 = vadd.f32 %v184, %v192
  %v201 = vadd.f32 %v185, %v193
  %v202 = vadd.f32 %v186, %v194
  %v203 = vadd.f32 %v187, %v195
  %v204 = vadd.f32 %v188, %v196
  %v205 = vadd.f32 %v189, %v197
  %v206 = vadd.f32 %v190, %v198
  %v207 = vmax.f32 %v199, 0.0
  %v208 = vmax.f32 %v200, 0.0
  %v209 = vmax.f32 %v201, 0.0
  %v210 = vmax.f32 %v202, 0.0
  %v211 = vmax.f32 %v203, 0.0
  %v212 = vmax.f32 %v204, 0.0
  %v213 = vmax.f32 %v205, 0.0
  %v214 = vmax.f32 %v206, 0.0
  %215 = vst.msk [vmem:[%s7] sm:$0xff] %vm83, %v207
  %216 = vst.msk [vmem:[%s7 + $0x8] sm:$0xff] %vm83, %v208
  %217 = vst.msk [vmem:[%s7 + $0x10] sm:$0xff] %vm83, %v209
  %218 = vst.msk [vmem:[%s7 + $0x18] sm:$0xff] %vm83, %v210
  %219 = vst.msk [vmem:[%s7 + $0x20] sm:$0xff] %vm83, %v211
  %220 = vst.msk [vmem:[%s7 + $0x28] sm:$0xff] %vm83, %v212
  %221 = vst.msk [vmem:[%s7 + $0x30] sm:$0xff] %vm83, %v213
  %222 = vst.msk [vmem:[%s7 + $0x38] sm:$0xff] %vm83, %v214
  // Predicated region
  $region30: #{boundary_transformer_block_forward.13} parent=0 // pred_check
    _
  $region31: #{boundary_transformer_block_forward.13} parent=0 // pred_check_branch
    %224 = sbr.rel (0) target = $region33
  $region32: #{boundary_transformer_block_forward.13} parent=0 // pred_region
    _
  $region33: #{boundary_transformer_block_forward.13} parent=0 // pred_fallthru
    _
  // Predicated region
  $region34: #{boundary_transformer_block_forward.13} parent=0 // pred_check
    _
  $region35: #{boundary_transformer_block_forward.13} parent=0 // pred_check_branch
    %226 = sbr.rel (0) target = $region37
  $region36: #{boundary_transformer_block_forward.13} parent=0 // pred_region
    _
  $region37: #{boundary_transformer_block_forward.13} parent=0 // pred_fallthru
    _

// kernel: boundary_transformer_block_forward.12
$region0: #{boundary_transformer_block_forward.12}
  #allocation0 [shape = 'u32[]', space=smem, size = 0x4, offset = 0x4, fixed_abs, tag = 'smem constant byte address 0x4 - core index']
  #allocation1 [shape = 'u32[144,128]{1,0:T(1,128)}', space=vmem, size = 0x12000, scoped, tag = 'internal scratch']
  %s0 = inlined_call_operand.vmem [shape: f32[64,32], index: 0, kind: input, shape index: {}]
  %s1 = inlined_call_operand.vmem [shape: f32[1,32], index: 1, kind: input, shape index: {}]
  %s2 = inlined_call_operand.vmem [shape: f32[1,32], index: 2, kind: input, shape index: {}]
  %s3 = inlined_call_operand.vmem [shape: f32[32,32], index: 3, kind: input, shape index: {}]
  %s4 = inlined_call_operand.vmem [shape: f32[1,1,64], index: 4, kind: output, shape index: {}]
  %s5 = sld [smem:[#allocation0]]
  $region26: #{boundary_transformer_block_forward.12} parent=0
    _
  %s7 = ssub.s32 1, %s5
  %s8 = scalar_select 0, %s7, %s5
  // Predicated region
  $region2: #{boundary_transformer_block_forward.12} parent=0 // pred_check
    _
  $region3: #{boundary_transformer_block_forward.12} parent=0 // pred_check_branch
    %10 = sbr.rel (0) target = $region5
  $region4: #{boundary_transformer_block_forward.12} parent=0 // pred_region
    _
  $region5: #{boundary_transformer_block_forward.12} parent=0 // pred_fallthru
    _
  // Predicated region
  $region6: #{boundary_transformer_block_forward.12} parent=0 // pred_check
    _
  $region7: #{boundary_transformer_block_forward.12} parent=0 // pred_check_branch
    %12 = sbr.rel (0) target = $region9
  $region8: #{boundary_transformer_block_forward.12} parent=0 // pred_region
    _
  $region9: #{boundary_transformer_block_forward.12} parent=0 // pred_fallthru
    _
  // Predicated region
  $region10: #{boundary_transformer_block_forward.12} parent=0 // pred_check
    _
  $region11: #{boundary_transformer_block_forward.12} parent=0 // pred_check_branch
    %14 = sbr.rel (0) target = $region13
  $region12: #{boundary_transformer_block_forward.12} parent=0 // pred_region
    _
  $region13: #{boundary_transformer_block_forward.12} parent=0 // pred_fallthru
    _
  // Predicated region
  $region14: #{boundary_transformer_block_forward.12} parent=0 // pred_check
    _
  $region15: #{boundary_transformer_block_forward.12} parent=0 // pred_check_branch
    %16 = sbr.rel (0) target = $region17
  $region16: #{boundary_transformer_block_forward.12} parent=0 // pred_region
    _
  $region17: #{boundary_transformer_block_forward.12} parent=0 // pred_fallthru
    _
  %v18 = vld [vmem:[%s0] sm:$0xff]
  %v19 = vld [vmem:[%s0 + $0x8] sm:$0xff]
  %v20 = vld [vmem:[%s0 + $0x10] sm:$0xff]
  %v21 = vld [vmem:[%s0 + $0x18] sm:$0xff]
  %v22 = vld [vmem:[%s0 + $0x20] sm:$0xff]
  %v23 = vld [vmem:[%s0 + $0x28] sm:$0xff]
  %v24 = vld [vmem:[%s0 + $0x30] sm:$0xff]
  %v25 = vld [vmem:[%s0 + $0x38] sm:$0xff]
  %v26 = vld [vmem:[%s1] sm:$0x1]
  %v28 = vlaneseq
  %v29 = vshrl.u32 %v28, 7
  %v30 = vsub.s32 0, %v29
  %v31 = vrot.slane %v26, %v30
  %v33 = vmul.f32 %v18, %v31
  %v34 = vmul.f32 %v19, %v31
  %v35 = vmul.f32 %v20, %v31
  %v36 = vmul.f32 %v21, %v31
  %v37 = vmul.f32 %v22, %v31
  %v38 = vmul.f32 %v23, %v31
  %v39 = vmul.f32 %v24, %v31
  %v40 = vmul.f32 %v25, %v31
  %v41 = vld [vmem:[%s2] sm:$0x1]
  %v43 = vlaneseq
  %v44 = vshrl.u32 %v43, 7
  %v45 = vsub.s32 0, %v44
  %v46 = vrot.slane %v41, %v45
  %v48 = vadd.f32 %v33, %v46
  %v49 = vadd.f32 %v34, %v46
  %v50 = vadd.f32 %v35, %v46
  %v51 = vadd.f32 %v36, %v46
  %v52 = vadd.f32 %v37, %v46
  %v53 = vadd.f32 %v38, %v46
  %v54 = vadd.f32 %v39, %v46
  %v55 = vadd.f32 %v40, %v46
  %v56 = vmax.f32 %v48, 0.0
  %v57 = vmax.f32 %v49, 0.0
  %v58 = vmax.f32 %v50, 0.0
  %v59 = vmax.f32 %v51, 0.0
  %v60 = vmax.f32 %v52, 0.0
  %v61 = vmax.f32 %v53, 0.0
  %v62 = vmax.f32 %v54, 0.0
  %v63 = vmax.f32 %v55, 0.0
  %v64 = vld [vmem:[%s3] sm:$0xff]
  %v65 = vld [vmem:[%s3 + $0x8] sm:$0xff]
  %v66 = vld [vmem:[%s3 + $0x10] sm:$0xff]
  %v67 = vld [vmem:[%s3 + $0x18] sm:$0xff]
  %v68 = vpack.c.bf16 %v57, %v56
  %v69 = vpack.c.bf16 %v59, %v58
  %v70 = vpack.c.bf16 %v61, %v60
  %v71 = vpack.c.bf16 %v63, %v62
  %v72 = vpack.c.bf16 %v65, %v64
  %v73 = vpack.c.bf16 %v67, %v66
  %vm74 = vcmask 261120
  %v76 = vsel %vm74, %v68, 0
  %v79 = vsel %vm74, %v69, 0
  %v82 = vsel %vm74, %v70, 0
  %v85 = vsel %vm74, %v71, 0
  %87 = vmatprep.subr.bf16.mxu0 0
  %88 = vmatpush1.bf16.msra.mxu0 %v72
  %89 = vmatprep.subr.bf16.mxu0 0
  %90 = vmatpush1.bf16.msra.mxu0 %v73
  %91 = vmatprep.subr.bf16.mxu0 0
  %92 = vmatpush1.bf16.msra.mxu0 0
  %93 = vmatprep.subr.bf16.mxu0 0
  %94 = vmatpush1.bf16.msra.mxu0 0
  %95 = vmatprep.subr.bf16.mxu0 0
  %96 = vmatpush1.bf16.msra.mxu0 0
  %97 = vmatprep.subr.bf16.mxu0 0
  %98 = vmatpush1.bf16.msra.mxu0 0
  %99 = vmatprep.subr.bf16.mxu0 0
  %100 = vmatpush1.bf16.msra.mxu0 0
  %101 = vmatprep.subr.bf16.mxu0 0
  %102 = vmatpush1.bf16.msra.mxu0 0
  %103 = vmatprep.subr.bf16.mxu0 0
  %104 = vmatpush1.bf16.msra.mxu0 0
  %105 = vmatprep.subr.bf16.mxu0 0
  %106 = vmatpush1.bf16.msra.mxu0 0
  %107 = vmatprep.subr.bf16.mxu0 0
  %108 = vmatpush1.bf16.msra.mxu0 0
  %109 = vmatprep.subr.bf16.mxu0 0
  %110 = vmatpush1.bf16.msra.mxu0 0
  %111 = vmatprep.subr.bf16.mxu0 0
  %112 = vmatpush1.bf16.msra.mxu0 0
  %113 = vmatprep.subr.bf16.mxu0 0
  %114 = vmatpush1.bf16.msra.mxu0 0
  %115 = vmatprep.subr.bf16.mxu0 0
  %116 = vmatpush1.bf16.msra.mxu0 0
  %117 = vmatprep.subr.bf16.mxu0 0
  %118 = vmatpush1.bf16.msra.mxu0 0
  %119 = vmatprep.mubr.bf16.mxu0 0
  %120 = vmatmul.mubr.bf16.gmra.mrb[0].mxu0 %v76
  %v121 = vpop.f32.mrb[0].mxu0
  %v122 = vadd.f32 0.0, %v121
  %v123 = vpop.f32.mrb[0].mxu0
  %v124 = vpop.f32.mrb[0].mxu0
  %v125 = vadd.f32 0.0, %v124
  %v126 = vpop.f32.mrb[0].mxu0
  %127 = vmatprep.mubr.bf16.mxu0 0
  %128 = vmatmul.mubr.bf16.gmra.mrb[0].mxu0 %v79
  %v129 = vpop.f32.mrb[0].mxu0
  %v130 = vadd.f32 0.0, %v129
  %v131 = vpop.f32.mrb[0].mxu0
  %v132 = vpop.f32.mrb[0].mxu0
  %v133 = vadd.f32 0.0, %v132
  %v134 = vpop.f32.mrb[0].mxu0
  %135 = vmatprep.mubr.bf16.mxu0 0
  %136 = vmatmul.mubr.bf16.gmra.mrb[0].mxu0 %v82
  %v137 = vpop.f32.mrb[0].mxu0
  %v138 = vadd.f32 0.0, %v137
  %v139 = vpop.f32.mrb[0].mxu0
  %v140 = vpop.f32.mrb[0].mxu0
  %v141 = vadd.f32 0.0, %v140
  %v142 = vpop.f32.mrb[0].mxu0
  %143 = vmatprep.mubr.bf16.mxu0 0
  %144 = vmatmul.mubr.bf16.gmra.mrb[0].mxu0 %v85
  %v145 = vpop.f32.mrb[0].mxu0
  %v146 = vadd.f32 0.0, %v145
  %v147 = vpop.f32.mrb[0].mxu0
  %v148 = vpop.f32.mrb[0].mxu0
  %v149 = vadd.f32 0.0, %v148
  %v150 = vpop.f32.mrb[0].mxu0
  %151 = vdwg.mxu0
  %v152 = vsel %vm74, %v122, 0.0
  %v153 = vsel %vm74, %v125, 0.0
  %v154 = vadd.f32 %v152, %v153
  %v155 = vsel %vm74, %v130, 0.0
  %v156 = vadd.f32 %v154, %v155
  %v157 = vsel %vm74, %v133, 0.0
  %v158 = vadd.f32 %v156, %v157
  %v159 = vsel %vm74, %v138, 0.0
  %v160 = vadd.f32 %v158, %v159
  %v161 = vsel %vm74, %v141, 0.0
  %v162 = vadd.f32 %v160, %v161
  %v163 = vsel %vm74, %v146, 0.0
  %v164 = vadd.f32 %v162, %v163
  %v165 = vsel %vm74, %v149, 0.0
  %v166 = vadd.f32 %v164, %v165
  %v167 = vrot.slane %v166, 4
  %v168 = vadd.f32 %v166, %v167
  %v169 = vrot.slane %v168, 2
  %v170 = vadd.f32 %v168, %v169
  %v171 = vrot.slane %v170, 1
  %v172 = vadd.f32 %v170, %v171
  %v173 = vmul.f32 %v122, %v122
  %v174 = vmul.f32 %v125, %v125
  %v175 = vmul.f32 %v130, %v130
  %v176 = vmul.f32 %v133, %v133
  %v177 = vmul.f32 %v138, %v138
  %v178 = vmul.f32 %v141, %v141
  %v179 = vmul.f32 %v146, %v146
  %v180 = vmul.f32 %v149, %v149
  %v181 = vsel %vm74, %v173, 0.0
  %v182 = vsel %vm74, %v174, 0.0
  %v183 = vadd.f32 %v181, %v182
  %v184 = vsel %vm74, %v175, 0.0
  %v185 = vadd.f32 %v183, %v184
  %v186 = vsel %vm74, %v176, 0.0
  %v187 = vadd.f32 %v185, %v186
  %v188 = vsel %vm74, %v177, 0.0
  %v189 = vadd.f32 %v187, %v188
  %v190 = vsel %vm74, %v178, 0.0
  %v191 = vadd.f32 %v189, %v190
  %v192 = vsel %vm74, %v179, 0.0
  %v193 = vadd.f32 %v191, %v192
  %v194 = vsel %vm74, %v180, 0.0
  %v195 = vadd.f32 %v193, %v194
  %v196 = vrot.slane %v195, 4
  %v197 = vadd.f32 %v195, %v196
  %v198 = vrot.slane %v197, 2
  %v199 = vadd.f32 %v197, %v198
  %v200 = vrot.slane %v199, 1
  %v201 = vadd.f32 %v199, %v200
  %203 = vrot.lane.b32.xlu0 %v201, 32
  %v204 = vpop.permute.xlu0 %203
  %v206 = vsel %vm74, %v172, %v204
  %vm207 = vcmask 516096
  %208 = vst.msk [vmem:[%s4] sm:$0x1] %vm207, %v206
  // Predicated region
  $region18: #{boundary_transformer_block_forward.12} parent=0 // pred_check
    _
  $region19: #{boundary_transformer_block_forward.12} parent=0 // pred_check_branch
    %210 = sbr.rel (0) target = $region21
  $region20: #{boundary_transformer_block_forward.12} parent=0 // pred_region
    _
  $region21: #{boundary_transformer_block_forward.12} parent=0 // pred_fallthru
    _
  // Predicated region
  $region22: #{boundary_transformer_block_forward.12} parent=0 // pred_check
    _
  $region23: #{boundary_transformer_block_forward.12} parent=0 // pred_check_branch
    %212 = sbr.rel (0) target = $region25
  $region24: #{boundary_transformer_block_forward.12} parent=0 // pred_region
    _
  $region25: #{boundary_transformer_block_forward.12} parent=0 // pred_fallthru
    _

// kernel: boundary_transformer_block_forward.11
$region0: #{boundary_transformer_block_forward.11}
  #allocation0 [shape = 'u32[]', space=smem, size = 0x4, offset = 0x4, fixed_abs, tag = 'smem constant byte address 0x4 - core index']
  #allocation1 [shape = 'u32[144,128]{1,0:T(1,128)}', space=vmem, size = 0x12000, scoped, tag = 'internal scratch']
  #allocation2 [shape = 'f32[64,4]{1,0:T(8,128)}', space=vmem, size = 0x8000, scoped, tag = 'scratch operand']
  #allocation3 [shape = 'f32[64,4]{1,0:T(8,128)}', space=vmem, size = 0x8000, scoped, tag = 'scratch operand']
  #allocation4 [shape = 'f32[64,32]{1,0:T(8,128)}', space=vmem, size = 0x8000, scoped, tag = 'scratch operand']
  %s0 = inlined_call_operand.vmem [shape: bf16[16,64,32], index: 0, kind: input, shape index: {}]
  %s1 = inlined_call_operand.vmem [shape: bf16[16,64,32], index: 1, kind: input, shape index: {}]
  %s2 = inlined_call_operand.vmem [shape: bf16[16,64,8], index: 2, kind: input, shape index: {}]
  %s3 = inlined_call_operand.vmem [shape: f32[64,32], index: 3, kind: input, shape index: {}]
  %s4 = inlined_call_operand.vmem [shape: f32[8,32], index: 4, kind: input, shape index: {}]
  %s5 = inlined_call_operand.vmem [shape: f32[1,32], index: 5, kind: input, shape index: {}]
  %s6 = inlined_call_operand.vmem [shape: f32[1,32], index: 6, kind: input, shape index: {}]
  %s7 = inlined_call_operand.vmem [shape: f32[1,32], index: 7, kind: input, shape index: {}]
  %s8 = inlined_call_operand.vmem [shape: f32[32,4], index: 8, kind: input, shape index: {}]
  %s9 = inlined_call_operand.vmem [shape: f32[1,4], index: 9, kind: input, shape index: {}]
  %s10 = inlined_call_operand.vmem [shape: f32[1,4], index: 10, kind: input, shape index: {}]
  %s11 = inlined_call_operand.vmem [shape: f32[1,4], index: 11, kind: input, shape index: {}]
  %s12 = inlined_call_operand.vmem [shape: f32[4,4], index: 12, kind: input, shape index: {}]
  %s13 = inlined_call_operand.vmem [shape: f32[1,4], index: 13, kind: input, shape index: {}]
  %s14 = inlined_call_operand.vmem [shape: f32[64,32], index: 14, kind: output, shape index: {0}]
  %s15 = inlined_call_operand.vmem [shape: f32[1,1,64], index: 15, kind: output, shape index: {1}]
  %16 = xla_tuple %s14, %s15
  %s17 = sld [smem:[#allocation0]]
  $region105: #{boundary_transformer_block_forward.11} parent=0
    _
  %s19 = ssub.s32 1, %s17
  %s20 = scalar_select 0, %s19, %s17
  loop: start=0, step=1, limit=18
  $region2: #{boundary_transformer_block_forward.11} parent=0 // loop_pre_header
    _
  $region3: #{boundary_transformer_block_forward.11} parent=0 // loop_header
    %s22 = sphi 0, %s26
    %p23 = scmp.ge.s32.totalorder %s22, 18
    %s29 = sphi 0, %s41
    %s30 = sphi 0, %s37
    %s31 = sphi 0, %s29
    %s32 = sphi 0, %s30
    %s33 = sphi 0, %s31
    %s34 = sphi 0, %s32
    %s46 = sphi 0, %s48
    %s49 = sphi 0, %s46
    %s50 = sphi 0, %s49
    %s66 = sphi 0, %s50
    %s74 = sphi 0, %s76
    %s77 = sphi 0, %s74
    %s78 = sphi 0, %s77
    %s94 = sphi 0, %s78
    %s102 = sphi 0, %s104
    %s105 = sphi 0, %s102
    %s106 = sphi 0, %s105
    %s122 = sphi 0, %s106
    %s128 = sphi 0, %s130
    %s131 = sphi 0, %s128
    %s132 = sphi 0, %s131
    %s148 = sphi 0, %s132
    %s152 = sphi 0, %s152
    %s154 = sphi 0, %s152
    %s155 = sphi 0, %s154
    %s169 = sphi 0, %s155
    %s173 = sphi 0, %s173
    %s175 = sphi 0, %s173
    %s176 = sphi 0, %s175
    %s190 = sphi 0, %s176
    %s194 = sphi 0, %s194
    %s196 = sphi 0, %s194
    %s197 = sphi 0, %s196
    %s211 = sphi 0, %s197
    %s215 = sphi 0, %s215
    %s217 = sphi 0, %s215
    %s218 = sphi 0, %s217
    %s232 = sphi 0, %s218
    %s236 = sphi 0, %s236
    %s238 = sphi 0, %s236
    %s239 = sphi 0, %s238
    %s253 = sphi 0, %s239
    %s257 = sphi 0, %s257
    %s259 = sphi 0, %s257
    %s260 = sphi 0, %s259
    %s274 = sphi 0, %s260
    %s278 = sphi 0, %s278
    %s280 = sphi 0, %s278
    %s281 = sphi 0, %s280
    %s295 = sphi 0, %s281
    %s299 = sphi 0, %s299
    %s301 = sphi 0, %s299
    %s302 = sphi 0, %s301
    %s316 = sphi 0, %s302
    %s320 = sphi 0, %s320
    %s322 = sphi 0, %s320
    %s323 = sphi 0, %s322
    %s337 = sphi 0, %s323
    %s341 = sphi 0, %s341
    %s343 = sphi 0, %s341
    %s344 = sphi 0, %s343
    %s358 = sphi 0, %s344
    %s364 = sphi 0, %s366
    %s367 = sphi 0, %s364
    %s368 = sphi 0, %s367
    %s384 = sphi 0, %s368
    %s390 = sphi 0, %s392
    %s393 = sphi 0, %s390
    %s394 = sphi 0, %s393
    %s410 = sphi 0, %s394
  $region4: #{boundary_transformer_block_forward.11} parent=0 // loop_header_branch
    %25 = sbr.rel (%p23) target = $region8
  $region5: #{boundary_transformer_block_forward.11} parent=0 // loop_body
    %s27 = ssub.s32 %s22, 1
    %s28 = ssub.s32 %s22, 2
    %s35 = sadd.s32 1, %s30
    %p36 = scmp.ge.s32.totalorder %s35, 16
    %s37 = scalar_select %p36, 0, %s35
    %s38 = sadd.s32 1, %s29
    %s39 = scalar_select %p36, %s38, %s29
    %p40 = scmp.ge.s32.totalorder %s39, 1
    %s41 = scalar_select %p40, 0, %s39
    %s42 = ssub.s32 %s30, %s37
    %s43 = ssub.s32 %s29, %s41
    %s44 = sor.u32 %s42, %s43
    %p45 = scmp.eq.s32.totalorder %s44, 0
    %s47 = sadd.s32 %s46, 1
    %s48 = scalar_select %p45, %s46, %s47
    %p51 = pneg %p45
    %p52 = scmp.eq.s32.totalorder %s22, 15
    %p53 = por %p51, %p52
    %p54 = scmp.ne.s32.totalorder %s46, %s49
    %p55 = scmp.eq.s32.totalorder %s22, 0
    %p56 = por %p54, %p55
    %p57 = scmp.ne.s32.totalorder %s46, %s49
    %p58 = scmp.eq.s32.totalorder %s27, 15
    %p59 = por %p57, %p58
    %p60 = scmp.ne.s32.totalorder %s49, %s50
    %p61 = scmp.eq.s32.totalorder %s27, 0
    %p62 = por %p60, %p61
    %p63 = scmp.ne.s32.totalorder %s49, %s50
    %p64 = scmp.eq.s32.totalorder %s28, 15
    %p65 = por %p63, %p64
    %p67 = scmp.ne.s32.totalorder %s50, %s66
    %p68 = scmp.eq.s32.totalorder %s28, 0
    %p69 = por %p67, %p68
    %s70 = ssub.s32 %s30, %s37
    %s71 = ssub.s32 %s29, %s41
    %s72 = sor.u32 %s70, %s71
    %p73 = scmp.eq.s32.totalorder %s72, 0
    %s75 = sadd.s32 %s74, 1
    %s76 = scalar_select %p73, %s74, %s75
    %p79 = pneg %p73
    %p80 = scmp.eq.s32.totalorder %s22, 15
    %p81 = por %p79, %p80
    %p82 = scmp.ne.s32.totalorder %s74, %s77
    %p83 = scmp.eq.s32.totalorder %s22, 0
    %p84 = por %p82, %p83
    %p85 = scmp.ne.s32.totalorder %s74, %s77
    %p86 = scmp.eq.s32.totalorder %s27, 15
    %p87 = por %p85, %p86
    %p88 = scmp.ne.s32.totalorder %s77, %s78
    %p89 = scmp.eq.s32.totalorder %s27, 0
    %p90 = por %p88, %p89
    %p91 = scmp.ne.s32.totalorder %s77, %s78
    %p92 = scmp.eq.s32.totalorder %s28, 15
    %p93 = por %p91, %p92
    %p95 = scmp.ne.s32.totalorder %s78, %s94
    %p96 = scmp.eq.s32.totalorder %s28, 0
    %p97 = por %p95, %p96
    %s98 = ssub.s32 %s30, %s37
    %s99 = ssub.s32 %s29, %s41
    %s100 = sor.u32 %s98, %s99
    %p101 = scmp.eq.s32.totalorder %s100, 0
    %s103 = sadd.s32 %s102, 1
    %s104 = scalar_select %p101, %s102, %s103
    %p107 = pneg %p101
    %p108 = scmp.eq.s32.totalorder %s22, 15
    %p109 = por %p107, %p108
    %p110 = scmp.ne.s32.totalorder %s102, %s105
    %p111 = scmp.eq.s32.totalorder %s22, 0
    %p112 = por %p110, %p111
    %p113 = scmp.ne.s32.totalorder %s102, %s105
    %p114 = scmp.eq.s32.totalorder %s27, 15
    %p115 = por %p113, %p114
    %p116 = scmp.ne.s32.totalorder %s105, %s106
    %p117 = scmp.eq.s32.totalorder %s27, 0
    %p118 = por %p116, %p117
    %p119 = scmp.ne.s32.totalorder %s105, %s106
    %p120 = scmp.eq.s32.totalorder %s28, 15
    %p121 = por %p119, %p120
    %p123 = scmp.ne.s32.totalorder %s106, %s122
    %p124 = scmp.eq.s32.totalorder %s28, 0
    %p125 = por %p123, %p124
    %s126 = ssub.s32 %s29, %s41
    %p127 = scmp.eq.s32.totalorder %s126, 0
    %s129 = sadd.s32 %s128, 1
    %s130 = scalar_select %p127, %s128, %s129
    %p133 = pneg %p127
    %p134 = scmp.eq.s32.totalorder %s22, 15
    %p135 = por %p133, %p134
    %p136 = scmp.ne.s32.totalorder %s128, %s131
    %p137 = scmp.eq.s32.totalorder %s22, 0
    %p138 = por %p136, %p137
    %p139 = scmp.ne.s32.totalorder %s128, %s131
    %p140 = scmp.eq.s32.totalorder %s27, 15
    %p141 = por %p139, %p140
    %p142 = scmp.ne.s32.totalorder %s131, %s132
    %p143 = scmp.eq.s32.totalorder %s27, 0
    %p144 = por %p142, %p143
    %p145 = scmp.ne.s32.totalorder %s131, %s132
    %p146 = scmp.eq.s32.totalorder %s28, 15
    %p147 = por %p145, %p146
    %p149 = scmp.ne.s32.totalorder %s132, %s148
    %p150 = scmp.eq.s32.totalorder %s28, 0
    %p151 = por %p149, %p150
    %s153 = sadd.s32 %s152, 1
    %p156 = scmp.eq.s32.totalorder %s22, 15
    %p157 = scmp.ne.s32.totalorder %s152, %s154
    %p158 = scmp.eq.s32.totalorder %s22, 0
    %p159 = por %p157, %p158
    %p160 = scmp.ne.s32.totalorder %s152, %s154
    %p161 = scmp.eq.s32.totalorder %s27, 15
    %p162 = por %p160, %p161
    %p163 = scmp.ne.s32.totalorder %s154, %s155
    %p164 = scmp.eq.s32.totalorder %s27, 0
    %p165 = por %p163, %p164
    %p166 = scmp.ne.s32.totalorder %s154, %s155
    %p167 = scmp.eq.s32.totalorder %s28, 15
    %p168 = por %p166, %p167
    %p170 = scmp.ne.s32.totalorder %s155, %s169
    %p171 = scmp.eq.s32.totalorder %s28, 0
    %p172 = por %p170, %p171
    %s174 = sadd.s32 %s173, 1
    %p177 = scmp.eq.s32.totalorder %s22, 15
    %p178 = scmp.ne.s32.totalorder %s173, %s175
    %p179 = scmp.eq.s32.totalorder %s22, 0
    %p180 = por %p178, %p179
    %p181 = scmp.ne.s32.totalorder %s173, %s175
    %p182 = scmp.eq.s32.totalorder %s27, 15
    %p183 = por %p181, %p182
    %p184 = scmp.ne.s32.totalorder %s175, %s176
    %p185 = scmp.eq.s32.totalorder %s27, 0
    %p186 = por %p184, %p185
    %p187 = scmp.ne.s32.totalorder %s175, %s176
    %p188 = scmp.eq.s32.totalorder %s28, 15
    %p189 = por %p187, %p188
    %p191 = scmp.ne.s32.totalorder %s176, %s190
    %p192 = scmp.eq.s32.totalorder %s28, 0
    %p193 = por %p191, %p192
    %s195 = sadd.s32 %s194, 1
    %p198 = scmp.eq.s32.totalorder %s22, 15
    %p199 = scmp.ne.s32.totalorder %s194, %s196
    %p200 = scmp.eq.s32.totalorder %s22, 0
    %p201 = por %p199, %p200
    %p202 = scmp.ne.s32.totalorder %s194, %s196
    %p203 = scmp.eq.s32.totalorder %s27, 15
    %p204 = por %p202, %p203
    %p205 = scmp.ne.s32.totalorder %s196, %s197
    %p206 = scmp.eq.s32.totalorder %s27, 0
    %p207 = por %p205, %p206
    %p208 = scmp.ne.s32.totalorder %s196, %s197
    %p209 = scmp.eq.s32.totalorder %s28, 15
    %p210 = por %p208, %p209
    %p212 = scmp.ne.s32.totalorder %s197, %s211
    %p213 = scmp.eq.s32.totalorder %s28, 0
    %p214 = por %p212, %p213
    %s216 = sadd.s32 %s215, 1
    %p219 = scmp.eq.s32.totalorder %s22, 15
    %p220 = scmp.ne.s32.totalorder %s215, %s217
    %p221 = scmp.eq.s32.totalorder %s22, 0
    %p222 = por %p220, %p221
    %p223 = scmp.ne.s32.totalorder %s215, %s217
    %p224 = scmp.eq.s32.totalorder %s27, 15
    %p225 = por %p223, %p224
    %p226 = scmp.ne.s32.totalorder %s217, %s218
    %p227 = scmp.eq.s32.totalorder %s27, 0
    %p228 = por %p226, %p227
    %p229 = scmp.ne.s32.totalorder %s217, %s218
    %p230 = scmp.eq.s32.totalorder %s28, 15
    %p231 = por %p229, %p230
    %p233 = scmp.ne.s32.totalorder %s218, %s232
    %p234 = scmp.eq.s32.totalorder %s28, 0
    %p235 = por %p233, %p234
    %s237 = sadd.s32 %s236, 1
    %p240 = scmp.eq.s32.totalorder %s22, 15
    %p241 = scmp.ne.s32.totalorder %s236, %s238
    %p242 = scmp.eq.s32.totalorder %s22, 0
    %p243 = por %p241, %p242
    %p244 = scmp.ne.s32.totalorder %s236, %s238
    %p245 = scmp.eq.s32.totalorder %s27, 15
    %p246 = por %p244, %p245
    %p247 = scmp.ne.s32.totalorder %s238, %s239
    %p248 = scmp.eq.s32.totalorder %s27, 0
    %p249 = por %p247, %p248
    %p250 = scmp.ne.s32.totalorder %s238, %s239
    %p251 = scmp.eq.s32.totalorder %s28, 15
    %p252 = por %p250, %p251
    %p254 = scmp.ne.s32.totalorder %s239, %s253
    %p255 = scmp.eq.s32.totalorder %s28, 0
    %p256 = por %p254, %p255
    %s258 = sadd.s32 %s257, 1
    %p261 = scmp.eq.s32.totalorder %s22, 15
    %p262 = scmp.ne.s32.totalorder %s257, %s259
    %p263 = scmp.eq.s32.totalorder %s22, 0
    %p264 = por %p262, %p263
    %p265 = scmp.ne.s32.totalorder %s257, %s259
    %p266 = scmp.eq.s32.totalorder %s27, 15
    %p267 = por %p265, %p266
    %p268 = scmp.ne.s32.totalorder %s259, %s260
    %p269 = scmp.eq.s32.totalorder %s27, 0
    %p270 = por %p268, %p269
    %p271 = scmp.ne.s32.totalorder %s259, %s260
    %p272 = scmp.eq.s32.totalorder %s28, 15
    %p273 = por %p271, %p272
    %p275 = scmp.ne.s32.totalorder %s260, %s274
    %p276 = scmp.eq.s32.totalorder %s28, 0
    %p277 = por %p275, %p276
    %s279 = sadd.s32 %s278, 1
    %p282 = scmp.eq.s32.totalorder %s22, 15
    %p283 = scmp.ne.s32.totalorder %s278, %s280
    %p284 = scmp.eq.s32.totalorder %s22, 0
    %p285 = por %p283, %p284
    %p286 = scmp.ne.s32.totalorder %s278, %s280
    %p287 = scmp.eq.s32.totalorder %s27, 15
    %p288 = por %p286, %p287
    %p289 = scmp.ne.s32.totalorder %s280, %s281
    %p290 = scmp.eq.s32.totalorder %s27, 0
    %p291 = por %p289, %p290
    %p292 = scmp.ne.s32.totalorder %s280, %s281
    %p293 = scmp.eq.s32.totalorder %s28, 15
    %p294 = por %p292, %p293
    %p296 = scmp.ne.s32.totalorder %s281, %s295
    %p297 = scmp.eq.s32.totalorder %s28, 0
    %p298 = por %p296, %p297
    %s300 = sadd.s32 %s299, 1
    %p303 = scmp.eq.s32.totalorder %s22, 15
    %p304 = scmp.ne.s32.totalorder %s299, %s301
    %p305 = scmp.eq.s32.totalorder %s22, 0
    %p306 = por %p304, %p305
    %p307 = scmp.ne.s32.totalorder %s299, %s301
    %p308 = scmp.eq.s32.totalorder %s27, 15
    %p309 = por %p307, %p308
    %p310 = scmp.ne.s32.totalorder %s301, %s302
    %p311 = scmp.eq.s32.totalorder %s27, 0
    %p312 = por %p310, %p311
    %p313 = scmp.ne.s32.totalorder %s301, %s302
    %p314 = scmp.eq.s32.totalorder %s28, 15
    %p315 = por %p313, %p314
    %p317 = scmp.ne.s32.totalorder %s302, %s316
    %p318 = scmp.eq.s32.totalorder %s28, 0
    %p319 = por %p317, %p318
    %s321 = sadd.s32 %s320, 1
    %p324 = scmp.eq.s32.totalorder %s22, 15
    %p325 = scmp.ne.s32.totalorder %s320, %s322
    %p326 = scmp.eq.s32.totalorder %s22, 0
    %p327 = por %p325, %p326
    %p328 = scmp.ne.s32.totalorder %s320, %s322
    %p329 = scmp.eq.s32.totalorder %s27, 15
    %p330 = por %p328, %p329
    %p331 = scmp.ne.s32.totalorder %s322, %s323
    %p332 = scmp.eq.s32.totalorder %s27, 0
    %p333 = por %p331, %p332
    %p334 = scmp.ne.s32.totalorder %s322, %s323
    %p335 = scmp.eq.s32.totalorder %s28, 15
    %p336 = por %p334, %p335
    %p338 = scmp.ne.s32.totalorder %s323, %s337
    %p339 = scmp.eq.s32.totalorder %s28, 0
    %p340 = por %p338, %p339
    %s342 = sadd.s32 %s341, 1
    %p345 = scmp.eq.s32.totalorder %s22, 15
    %p346 = scmp.ne.s32.totalorder %s341, %s343
    %p347 = scmp.eq.s32.totalorder %s22, 0
    %p348 = por %p346, %p347
    %p349 = scmp.ne.s32.totalorder %s341, %s343
    %p350 = scmp.eq.s32.totalorder %s27, 15
    %p351 = por %p349, %p350
    %p352 = scmp.ne.s32.totalorder %s343, %s344
    %p353 = scmp.eq.s32.totalorder %s27, 0
    %p354 = por %p352, %p353
    %p355 = scmp.ne.s32.totalorder %s343, %s344
    %p356 = scmp.eq.s32.totalorder %s28, 15
    %p357 = por %p355, %p356
    %p359 = scmp.ne.s32.totalorder %s344, %s358
    %p360 = scmp.eq.s32.totalorder %s28, 0
    %p361 = por %p359, %p360
    %s362 = ssub.s32 %s29, %s41
    %p363 = scmp.eq.s32.totalorder %s362, 0
    %s365 = sadd.s32 %s364, 1
    %s366 = scalar_select %p363, %s364, %s365
    %p369 = pneg %p363
    %p370 = scmp.eq.s32.totalorder %s22, 15
    %p371 = por %p369, %p370
    %p372 = scmp.ne.s32.totalorder %s364, %s367
    %p373 = scmp.eq.s32.totalorder %s22, 0
    %p374 = por %p372, %p373
    %p375 = scmp.ne.s32.totalorder %s364, %s367
    %p376 = scmp.eq.s32.totalorder %s27, 15
    %p377 = por %p375, %p376
    %p378 = scmp.ne.s32.totalorder %s367, %s368
    %p379 = scmp.eq.s32.totalorder %s27, 0
    %p380 = por %p378, %p379
    %p381 = scmp.ne.s32.totalorder %s367, %s368
    %p382 = scmp.eq.s32.totalorder %s28, 15
    %p383 = por %p381, %p382
    %p385 = scmp.ne.s32.totalorder %s368, %s384
    %p386 = scmp.eq.s32.totalorder %s28, 0
    %p387 = por %p385, %p386
    %s388 = ssub.s32 %s29, %s41
    %p389 = scmp.eq.s32.totalorder %s388, 0
    %s391 = sadd.s32 %s390, 1
    %s392 = scalar_select %p389, %s390, %s391
    %p395 = pneg %p389
    %p396 = scmp.eq.s32.totalorder %s22, 15
    %p397 = por %p395, %p396
    %p398 = scmp.ne.s32.totalorder %s390, %s393
    %p399 = scmp.eq.s32.totalorder %s22, 0
    %p400 = por %p398, %p399
    %p401 = scmp.ne.s32.totalorder %s390, %s393
    %p402 = scmp.eq.s32.totalorder %s27, 15
    %p403 = por %p401, %p402
    %p404 = scmp.ne.s32.totalorder %s393, %s394
    %p405 = scmp.eq.s32.totalorder %s27, 0
    %p406 = por %p404, %p405
    %p407 = scmp.ne.s32.totalorder %s393, %s394
    %p408 = scmp.eq.s32.totalorder %s28, 15
    %p409 = por %p407, %p408
    %p411 = scmp.ne.s32.totalorder %s394, %s410
    %p412 = scmp.eq.s32.totalorder %s28, 0
    %p413 = por %p411, %p412
    %p414 = scmp.le.s32.totalorder 1, %s22
    %p415 = scmp.lt.s32.totalorder %s22, 17
    %p416 = pnand %p414, %p415
    %p417 = pneg %p416
    // Predicated region
    $region9: #{boundary_transformer_block_forward.11} parent=5 // pred_check
      _
    $region10: #{boundary_transformer_block_forward.11} parent=5 // pred_check_branch
      %419 = sbr.rel (%p416) target = $region12
    $region11: #{boundary_transformer_block_forward.11} parent=5 // pred_region
      %s420 = ssub.s32 %s22, 1
      // Predicated region
      $region13: #{boundary_transformer_block_forward.11} parent=11 // pred_check
        %p421 = pneg %p144
      $region14: #{boundary_transformer_block_forward.11} parent=11 // pred_check_branch
        %423 = sbr.rel (%p421) target = $region16
      $region15: #{boundary_transformer_block_forward.11} parent=11 // pred_region
        %s424 = smul.u32 8, %s31
        %p425 = scmp.lt.s32.totalorder %s424, 7
        %s426 = scalar_select %p425, %s424, 7
        %s427 = smul.addr %s426, 8
        %s428 = scalar_lea.vmem %s3, %s427
        %s429 = smul.u32 8, %s31
      $region16: #{boundary_transformer_block_forward.11} parent=11 // pred_fallthru
        _
      // Predicated region
      $region17: #{boundary_transformer_block_forward.11} parent=11 // pred_check
        %p430 = pneg %p165
      $region18: #{boundary_transformer_block_forward.11} parent=11 // pred_check_branch
        %432 = sbr.rel (%p430) target = $region20
      $region19: #{boundary_transformer_block_forward.11} parent=11 // pred_region
        _
      $region20: #{boundary_transformer_block_forward.11} parent=11 // pred_fallthru
        _
      // Predicated region
      $region21: #{boundary_transformer_block_forward.11} parent=11 // pred_check
        %p433 = pneg %p186
      $region22: #{boundary_transformer_block_forward.11} parent=11 // pred_check_branch
        %435 = sbr.rel (%p433) target = $region24
      $region23: #{boundary_transformer_block_forward.11} parent=11 // pred_region
        _
      $region24: #{boundary_transformer_block_forward.11} parent=11 // pred_fallthru
        _
      // Predicated region
      $region25: #{boundary_transformer_block_forward.11} parent=11 // pred_check
        %p436 = pneg %p207
      $region26: #{boundary_transformer_block_forward.11} parent=11 // pred_check_branch
        %438 = sbr.rel (%p436) target = $region28
      $region27: #{boundary_transformer_block_forward.11} parent=11 // pred_region
        _
      $region28: #{boundary_transformer_block_forward.11} parent=11 // pred_fallthru
        _
      // Predicated region
      $region29: #{boundary_transformer_block_forward.11} parent=11 // pred_check
        %p439 = pneg %p228
      $region30: #{boundary_transformer_block_forward.11} parent=11 // pred_check_branch
        %441 = sbr.rel (%p439) target = $region32
      $region31: #{boundary_transformer_block_forward.11} parent=11 // pred_region
        _
      $region32: #{boundary_transformer_block_forward.11} parent=11 // pred_fallthru
        _
      // Predicated region
      $region33: #{boundary_transformer_block_forward.11} parent=11 // pred_check
        %p442 = pneg %p249
      $region34: #{boundary_transformer_block_forward.11} parent=11 // pred_check_branch
        %444 = sbr.rel (%p442) target = $region36
      $region35: #{boundary_transformer_block_forward.11} parent=11 // pred_region
        _
      $region36: #{boundary_transformer_block_forward.11} parent=11 // pred_fallthru
        _
      // Predicated region
      $region37: #{boundary_transformer_block_forward.11} parent=11 // pred_check
        %p445 = pneg %p270
      $region38: #{boundary_transformer_block_forward.11} parent=11 // pred_check_branch
        %447 = sbr.rel (%p445) target = $region40
      $region39: #{boundary_transformer_block_forward.11} parent=11 // pred_region
        _
      $region40: #{boundary_transformer_block_forward.11} parent=11 // pred_fallthru
        _
      // Predicated region
      $region41: #{boundary_transformer_block_forward.11} parent=11 // pred_check
        %p448 = pneg %p291
      $region42: #{boundary_transformer_block_forward.11} parent=11 // pred_check_branch
        %450 = sbr.rel (%p448) target = $region44
      $region43: #{boundary_transformer_block_forward.11} parent=11 // pred_region
        _
      $region44: #{boundary_transformer_block_forward.11} parent=11 // pred_fallthru
        _
      // Predicated region
      $region45: #{boundary_transformer_block_forward.11} parent=11 // pred_check
        %p451 = pneg %p312
      $region46: #{boundary_transformer_block_forward.11} parent=11 // pred_check_branch
        %453 = sbr.rel (%p451) target = $region48
      $region47: #{boundary_transformer_block_forward.11} parent=11 // pred_region
        _
      $region48: #{boundary_transformer_block_forward.11} parent=11 // pred_fallthru
        _
      // Predicated region
      $region49: #{boundary_transformer_block_forward.11} parent=11 // pred_check
        %p454 = pneg %p333
      $region50: #{boundary_transformer_block_forward.11} parent=11 // pred_check_branch
        %456 = sbr.rel (%p454) target = $region52
      $region51: #{boundary_transformer_block_forward.11} parent=11 // pred_region
        _
      $region52: #{boundary_transformer_block_forward.11} parent=11 // pred_fallthru
        _
      // Predicated region
      $region53: #{boundary_transformer_block_forward.11} parent=11 // pred_check
        %p457 = pneg %p354
      $region54: #{boundary_transformer_block_forward.11} parent=11 // pred_check_branch
        %459 = sbr.rel (%p457) target = $region56
      $region55: #{boundary_transformer_block_forward.11} parent=11 // pred_region
        _
      $region56: #{boundary_transformer_block_forward.11} parent=11 // pred_fallthru
        _
    $region12: #{boundary_transformer_block_forward.11} parent=5 // pred_fallthru
      _
    %p460 = scmp.lt.s32.totalorder %s22, 16
    // Predicated region
    $region57: #{boundary_transformer_block_forward.11} parent=5 // pred_check
      %p461 = pneg %p460
    $region58: #{boundary_transformer_block_forward.11} parent=5 // pred_check_branch
      %463 = sbr.rel (%p461) target = $region60
    $region59: #{boundary_transformer_block_forward.11} parent=5 // pred_region
      // Predicated region
      $region61: #{boundary_transformer_block_forward.11} parent=59 // pred_check
        %p464 = pneg %p56
      $region62: #{boundary_transformer_block_forward.11} parent=59 // pred_check_branch
        %466 = sbr.rel (%p464) target = $region64
      $region63: #{boundary_transformer_block_forward.11} parent=59 // pred_region
        %s467 = smul.u32 8, %s29
        %p468 = scmp.lt.s32.totalorder %s30, 15
        %s469 = scalar_select %p468, %s30, 15
        %p470 = scmp.lt.s32.totalorder %s467, 7
        %s471 = scalar_select %p470, %s467, 7
        %s472 = smul.addr %s469, 8
        %s473 = sadd.s32 %s471, %s472
        %s474 = smul.addr %s473, 4
        %s475 = scalar_lea.vmem %s0, %s474
        %s476 = smul.u32 8, %s29
      $region64: #{boundary_transformer_block_forward.11} parent=59 // pred_fallthru
        _
      // Predicated region
      $region65: #{boundary_transformer_block_forward.11} parent=59 // pred_check
        %p477 = pneg %p84
      $region66: #{boundary_transformer_block_forward.11} parent=59 // pred_check_branch
        %479 = sbr.rel (%p477) target = $region68
      $region67: #{boundary_transformer_block_forward.11} parent=59 // pred_region
        %s480 = smul.u32 8, %s29
        %p481 = scmp.lt.s32.totalorder %s30, 15
        %s482 = scalar_select %p481, %s30, 15
        %p483 = scmp.lt.s32.totalorder %s480, 7
        %s484 = scalar_select %p483, %s480, 7
        %s485 = smul.addr %s482, 8
        %s486 = sadd.s32 %s484, %s485
        %s487 = smul.addr %s486, 4
        %s488 = scalar_lea.vmem %s1, %s487
        %s489 = smul.u32 8, %s29
      $region68: #{boundary_transformer_block_forward.11} parent=59 // pred_fallthru
        _
      // Predicated region
      $region69: #{boundary_transformer_block_forward.11} parent=59 // pred_check
        %p490 = pneg %p112
      $region70: #{boundary_transformer_block_forward.11} parent=59 // pred_check_branch
        %492 = sbr.rel (%p490) target = $region72
      $region71: #{boundary_transformer_block_forward.11} parent=59 // pred_region
        %s493 = smul.u32 8, %s29
        %p494 = scmp.lt.s32.totalorder %s30, 15
        %s495 = scalar_select %p494, %s30, 15
        %p496 = scmp.lt.s32.totalorder %s493, 7
        %s497 = scalar_select %p496, %s493, 7
        %s498 = smul.addr %s495, 8
        %s499 = sadd.s32 %s497, %s498
        %s500 = smul.addr %s499, 4
        %s501 = scalar_lea.vmem %s2, %s500
        %s502 = smul.u32 8, %s29
      $region72: #{boundary_transformer_block_forward.11} parent=59 // pred_fallthru
        _
    $region60: #{boundary_transformer_block_forward.11} parent=5 // pred_fallthru
      _
    %p503 = scmp.le.s32.totalorder 1, %s22
    %p504 = scmp.lt.s32.totalorder %s22, 17
    %p505 = pnand %p503, %p504
    %p506 = pneg %p505
    // Predicated region
    $region73: #{boundary_transformer_block_forward.11} parent=5 // pred_check
      _
    $region74: #{boundary_transformer_block_forward.11} parent=5 // pred_check_branch
      %508 = sbr.rel (%p505) target = $region76
    $region75: #{boundary_transformer_block_forward.11} parent=5 // pred_region
      %s509 = ssub.s32 %s22, 1
      %s510 = smul.u32 8, %s31
      %p511 = scmp.lt.s32.totalorder %s32, 15
      %s512 = scalar_select %p511, %s32, 15
      %p513 = scmp.lt.s32.totalorder %s510, 7
      %s514 = scalar_select %p513, %s510, 7
      %s515 = smul.addr %s512, 8
      %s516 = sadd.s32 %s514, %s515
      %s517 = smul.addr %s516, 4
      %s518 = scalar_lea.vmem %s0, %s517
      %p519 = pneg %p62
      %p520 = pneg %p59
      %s521 = smul.u32 8, %s31
      %p522 = scmp.lt.s32.totalorder %s32, 15
      %s523 = scalar_select %p522, %s32, 15
      %p524 = scmp.lt.s32.totalorder %s521, 7
      %s525 = scalar_select %p524, %s521, 7
      %s526 = smul.addr %s523, 8
      %s527 = sadd.s32 %s525, %s526
      %s528 = smul.addr %s527, 4
      %s529 = scalar_lea.vmem %s1, %s528
      %p530 = pneg %p90
      %p531 = pneg %p87
      %s532 = smul.u32 8, %s31
      %p533 = scmp.lt.s32.totalorder %s32, 15
      %s534 = scalar_select %p533, %s32, 15
      %p535 = scmp.lt.s32.totalorder %s532, 7
      %s536 = scalar_select %p535, %s532, 7
      %s537 = smul.addr %s534, 8
      %s538 = sadd.s32 %s536, %s537
      %s539 = smul.addr %s538, 4
      %s540 = scalar_lea.vmem %s2, %s539
      %p541 = pneg %p118
      %p542 = pneg %p115
      %s543 = smul.u32 8, %s31
      %p544 = scmp.lt.s32.totalorder %s543, 7
      %s545 = scalar_select %p544, %s543, 7
      %s546 = smul.addr %s545, 8
      %s547 = scalar_lea.vmem %s3, %s546
      %p548 = pneg %p144
      %p549 = pneg %p141
      %p550 = pneg %p165
      %p551 = pneg %p162
      %p552 = pneg %p186
      %p553 = pneg %p183
      %p554 = pneg %p207
      %p555 = pneg %p204
      %p556 = pneg %p228
      %p557 = pneg %p225
      %p558 = pneg %p249
      %p559 = pneg %p246
      %p560 = pneg %p270
      %p561 = pneg %p267
      %p562 = pneg %p291
      %p563 = pneg %p288
      %p564 = pneg %p312
      %p565 = pneg %p309
      %p566 = pneg %p333
      %p567 = pneg %p330
      %p568 = pneg %p354
      %p569 = pneg %p351
      %p570 = pneg %p380
      %p571 = pneg %p377
      %s572 = smul.u32 8, %s31
      %p573 = scmp.lt.s32.totalorder %s572, 7
      %s574 = scalar_select %p573, %s572, 7
      %s575 = smul.addr %s574, 8
      %s576 = scalar_lea.vmem %s14, %s575
      %p577 = pneg %p406
      %p578 = pneg %p403
      %p579 = scmp.lt.s32.totalorder %s31, 0
      %s580 = scalar_select %p579, %s31, 0
      %s581 = scalar_lea.vmem %s15, %s580
      %s582 = smul.u32 8, %s31
      %p583 = scmp.lt.s32.totalorder %s32, 15
      %s584 = scalar_select %p583, %s32, 15
      %p585 = scmp.lt.s32.totalorder %s582, 7
      %s586 = scalar_select %p585, %s582, 7
      %s587 = smul.addr %s584, 8
      %s588 = sadd.s32 %s586, %s587
      %s589 = smul.addr %s588, 4
      %s590 = scalar_lea.vmem %s0, %s589
      %s591 = smul.u32 8, %s31
      %s592 = smul.u32 8, %s31
      %p593 = scmp.lt.s32.totalorder %s32, 15
      %s594 = scalar_select %p593, %s32, 15
      %p595 = scmp.lt.s32.totalorder %s592, 7
      %s596 = scalar_select %p595, %s592, 7
      %s597 = smul.addr %s594, 8
      %s598 = sadd.s32 %s596, %s597
      %s599 = smul.addr %s598, 4
      %s600 = scalar_lea.vmem %s1, %s599
      %s601 = smul.u32 8, %s31
      %s602 = smul.u32 8, %s31
      %p603 = scmp.lt.s32.totalorder %s32, 15
      %s604 = scalar_select %p603, %s32, 15
      %p605 = scmp.lt.s32.totalorder %s602, 7
      %s606 = scalar_select %p605, %s602, 7
      %s607 = smul.addr %s604, 8
      %s608 = sadd.s32 %s606, %s607
      %s609 = smul.addr %s608, 4
      %s610 = scalar_lea.vmem %s2, %s609
      %s611 = smul.u32 8, %s31
      %s612 = smul.u32 8, %s31
      %p613 = scmp.lt.s32.totalorder %s612, 7
      %s614 = scalar_select %p613, %s612, 7
      %s615 = smul.addr %s614, 8
      %s616 = scalar_lea.vmem %s3, %s615
      %s617 = smul.u32 8, %s31
      %s618 = smul.u32 8, %s31
      %p619 = scmp.lt.s32.totalorder %s618, 7
      %s620 = scalar_select %p619, %s618, 7
      %s621 = smul.addr %s620, 8
      %s622 = scalar_lea.vmem %s14, %s621
      %s623 = smul.u32 8, %s31
      %p624 = scmp.lt.s32.totalorder %s31, 0
      %s625 = scalar_select %p624, %s31, 0
      %s626 = scalar_lea.vmem %s15, %s625
      %p628 = scmp.eq.s32.totalorder %s32, 0
      // Predicated region
      $region77: #{boundary_transformer_block_forward.11} parent=75 // pred_check
        %p629 = pneg %p628
      $region78: #{boundary_transformer_block_forward.11} parent=75 // pred_check_branch
        %631 = sbr.rel (%p629) target = $region80
      $region79: #{boundary_transformer_block_forward.11} parent=75 // pred_region
        %vm632 = vcmask 31744
        %633 = vst.msk [vmem:[#allocation2] sm:$0xff] %vm632, -inf
        %634 = vst.msk [vmem:[#allocation2 + $0x8] sm:$0xff] %vm632, -inf
        %635 = vst.msk [vmem:[#allocation2 + $0x10] sm:$0xff] %vm632, -inf
        %636 = vst.msk [vmem:[#allocation2 + $0x18] sm:$0xff] %vm632, -inf
        %637 = vst.msk [vmem:[#allocation2 + $0x20] sm:$0xff] %vm632, -inf
        %638 = vst.msk [vmem:[#allocation2 + $0x28] sm:$0xff] %vm632, -inf
        %639 = vst.msk [vmem:[#allocation2 + $0x30] sm:$0xff] %vm632, -inf
        %640 = vst.msk [vmem:[#allocation2 + $0x38] sm:$0xff] %vm632, -inf
        %641 = vst.msk [vmem:[#allocation3] sm:$0xff] %vm632, 0.0
        %642 = vst.msk [vmem:[#allocation3 + $0x8] sm:$0xff] %vm632, 0.0
        %643 = vst.msk [vmem:[#allocation3 + $0x10] sm:$0xff] %vm632, 0.0
        %644 = vst.msk [vmem:[#allocation3 + $0x18] sm:$0xff] %vm632, 0.0
        %645 = vst.msk [vmem:[#allocation3 + $0x20] sm:$0xff] %vm632, 0.0
        %646 = vst.msk [vmem:[#allocation3 + $0x28] sm:$0xff] %vm632, 0.0
        %647 = vst.msk [vmem:[#allocation3 + $0x30] sm:$0xff] %vm632, 0.0
        %648 = vst.msk [vmem:[#allocation3 + $0x38] sm:$0xff] %vm632, 0.0
        %vm649 = vcmask 261120
        %650 = vst.msk [vmem:[#allocation4] sm:$0xff] %vm649, 0.0
        %651 = vst.msk [vmem:[#allocation4 + $0x8] sm:$0xff] %vm649, 0.0
        %652 = vst.msk [vmem:[#allocation4 + $0x10] sm:$0xff] %vm649, 0.0
        %653 = vst.msk [vmem:[#allocation4 + $0x18] sm:$0xff] %vm649, 0.0
        %654 = vst.msk [vmem:[#allocation4 + $0x20] sm:$0xff] %vm649, 0.0
        %655 = vst.msk [vmem:[#allocation4 + $0x28] sm:$0xff] %vm649, 0.0
        %656 = vst.msk [vmem:[#allocation4 + $0x30] sm:$0xff] %vm649, 0.0
        %657 = vst.msk [vmem:[#allocation4 + $0x38] sm:$0xff] %vm649, 0.0
      $region80: #{boundary_transformer_block_forward.11} parent=75 // pred_fallthru
        _
      %v658 = vld [vmem:[%s610] sm:$0xf]
      %v659 = vld [vmem:[%s610 + $0x4] sm:$0xf]
      %v660 = vld [vmem:[%s610 + $0x8] sm:$0xf]
      %v661 = vld [vmem:[%s610 + $0xc] sm:$0xf]
      %v662 = vld [vmem:[%s610 + $0x10] sm:$0xf]
      %v663 = vld [vmem:[%s610 + $0x14] sm:$0xf]
      %v664 = vld [vmem:[%s610 + $0x18] sm:$0xf]
      %v665 = vld [vmem:[%s610 + $0x1c] sm:$0xf]
      %v666 = vld [vmem:[%s4] sm:$0xff]
      %v667 = vpack.c.bf16 %v666, %v666
      %v668 = vld [vmem:[%s5] sm:$0x1]
      %v670 = vlaneseq
      %v671 = vshrl.u32 %v670, 7
      %v672 = vsub.s32 0, %v671
      %v673 = vrot.slane %v668, %v672
      %v683 = vunpack.c.l.b16 %v658
      %v684 = vunpack.c.l.b16 %v659
      %v685 = vunpack.c.l.b16 %v660
      %v686 = vunpack.c.l.b16 %v661
      %v687 = vunpack.c.l.b16 %v662
      %v688 = vunpack.c.l.b16 %v663
      %v689 = vunpack.c.l.b16 %v664
      %v690 = vunpack.c.l.b16 %v665
      %v691 = vpack.c.b16 %v684, %v683
      %v692 = vpack.c.b16 %v686, %v685
      %v693 = vpack.c.b16 %v688, %v687
      %v694 = vpack.c.b16 %v690, %v689
      %vm695 = vcmask 64512
      %v697 = vsel %vm695, %v691, 0
      %v700 = vsel %vm695, %v692, 0
      %v703 = vsel %vm695, %v693, 0
      %v706 = vsel %vm695, %v694, 0
      %vm708 = vcmask 1043456
      %v710 = vsel %vm708, %v667, 0
      %712 = vmatprep.subr.bf16.mxu0 0
      %713 = vmatpush1.bf16.msra.mxu0 %v710
      %714 = vmatprep.subr.bf16.mxu0 0
      %715 = vmatpush1.bf16.msra.mxu0 0
      %716 = vmatprep.subr.bf16.mxu0 0
      %717 = vmatpush1.bf16.msra.mxu0 0
      %718 = vmatprep.subr.bf16.mxu0 0
      %719 = vmatpush1.bf16.msra.mxu0 0
      %720 = vmatprep.subr.bf16.mxu0 0
      %721 = vmatpush1.bf16.msra.mxu0 0
      %722 = vmatprep.subr.bf16.mxu0 0
      %723 = vmatpush1.bf16.msra.mxu0 0
      %724 = vmatprep.subr.bf16.mxu0 0
      %725 = vmatpush1.bf16.msra.mxu0 0
      %726 = vmatprep.subr.bf16.mxu0 0
      %727 = vmatpush1.bf16.msra.mxu0 0
      %728 = vmatprep.subr.bf16.mxu0 0
      %729 = vmatpush1.bf16.msra.mxu0 0
      %730 = vmatprep.subr.bf16.mxu0 0
      %731 = vmatpush1.bf16.msra.mxu0 0
      %732 = vmatprep.subr.bf16.mxu0 0
      %733 = vmatpush1.bf16.msra.mxu0 0
      %734 = vmatprep.subr.bf16.mxu0 0
      %735 = vmatpush1.bf16.msra.mxu0 0
      %736 = vmatprep.subr.bf16.mxu0 0
      %737 = vmatpush1.bf16.msra.mxu0 0
      %738 = vmatprep.subr.bf16.mxu0 0
      %739 = vmatpush1.bf16.msra.mxu0 0
      %740 = vmatprep.subr.bf16.mxu0 0
      %741 = vmatpush1.bf16.msra.mxu0 0
      %742 = vmatprep.subr.bf16.mxu0 0
      %743 = vmatpush1.bf16.msra.mxu0 0
      %744 = vmatprep.mubr.bf16.mxu0 0
      %745 = vmatmul.mubr.bf16.gmra.mrb[0].mxu0 %v697
      %v746 = vpop.f32.mrb[0].mxu0
      %v747 = vadd.f32 %v673, %v746
      %v748 = vpop.f32.mrb[0].mxu0
      %v749 = vpop.f32.mrb[0].mxu0
      %v750 = vadd.f32 %v673, %v749
      %v751 = vpop.f32.mrb[0].mxu0
      %752 = vmatprep.mubr.bf16.mxu0 0
      %753 = vmatmul.mubr.bf16.gmra.mrb[0].mxu0 %v700
      %v754 = vpop.f32.mrb[0].mxu0
      %v755 = vadd.f32 %v673, %v754
      %v756 = vpop.f32.mrb[0].mxu0
      %v757 = vpop.f32.mrb[0].mxu0
      %v758 = vadd.f32 %v673, %v757
      %v759 = vpop.f32.mrb[0].mxu0
      %760 = vmatprep.mubr.bf16.mxu0 0
      %761 = vmatmul.mubr.bf16.gmra.mrb[0].mxu0 %v703
      %v762 = vpop.f32.mrb[0].mxu0
      %v763 = vadd.f32 %v673, %v762
      %v764 = vpop.f32.mrb[0].mxu0
      %v765 = vpop.f32.mrb[0].mxu0
      %v766 = vadd.f32 %v673, %v765
      %v767 = vpop.f32.mrb[0].mxu0
      %768 = vmatprep.mubr.bf16.mxu0 0
      %769 = vmatmul.mubr.bf16.gmra.mrb[0].mxu0 %v706
      %v770 = vpop.f32.mrb[0].mxu0
      %v771 = vadd.f32 %v673, %v770
      %v772 = vpop.f32.mrb[0].mxu0
      %v773 = vpop.f32.mrb[0].mxu0
      %v774 = vadd.f32 %v673, %v773
      %v775 = vpop.f32.mrb[0].mxu0
      %776 = vdwg.mxu0
      %v777 = vld [vmem:[%s590] sm:$0xf]
      %v778 = vld [vmem:[%s590 + $0x4] sm:$0xf]
      %v779 = vld [vmem:[%s590 + $0x8] sm:$0xf]
      %v780 = vld [vmem:[%s590 + $0xc] sm:$0xf]
      %v781 = vld [vmem:[%s590 + $0x10] sm:$0xf]
      %v782 = vld [vmem:[%s590 + $0x14] sm:$0xf]
      %v783 = vld [vmem:[%s590 + $0x18] sm:$0xf]
      %v784 = vld [vmem:[%s590 + $0x1c] sm:$0xf]
      %v785 = vunpack.c.l.bf16 %v777
      %v786 = vunpack.c.l.bf16 %v778
      %v787 = vunpack.c.l.bf16 %v779
      %v788 = vunpack.c.l.bf16 %v780
      %v789 = vunpack.c.l.bf16 %v781
      %v790 = vunpack.c.l.bf16 %v782
      %v791 = vunpack.c.l.bf16 %v783
      %v792 = vunpack.c.l.bf16 %v784
      %v793 = vld [vmem:[%s616] sm:$0xff]
      %v794 = vld [vmem:[%s616 + $0x8] sm:$0xff]
      %v795 = vld [vmem:[%s616 + $0x10] sm:$0xff]
      %v796 = vld [vmem:[%s616 + $0x18] sm:$0xff]
      %v797 = vld [vmem:[%s616 + $0x20] sm:$0xff]
      %v798 = vld [vmem:[%s616 + $0x28] sm:$0xff]
      %v799 = vld [vmem:[%s616 + $0x30] sm:$0xff]
      %v800 = vld [vmem:[%s616 + $0x38] sm:$0xff]
      %v801 = vsub.f32 %v785, %v793
      %v802 = vsub.f32 %v786, %v794
      %v803 = vsub.f32 %v787, %v795
      %v804 = vsub.f32 %v788, %v796
      %v805 = vsub.f32 %v789, %v797
      %v806 = vsub.f32 %v790, %v798
      %v807 = vsub.f32 %v791, %v799
      %v808 = vsub.f32 %v792, %v800
      %v809 = vadd.f32 %v801, %v747
      %v810 = vadd.f32 %v802, %v750
      %v811 = vadd.f32 %v803, %v755
      %v812 = vadd.f32 %v804, %v758
      %v813 = vadd.f32 %v805, %v763
      %v814 = vadd.f32 %v806, %v766
      %v815 = vadd.f32 %v807, %v771
      %v816 = vadd.f32 %v808, %v774
      %v817 = vld [vmem:[%s6] sm:$0x1]
      %v819 = vlaneseq
      %v820 = vshrl.u32 %v819, 7
      %v821 = vsub.s32 0, %v820
      %v822 = vrot.slane %v817, %v821
      %v824 = vmul.f32 %v809, %v822
      %v825 = vmul.f32 %v810, %v822
      %v826 = vmul.f32 %v811, %v822
      %v827 = vmul.f32 %v812, %v822
      %v828 = vmul.f32 %v813, %v822
      %v829 = vmul.f32 %v814, %v822
      %v830 = vmul.f32 %v815, %v822
      %v831 = vmul.f32 %v816, %v822
      %v832 = vld [vmem:[%s7] sm:$0x1]
      %v834 = vlaneseq
      %v835 = vshrl.u32 %v834, 7
      %v836 = vsub.s32 0, %v835
      %v837 = vrot.slane %v832, %v836
      %v839 = vadd.f32 %v824, %v837
      %v840 = vadd.f32 %v825, %v837
      %v841 = vadd.f32 %v826, %v837
      %v842 = vadd.f32 %v827, %v837
      %v843 = vadd.f32 %v828, %v837
      %v844 = vadd.f32 %v829, %v837
      %v845 = vadd.f32 %v830, %v837
      %v846 = vadd.f32 %v831, %v837
      %v847 = vmax.f32 %v839, 0.0
      %v848 = vmax.f32 %v840, 0.0
      %v849 = vmax.f32 %v841, 0.0
      %v850 = vmax.f32 %v842, 0.0
      %v851 = vmax.f32 %v843, 0.0
      %v852 = vmax.f32 %v844, 0.0
      %v853 = vmax.f32 %v845, 0.0
      %v854 = vmax.f32 %v846, 0.0
      %v855 = vld [vmem:[%s8] sm:$0xff]
      %v856 = vld [vmem:[%s8 + $0x8] sm:$0xff]
      %v857 = vld [vmem:[%s8 + $0x10] sm:$0xff]
      %v858 = vld [vmem:[%s8 + $0x18] sm:$0xff]
      %v859 = vpack.c.bf16 %v848, %v847
      %v860 = vpack.c.bf16 %v850, %v849
      %v861 = vpack.c.bf16 %v852, %v851
      %v862 = vpack.c.bf16 %v854, %v853
      %v863 = vpack.c.bf16 %v856, %v855
      %v864 = vpack.c.bf16 %v858, %v857
      %v865 = vld [vmem:[%s9] sm:$0x1]
      %v867 = vlaneseq
      %v868 = vshrl.u32 %v867, 7
      %v869 = vsub.s32 0, %v868
      %v870 = vrot.slane %v865, %v869
      %vm872 = vcmask 261120
      %v874 = vsel %vm872, %v859, 0
      %v877 = vsel %vm872, %v860, 0
      %v880 = vsel %vm872, %v861, 0
      %v883 = vsel %vm872, %v862, 0
      %885 = vmatprep.subr.bf16.mxu0 0
      %886 = vmatpush1.bf16.msra.mxu0 %v863
      %887 = vmatprep.subr.bf16.mxu0 0
      %888 = vmatpush1.bf16.msra.mxu0 %v864
      %889 = vmatprep.subr.bf16.mxu0 0
      %890 = vmatpush1.bf16.msra.mxu0 0
      %891 = vmatprep.subr.bf16.mxu0 0
      %892 = vmatpush1.bf16.msra.mxu0 0
      %893 = vmatprep.subr.bf16.mxu0 0
      %894 = vmatpush1.bf16.msra.mxu0 0
      %895 = vmatprep.subr.bf16.mxu0 0
      %896 = vmatpush1.bf16.msra.mxu0 0
      %897 = vmatprep.subr.bf16.mxu0 0
      %898 = vmatpush1.bf16.msra.mxu0 0
      %899 = vmatprep.subr.bf16.mxu0 0
      %900 = vmatpush1.bf16.msra.mxu0 0
      %901 = vmatprep.subr.bf16.mxu0 0
      %902 = vmatpush1.bf16.msra.mxu0 0
      %903 = vmatprep.subr.bf16.mxu0 0
      %904 = vmatpush1.bf16.msra.mxu0 0
      %905 = vmatprep.subr.bf16.mxu0 0
      %906 = vmatpush1.bf16.msra.mxu0 0
      %907 = vmatprep.subr.bf16.mxu0 0
      %908 = vmatpush1.bf16.msra.mxu0 0
      %909 = vmatprep.subr.bf16.mxu0 0
      %910 = vmatpush1.bf16.msra.mxu0 0
      %911 = vmatprep.subr.bf16.mxu0 0
      %912 = vmatpush1.bf16.msra.mxu0 0
      %913 = vmatprep.subr.bf16.mxu0 0
      %914 = vmatpush1.bf16.msra.mxu0 0
      %915 = vmatprep.subr.bf16.mxu0 0
      %916 = vmatpush1.bf16.msra.mxu0 0
      %917 = vmatprep.mubr.bf16.mxu0 0
      %918 = vmatmul.mubr.bf16.gmra.mrb[0].mxu0 %v874
      %v919 = vpop.f32.mrb[0].mxu0
      %v920 = vadd.f32 %v870, %v919
      %v921 = vpop.f32.mrb[0].mxu0
      %v922 = vpop.f32.mrb[0].mxu0
      %v923 = vadd.f32 %v870, %v922
      %v924 = vpop.f32.mrb[0].mxu0
      %925 = vmatprep.mubr.bf16.mxu0 0
      %926 = vmatmul.mubr.bf16.gmra.mrb[0].mxu0 %v877
      %v927 = vpop.f32.mrb[0].mxu0
      %v928 = vadd.f32 %v870, %v927
      %v929 = vpop.f32.mrb[0].mxu0
      %v930 = vpop.f32.mrb[0].mxu0
      %v931 = vadd.f32 %v870, %v930
      %v932 = vpop.f32.mrb[0].mxu0
      %933 = vmatprep.mubr.bf16.mxu0 0
      %934 = vmatmul.mubr.bf16.gmra.mrb[0].mxu0 %v880
      %v935 = vpop.f32.mrb[0].mxu0
      %v936 = vadd.f32 %v870, %v935
      %v937 = vpop.f32.mrb[0].mxu0
      %v938 = vpop.f32.mrb[0].mxu0
      %v939 = vadd.f32 %v870, %v938
      %v940 = vpop.f32.mrb[0].mxu0
      %941 = vmatprep.mubr.bf16.mxu0 0
      %942 = vmatmul.mubr.bf16.gmra.mrb[0].mxu0 %v883
      %v943 = vpop.f32.mrb[0].mxu0
      %v944 = vadd.f32 %v870, %v943
      %v945 = vpop.f32.mrb[0].mxu0
      %v946 = vpop.f32.mrb[0].mxu0
      %v947 = vadd.f32 %v870, %v946
      %v948 = vpop.f32.mrb[0].mxu0
      %949 = vdwg.mxu0
      %v950 = vld [vmem:[%s10] sm:$0x1]
      %v952 = vlaneseq
      %v953 = vshrl.u32 %v952, 7
      %v954 = vsub.s32 0, %v953
      %v955 = vrot.slane %v950, %v954
      %v957 = vmul.f32 %v920, %v955
      %v958 = vmul.f32 %v923, %v955
      %v959 = vmul.f32 %v928, %v955
      %v960 = vmul.f32 %v931, %v955
      %v961 = vmul.f32 %v936, %v955
      %v962 = vmul.f32 %v939, %v955
      %v963 = vmul.f32 %v944, %v955
      %v964 = vmul.f32 %v947, %v955
      %v965 = vld [vmem:[%s11] sm:$0x1]
      %v967 = vlaneseq
      %v968 = vshrl.u32 %v967, 7
      %v969 = vsub.s32 0, %v968
      %v970 = vrot.slane %v965, %v969
      %v972 = vadd.f32 %v957, %v970
      %v973 = vadd.f32 %v958, %v970
      %v974 = vadd.f32 %v959, %v970
      %v975 = vadd.f32 %v960, %v970
      %v976 = vadd.f32 %v961, %v970
      %v977 = vadd.f32 %v962, %v970
      %v978 = vadd.f32 %v963, %v970
      %v979 = vadd.f32 %v964, %v970
      %v980 = vmax.f32 %v972, 0.0
      %v981 = vmax.f32 %v973, 0.0
      %v982 = vmax.f32 %v974, 0.0
      %v983 = vmax.f32 %v975, 0.0
      %v984 = vmax.f32 %v976, 0.0
      %v985 = vmax.f32 %v977, 0.0
      %v986 = vmax.f32 %v978, 0.0
      %v987 = vmax.f32 %v979, 0.0
      %v988 = vld [vmem:[%s12] sm:$0xf]
      %v989 = vpack.c.bf16 %v981, %v980
      %v990 = vpack.c.bf16 %v983, %v982
      %v991 = vpack.c.bf16 %v985, %v984
      %v992 = vpack.c.bf16 %v987, %v986
      %v993 = vpack.c.bf16 %v988, %v988
      %v994 = vld [vmem:[%s13] sm:$0x1]
      %v996 = vlaneseq
      %v997 = vshrl.u32 %v996, 7
      %v998 = vsub.s32 0, %v997
      %v999 = vrot.slane %v994, %v998
      %vm1001 = vcmask 31744
      %v1003 = vsel %vm1001, %v989, 0
      %v1006 = vsel %vm1001, %v990, 0
      %v1009 = vsel %vm1001, %v991, 0
      %v1012 = vsel %vm1001, %v992, 0
      %vm1014 = vcmask 1041408
      %v1016 = vsel %vm1014, %v993, 0
      %1018 = vmatprep.subr.bf16.mxu0 0
      %1019 = vmatpush1.bf16.msra.mxu0 %v1016
      %1020 = vmatprep.subr.bf16.mxu0 0
      %1021 = vmatpush1.bf16.msra.mxu0 0
      %1022 = vmatprep.subr.bf16.mxu0 0
      %1023 = vmatpush1.bf16.msra.mxu0 0
      %1024 = vmatprep.subr.bf16.mxu0 0
      %1025 = vmatpush1.bf16.msra.mxu0 0
      %1026 = vmatprep.subr.bf16.mxu0 0
      %1027 = vmatpush1.bf16.msra.mxu0 0
      %1028 = vmatprep.subr.bf16.mxu0 0
      %1029 = vmatpush1.bf16.msra.mxu0 0
      %1030 = vmatprep.subr.bf16.mxu0 0
      %1031 = vmatpush1.bf16.msra.mxu0 0
      %1032 = vmatprep.subr.bf16.mxu0 0
      %1033 = vmatpush1.bf16.msra.mxu0 0
      %1034 = vmatprep.subr.bf16.mxu0 0
      %1035 = vmatpush1.bf16.msra.mxu0 0
      %1036 = vmatprep.subr.bf16.mxu0 0
      %1037 = vmatpush1.bf16.msra.mxu0 0
      %1038 = vmatprep.subr.bf16.mxu0 0
      %1039 = vmatpush1.bf16.msra.mxu0 0
      %1040 = vmatprep.subr.bf16.mxu0 0
      %1041 = vmatpush1.bf16.msra.mxu0 0
      %1042 = vmatprep.subr.bf16.mxu0 0
      %1043 = vmatpush1.bf16.msra.mxu0 0
      %1044 = vmatprep.subr.bf16.mxu0 0
      %1045 = vmatpush1.bf16.msra.mxu0 0
      %1046 = vmatprep.subr.bf16.mxu0 0
      %1047 = vmatpush1.bf16.msra.mxu0 0
      %1048 = vmatprep.subr.bf16.mxu0 0
      %1049 = vmatpush1.bf16.msra.mxu0 0
      %1050 = vmatprep.mubr.bf16.mxu0 0
      %1051 = vmatmul.mubr.bf16.gmra.mrb[0].mxu0 %v1003
      %v1052 = vpop.f32.mrb[0].mxu0
      %v1053 = vadd.f32 %v999, %v1052
      %v1054 = vpop.f32.mrb[0].mxu0
      %v1055 = vpop.f32.mrb[0].mxu0
      %v1056 = vadd.f32 %v999, %v1055
      %v1057 = vpop.f32.mrb[0].mxu0
      %1058 = vmatprep.mubr.bf16.mxu0 0
      %1059 = vmatmul.mubr.bf16.gmra.mrb[0].mxu0 %v1006
      %v1060 = vpop.f32.mrb[0].mxu0
      %v1061 = vadd.f32 %v999, %v1060
      %v1062 = vpop.f32.mrb[0].mxu0
      %v1063 = vpop.f32.mrb[0].mxu0
      %v1064 = vadd.f32 %v999, %v1063
      %v1065 = vpop.f32.mrb[0].mxu0
      %1066 = vmatprep.mubr.bf16.mxu0 0
      %1067 = vmatmul.mubr.bf16.gmra.mrb[0].mxu0 %v1009
      %v1068 = vpop.f32.mrb[0].mxu0
      %v1069 = vadd.f32 %v999, %v1068
      %v1070 = vpop.f32.mrb[0].mxu0
      %v1071 = vpop.f32.mrb[0].mxu0
      %v1072 = vadd.f32 %v999, %v1071
      %v1073 = vpop.f32.mrb[0].mxu0
      %1074 = vmatprep.mubr.bf16.mxu0 0
      %1075 = vmatmul.mubr.bf16.gmra.mrb[0].mxu0 %v1012
      %v1076 = vpop.f32.mrb[0].mxu0
      %v1077 = vadd.f32 %v999, %v1076
      %v1078 = vpop.f32.mrb[0].mxu0
      %v1079 = vpop.f32.mrb[0].mxu0
      %v1080 = vadd.f32 %v999, %v1079
      %v1081 = vpop.f32.mrb[0].mxu0
      %1082 = vdwg.mxu0
      %v1083 = vld [vmem:[%s600] sm:$0xf]
      %v1084 = vld [vmem:[%s600 + $0x4] sm:$0xf]
      %v1085 = vld [vmem:[%s600 + $0x8] sm:$0xf]
      %v1086 = vld [vmem:[%s600 + $0xc] sm:$0xf]
      %v1087 = vld [vmem:[%s600 + $0x10] sm:$0xf]
      %v1088 = vld [vmem:[%s600 + $0x14] sm:$0xf]
      %v1089 = vld [vmem:[%s600 + $0x18] sm:$0xf]
      %v1090 = vld [vmem:[%s600 + $0x1c] sm:$0xf]
      %v1091 = vunpack.c.l.bf16 %v1083
      %v1092 = vunpack.c.l.bf16 %v1084
      %v1093 = vunpack.c.l.bf16 %v1085
      %v1094 = vunpack.c.l.bf16 %v1086
      %v1095 = vunpack.c.l.bf16 %v1087
      %v1096 = vunpack.c.l.bf16 %v1088
      %v1097 = vunpack.c.l.bf16 %v1089
      %v1098 = vunpack.c.l.bf16 %v1090
      %v1099 = vadd.f32 %v1091, %v747
      %v1100 = vadd.f32 %v1092, %v750
      %v1101 = vadd.f32 %v1093, %v755
      %v1102 = vadd.f32 %v1094, %v758
      %v1103 = vadd.f32 %v1095, %v763
      %v1104 = vadd.f32 %v1096, %v766
      %v1105 = vadd.f32 %v1097, %v771
      %v1106 = vadd.f32 %v1098, %v774
      %v1107 = vld [vmem:[#allocation2] sm:$0xff]
      %v1108 = vld [vmem:[#allocation2 + $0x8] sm:$0xff]
      %v1109 = vld [vmem:[#allocation2 + $0x10] sm:$0xff]
      %v1110 = vld [vmem:[#allocation2 + $0x18] sm:$0xff]
      %v1111 = vld [vmem:[#allocation2 + $0x20] sm:$0xff]
      %v1112 = vld [vmem:[#allocation2 + $0x28] sm:$0xff]
      %v1113 = vld [vmem:[#allocation2 + $0x30] sm:$0xff]
      %v1114 = vld [vmem:[#allocation2 + $0x38] sm:$0xff]
      %v1115 = vmax.f32 %v1107, %v1053
      %v1116 = vmax.f32 %v1108, %v1056
      %v1117 = vmax.f32 %v1109, %v1061
      %v1118 = vmax.f32 %v1110, %v1064
      %v1119 = vmax.f32 %v1111, %v1069
      %v1120 = vmax.f32 %v1112, %v1072
      %v1121 = vmax.f32 %v1113, %v1077
      %v1122 = vmax.f32 %v1114, %v1080
      %v1123 = vsub.f32 %v1107, %v1115
      %v1124 = vsub.f32 %v1108, %v1116
      %v1125 = vsub.f32 %v1109, %v1117
      %v1126 = vsub.f32 %v1110, %v1118
      %v1127 = vsub.f32 %v1111, %v1119
      %v1128 = vsub.f32 %v1112, %v1120
      %v1129 = vsub.f32 %v1113, %v1121
      %v1130 = vsub.f32 %v1114, %v1122
      %v1131 = vmul.f32 %v1123, 1.442695
      %v1132 = vpow.pop %v1131
      %v1133 = vmul.f32 %v1124, 1.442695
      %v1134 = vpow.pop %v1133
      %v1135 = vmul.f32 %v1125, 1.442695
      %v1136 = vpow.pop %v1135
      %v1137 = vmul.f32 %v1126, 1.442695
      %v1138 = vpow.pop %v1137
      %v1139 = vmul.f32 %v1127, 1.442695
      %v1140 = vpow.pop %v1139
      %v1141 = vmul.f32 %v1128, 1.442695
      %v1142 = vpow.pop %v1141
      %v1143 = vmul.f32 %v1129, 1.442695
      %v1144 = vpow.pop %v1143
      %v1145 = vmul.f32 %v1130, 1.442695
      %v1146 = vpow.pop %v1145
      %v1147 = vsub.f32 %v1053, %v1115
      %v1148 = vsub.f32 %v1056, %v1116
      %v1149 = vsub.f32 %v1061, %v1117
      %v1150 = vsub.f32 %v1064, %v1118
      %v1151 = vsub.f32 %v1069, %v1119
      %v1152 = vsub.f32 %v1072, %v1120
      %v1153 = vsub.f32 %v1077, %v1121
      %v1154 = vsub.f32 %v1080, %v1122
      %v1155 = vmul.f32 %v1147, 1.442695
      %v1156 = vpow.pop %v1155
      %v1157 = vmul.f32 %v1148, 1.442695
      %v1158 = vpow.pop %v1157
      %v1159 = vmul.f32 %v1149, 1.442695
      %v1160 = vpow.pop %v1159
      %v1161 = vmul.f32 %v1150, 1.442695
      %v1162 = vpow.pop %v1161
      %v1163 = vmul.f32 %v1151, 1.442695
      %v1164 = vpow.pop %v1163
      %v1165 = vmul.f32 %v1152, 1.442695
      %v1166 = vpow.pop %v1165
      %v1167 = vmul.f32 %v1153, 1.442695
      %v1168 = vpow.pop %v1167
      %v1169 = vmul.f32 %v1154, 1.442695
      %v1170 = vpow.pop %v1169
      %v1171 = vld [vmem:[#allocation3] sm:$0xff]
      %v1172 = vld [vmem:[#allocation3 + $0x8] sm:$0xff]
      %v1173 = vld [vmem:[#allocation3 + $0x10] sm:$0xff]
      %v1174 = vld [vmem:[#allocation3 + $0x18] sm:$0xff]
      %v1175 = vld [vmem:[#allocation3 + $0x20] sm:$0xff]
      %v1176 = vld [vmem:[#allocation3 + $0x28] sm:$0xff]
      %v1177 = vld [vmem:[#allocation3 + $0x30] sm:$0xff]
      %v1178 = vld [vmem:[#allocation3 + $0x38] sm:$0xff]
      %v1179 = vmul.f32 %v1132, %v1171
      %v1180 = vmul.f32 %v1134, %v1172
      %v1181 = vmul.f32 %v1136, %v1173
      %v1182 = vmul.f32 %v1138, %v1174
      %v1183 = vmul.f32 %v1140, %v1175
      %v1184 = vmul.f32 %v1142, %v1176
      %v1185 = vmul.f32 %v1144, %v1177
      %v1186 = vmul.f32 %v1146, %v1178
      %v1187 = vadd.f32 %v1179, %v1156
      %v1188 = vadd.f32 %v1180, %v1158
      %v1189 = vadd.f32 %v1181, %v1160
      %v1190 = vadd.f32 %v1182, %v1162
      %v1191 = vadd.f32 %v1183, %v1164
      %v1192 = vadd.f32 %v1184, %v1166
      %v1193 = vadd.f32 %v1185, %v1168
      %v1194 = vadd.f32 %v1186, %v1170
      %1195 = vst.msk [vmem:[#allocation3] sm:$0xff] %vm1001, %v1187
      %1196 = vst.msk [vmem:[#allocation3 + $0x8] sm:$0xff] %vm1001, %v1188
      %1197 = vst.msk [vmem:[#allocation3 + $0x10] sm:$0xff] %vm1001, %v1189
      %1198 = vst.msk [vmem:[#allocation3 + $0x18] sm:$0xff] %vm1001, %v1190
      %1199 = vst.msk [vmem:[#allocation3 + $0x20] sm:$0xff] %vm1001, %v1191
      %1200 = vst.msk [vmem:[#allocation3 + $0x28] sm:$0xff] %vm1001, %v1192
      %1201 = vst.msk [vmem:[#allocation3 + $0x30] sm:$0xff] %vm1001, %v1193
      %1202 = vst.msk [vmem:[#allocation3 + $0x38] sm:$0xff] %vm1001, %v1194
      %v1203 = vld [vmem:[#allocation4] sm:$0xff]
      %v1204 = vld [vmem:[#allocation4 + $0x8] sm:$0xff]
      %v1205 = vld [vmem:[#allocation4 + $0x10] sm:$0xff]
      %v1206 = vld [vmem:[#allocation4 + $0x18] sm:$0xff]
      %v1207 = vld [vmem:[#allocation4 + $0x20] sm:$0xff]
      %v1208 = vld [vmem:[#allocation4 + $0x28] sm:$0xff]
      %v1209 = vld [vmem:[#allocation4 + $0x30] sm:$0xff]
      %v1210 = vld [vmem:[#allocation4 + $0x38] sm:$0xff]
      %1219 = vrot.lane.b32.xlu0 %v1132, 4
      %v1220 = vpop.permute.xlu0 %1219
      %1221 = vrot.lane.b32.xlu0 %v1134, 4
      %v1222 = vpop.permute.xlu0 %1221
      %1223 = vrot.lane.b32.xlu0 %v1136, 4
      %v1224 = vpop.permute.xlu0 %1223
      %1225 = vrot.lane.b32.xlu0 %v1138, 4
      %v1226 = vpop.permute.xlu0 %1225
      %1227 = vrot.lane.b32.xlu0 %v1140, 4
      %v1228 = vpop.permute.xlu0 %1227
      %1229 = vrot.lane.b32.xlu0 %v1142, 4
      %v1230 = vpop.permute.xlu0 %1229
      %1231 = vrot.lane.b32.xlu0 %v1144, 4
      %v1232 = vpop.permute.xlu0 %1231
      %1233 = vrot.lane.b32.xlu0 %v1146, 4
      %v1234 = vpop.permute.xlu0 %1233
      %1243 = vrot.lane.b32.xlu0 %v1132, 8
      %v1244 = vpop.permute.xlu0 %1243
      %1245 = vrot.lane.b32.xlu0 %v1134, 8
      %v1246 = vpop.permute.xlu0 %1245
      %1247 = vrot.lane.b32.xlu0 %v1136, 8
      %v1248 = vpop.permute.xlu0 %1247
      %1249 = vrot.lane.b32.xlu0 %v1138, 8
      %v1250 = vpop.permute.xlu0 %1249
      %1251 = vrot.lane.b32.xlu0 %v1140, 8
      %v1252 = vpop.permute.xlu0 %1251
      %1253 = vrot.lane.b32.xlu0 %v1142, 8
      %v1254 = vpop.permute.xlu0 %1253
      %1255 = vrot.lane.b32.xlu0 %v1144, 8
      %v1256 = vpop.permute.xlu0 %1255
      %1257 = vrot.lane.b32.xlu0 %v1146, 8
      %v1258 = vpop.permute.xlu0 %1257
      %1267 = vrot.lane.b32.xlu0 %v1132, 12
      %v1268 = vpop.permute.xlu0 %1267
      %1269 = vrot.lane.b32.xlu0 %v1134, 12
      %v1270 = vpop.permute.xlu0 %1269
      %1271 = vrot.lane.b32.xlu0 %v1136, 12
      %v1272 = vpop.permute.xlu0 %1271
      %1273 = vrot.lane.b32.xlu0 %v1138, 12
      %v1274 = vpop.permute.xlu0 %1273
      %1275 = vrot.lane.b32.xlu0 %v1140, 12
      %v1276 = vpop.permute.xlu0 %1275
      %1277 = vrot.lane.b32.xlu0 %v1142, 12
      %v1278 = vpop.permute.xlu0 %1277
      %1279 = vrot.lane.b32.xlu0 %v1144, 12
      %v1280 = vpop.permute.xlu0 %1279
      %1281 = vrot.lane.b32.xlu0 %v1146, 12
      %v1282 = vpop.permute.xlu0 %1281
      %1291 = vrot.lane.b32.xlu0 %v1132, 16
      %v1292 = vpop.permute.xlu0 %1291
      %1293 = vrot.lane.b32.xlu0 %v1134, 16
      %v1294 = vpop.permute.xlu0 %1293
      %1295 = vrot.lane.b32.xlu0 %v1136, 16
      %v1296 = vpop.permute.xlu0 %1295
      %1297 = vrot.lane.b32.xlu0 %v1138, 16
      %v1298 = vpop.permute.xlu0 %1297
      %1299 = vrot.lane.b32.xlu0 %v1140, 16
      %v1300 = vpop.permute.xlu0 %1299
      %1301 = vrot.lane.b32.xlu0 %v1142, 16
      %v1302 = vpop.permute.xlu0 %1301
      %1303 = vrot.lane.b32.xlu0 %v1144, 16
      %v1304 = vpop.permute.xlu0 %1303
      %1305 = vrot.lane.b32.xlu0 %v1146, 16
      %v1306 = vpop.permute.xlu0 %1305
      %1315 = vrot.lane.b32.xlu0 %v1132, 20
      %v1316 = vpop.permute.xlu0 %1315
      %1317 = vrot.lane.b32.xlu0 %v1134, 20
      %v1318 = vpop.permute.xlu0 %1317
      %1319 = vrot.lane.b32.xlu0 %v1136, 20
      %v1320 = vpop.permute.xlu0 %1319
      %1321 = vrot.lane.b32.xlu0 %v1138, 20
      %v1322 = vpop.permute.xlu0 %1321
      %1323 = vrot.lane.b32.xlu0 %v1140, 20
      %v1324 = vpop.permute.xlu0 %1323
      %1325 = vrot.lane.b32.xlu0 %v1142, 20
      %v1326 = vpop.permute.xlu0 %1325
      %1327 = vrot.lane.b32.xlu0 %v1144, 20
      %v1328 = vpop.permute.xlu0 %1327
      %1329 = vrot.lane.b32.xlu0 %v1146, 20
      %v1330 = vpop.permute.xlu0 %1329
      %1339 = vrot.lane.b32.xlu0 %v1132, 24
      %v1340 = vpop.permute.xlu0 %1339
      %1341 = vrot.lane.b32.xlu0 %v1134, 24
      %v1342 = vpop.permute.xlu0 %1341
      %1343 = vrot.lane.b32.xlu0 %v1136, 24
      %v1344 = vpop.permute.xlu0 %1343
      %1345 = vrot.lane.b32.xlu0 %v1138, 24
      %v1346 = vpop.permute.xlu0 %1345
      %1347 = vrot.lane.b32.xlu0 %v1140, 24
      %v1348 = vpop.permute.xlu0 %1347
      %1349 = vrot.lane.b32.xlu0 %v1142, 24
      %v1350 = vpop.permute.xlu0 %1349
      %1351 = vrot.lane.b32.xlu0 %v1144, 24
      %v1352 = vpop.permute.xlu0 %1351
      %1353 = vrot.lane.b32.xlu0 %v1146, 24
      %v1354 = vpop.permute.xlu0 %1353
      %1363 = vrot.lane.b32.xlu0 %v1132, 28
      %v1364 = vpop.permute.xlu0 %1363
      %1365 = vrot.lane.b32.xlu0 %v1134, 28
      %v1366 = vpop.permute.xlu0 %1365
      %1367 = vrot.lane.b32.xlu0 %v1136, 28
      %v1368 = vpop.permute.xlu0 %1367
      %1369 = vrot.lane.b32.xlu0 %v1138, 28
      %v1370 = vpop.permute.xlu0 %1369
      %1371 = vrot.lane.b32.xlu0 %v1140, 28
      %v1372 = vpop.permute.xlu0 %1371
      %1373 = vrot.lane.b32.xlu0 %v1142, 28
      %v1374 = vpop.permute.xlu0 %1373
      %1375 = vrot.lane.b32.xlu0 %v1144, 28
      %v1376 = vpop.permute.xlu0 %1375
      %1377 = vrot.lane.b32.xlu0 %v1146, 28
      %v1378 = vpop.permute.xlu0 %1377
      %v1387 = vsel %vm1001, %v1132, %v1220
      %v1388 = vsel %vm1001, %v1134, %v1222
      %v1389 = vsel %vm1001, %v1136, %v1224
      %v1390 = vsel %vm1001, %v1138, %v1226
      %v1391 = vsel %vm1001, %v1140, %v1228
      %v1392 = vsel %vm1001, %v1142, %v1230
      %v1393 = vsel %vm1001, %v1144, %v1232
      %v1394 = vsel %vm1001, %v1146, %v1234
      %v1395 = vsel %vm695, %v1387, %v1244
      %v1396 = vsel %vm695, %v1388, %v1246
      %v1397 = vsel %vm695, %v1389, %v1248
      %v1398 = vsel %vm695, %v1390, %v1250
      %v1399 = vsel %vm695, %v1391, %v1252
      %v1400 = vsel %vm695, %v1392, %v1254
      %v1401 = vsel %vm695, %v1393, %v1256
      %v1402 = vsel %vm695, %v1394, %v1258
      %vm1403 = vcmask 97280
      %v1404 = vsel %vm1403, %v1395, %v1268
      %v1405 = vsel %vm1403, %v1396, %v1270
      %v1406 = vsel %vm1403, %v1397, %v1272
      %v1407 = vsel %vm1403, %v1398, %v1274
      %v1408 = vsel %vm1403, %v1399, %v1276
      %v1409 = vsel %vm1403, %v1400, %v1278
      %v1410 = vsel %vm1403, %v1401, %v1280
      %v1411 = vsel %vm1403, %v1402, %v1282
      %vm1412 = vcmask 130048
      %v1413 = vsel %vm1412, %v1404, %v1292
      %v1414 = vsel %vm1412, %v1405, %v1294
      %v1415 = vsel %vm1412, %v1406, %v1296
      %v1416 = vsel %vm1412, %v1407, %v1298
      %v1417 = vsel %vm1412, %v1408, %v1300
      %v1418 = vsel %vm1412, %v1409, %v1302
      %v1419 = vsel %vm1412, %v1410, %v1304
      %v1420 = vsel %vm1412, %v1411, %v1306
      %vm1421 = vcmask 162816
      %v1422 = vsel %vm1421, %v1413, %v1316
      %v1423 = vsel %vm1421, %v1414, %v1318
      %v1424 = vsel %vm1421, %v1415, %v1320
      %v1425 = vsel %vm1421, %v1416, %v1322
      %v1426 = vsel %vm1421, %v1417, %v1324
      %v1427 = vsel %vm1421, %v1418, %v1326
      %v1428 = vsel %vm1421, %v1419, %v1328
      %v1429 = vsel %vm1421, %v1420, %v1330
      %vm1430 = vcmask 195584
      %v1431 = vsel %vm1430, %v1422, %v1340
      %v1432 = vsel %vm1430, %v1423, %v1342
      %v1433 = vsel %vm1430, %v1424, %v1344
      %v1434 = vsel %vm1430, %v1425, %v1346
      %v1435 = vsel %vm1430, %v1426, %v1348
      %v1436 = vsel %vm1430, %v1427, %v1350
      %v1437 = vsel %vm1430, %v1428, %v1352
      %v1438 = vsel %vm1430, %v1429, %v1354
      %vm1439 = vcmask 228352
      %v1440 = vsel %vm1439, %v1431, %v1364
      %v1441 = vsel %vm1439, %v1432, %v1366
      %v1442 = vsel %vm1439, %v1433, %v1368
      %v1443 = vsel %vm1439, %v1434, %v1370
      %v1444 = vsel %vm1439, %v1435, %v1372
      %v1445 = vsel %vm1439, %v1436, %v1374
      %v1446 = vsel %vm1439, %v1437, %v1376
      %v1447 = vsel %vm1439, %v1438, %v1378
      %v1448 = vmul.f32 %v1203, %v1440
      %v1449 = vmul.f32 %v1204, %v1441
      %v1450 = vmul.f32 %v1205, %v1442
      %v1451 = vmul.f32 %v1206, %v1443
      %v1452 = vmul.f32 %v1207, %v1444
      %v1453 = vmul.f32 %v1208, %v1445
      %v1454 = vmul.f32 %v1209, %v1446
      %v1455 = vmul.f32 %v1210, %v1447
      %1464 = vrot.lane.b32.xlu0 %v1156, 4
      %v1465 = vpop.permute.xlu0 %1464
      %1466 = vrot.lane.b32.xlu0 %v1158, 4
      %v1467 = vpop.permute.xlu0 %1466
      %1468 = vrot.lane.b32.xlu0 %v1160, 4
      %v1469 = vpop.permute.xlu0 %1468
      %1470 = vrot.lane.b32.xlu0 %v1162, 4
      %v1471 = vpop.permute.xlu0 %1470
      %1472 = vrot.lane.b32.xlu0 %v1164, 4
      %v1473 = vpop.permute.xlu0 %1472
      %1474 = vrot.lane.b32.xlu0 %v1166, 4
      %v1475 = vpop.permute.xlu0 %1474
      %1476 = vrot.lane.b32.xlu0 %v1168, 4
      %v1477 = vpop.permute.xlu0 %1476
      %1478 = vrot.lane.b32.xlu0 %v1170, 4
      %v1479 = vpop.permute.xlu0 %1478
      %1488 = vrot.lane.b32.xlu0 %v1156, 8
      %v1489 = vpop.permute.xlu0 %1488
      %1490 = vrot.lane.b32.xlu0 %v1158, 8
      %v1491 = vpop.permute.xlu0 %1490
      %1492 = vrot.lane.b32.xlu0 %v1160, 8
      %v1493 = vpop.permute.xlu0 %1492
      %1494 = vrot.lane.b32.xlu0 %v1162, 8
      %v1495 = vpop.permute.xlu0 %1494
      %1496 = vrot.lane.b32.xlu0 %v1164, 8
      %v1497 = vpop.permute.xlu0 %1496
      %1498 = vrot.lane.b32.xlu0 %v1166, 8
      %v1499 = vpop.permute.xlu0 %1498
      %1500 = vrot.lane.b32.xlu0 %v1168, 8
      %v1501 = vpop.permute.xlu0 %1500
      %1502 = vrot.lane.b32.xlu0 %v1170, 8
      %v1503 = vpop.permute.xlu0 %1502
      %1512 = vrot.lane.b32.xlu0 %v1156, 12
      %v1513 = vpop.permute.xlu0 %1512
      %1514 = vrot.lane.b32.xlu0 %v1158, 12
      %v1515 = vpop.permute.xlu0 %1514
      %1516 = vrot.lane.b32.xlu0 %v1160, 12
      %v1517 = vpop.permute.xlu0 %1516
      %1518 = vrot.lane.b32.xlu0 %v1162, 12
      %v1519 = vpop.permute.xlu0 %1518
      %1520 = vrot.lane.b32.xlu0 %v1164, 12
      %v1521 = vpop.permute.xlu0 %1520
      %1522 = vrot.lane.b32.xlu0 %v1166, 12
      %v1523 = vpop.permute.xlu0 %1522
      %1524 = vrot.lane.b32.xlu0 %v1168, 12
      %v1525 = vpop.permute.xlu0 %1524
      %1526 = vrot.lane.b32.xlu0 %v1170, 12
      %v1527 = vpop.permute.xlu0 %1526
      %1536 = vrot.lane.b32.xlu0 %v1156, 16
      %v1537 = vpop.permute.xlu0 %1536
      %1538 = vrot.lane.b32.xlu0 %v1158, 16
      %v1539 = vpop.permute.xlu0 %1538
      %1540 = vrot.lane.b32.xlu0 %v1160, 16
      %v1541 = vpop.permute.xlu0 %1540
      %1542 = vrot.lane.b32.xlu0 %v1162, 16
      %v1543 = vpop.permute.xlu0 %1542
      %1544 = vrot.lane.b32.xlu0 %v1164, 16
      %v1545 = vpop.permute.xlu0 %1544
      %1546 = vrot.lane.b32.xlu0 %v1166, 16
      %v1547 = vpop.permute.xlu0 %1546
      %1548 = vrot.lane.b32.xlu0 %v1168, 16
      %v1549 = vpop.permute.xlu0 %1548
      %1550 = vrot.lane.b32.xlu0 %v1170, 16
      %v1551 = vpop.permute.xlu0 %1550
      %1560 = vrot.lane.b32.xlu0 %v1156, 20
      %v1561 = vpop.permute.xlu0 %1560
      %1562 = vrot.lane.b32.xlu0 %v1158, 20
      %v1563 = vpop.permute.xlu0 %1562
      %1564 = vrot.lane.b32.xlu0 %v1160, 20
      %v1565 = vpop.permute.xlu0 %1564
      %1566 = vrot.lane.b32.xlu0 %v1162, 20
      %v1567 = vpop.permute.xlu0 %1566
      %1568 = vrot.lane.b32.xlu0 %v1164, 20
      %v1569 = vpop.permute.xlu0 %1568
      %1570 = vrot.lane.b32.xlu0 %v1166, 20
      %v1571 = vpop.permute.xlu0 %1570
      %1572 = vrot.lane.b32.xlu0 %v1168, 20
      %v1573 = vpop.permute.xlu0 %1572
      %1574 = vrot.lane.b32.xlu0 %v1170, 20
      %v1575 = vpop.permute.xlu0 %1574
      %1584 = vrot.lane.b32.xlu0 %v1156, 24
      %v1585 = vpop.permute.xlu0 %1584
      %1586 = vrot.lane.b32.xlu0 %v1158, 24
      %v1587 = vpop.permute.xlu0 %1586
      %1588 = vrot.lane.b32.xlu0 %v1160, 24
      %v1589 = vpop.permute.xlu0 %1588
      %1590 = vrot.lane.b32.xlu0 %v1162, 24
      %v1591 = vpop.permute.xlu0 %1590
      %1592 = vrot.lane.b32.xlu0 %v1164, 24
      %v1593 = vpop.permute.xlu0 %1592
      %1594 = vrot.lane.b32.xlu0 %v1166, 24
      %v1595 = vpop.permute.xlu0 %1594
      %1596 = vrot.lane.b32.xlu0 %v1168, 24
      %v1597 = vpop.permute.xlu0 %1596
      %1598 = vrot.lane.b32.xlu0 %v1170, 24
      %v1599 = vpop.permute.xlu0 %1598
      %1608 = vrot.lane.b32.xlu0 %v1156, 28
      %v1609 = vpop.permute.xlu0 %1608
      %1610 = vrot.lane.b32.xlu0 %v1158, 28
      %v1611 = vpop.permute.xlu0 %1610
      %1612 = vrot.lane.b32.xlu0 %v1160, 28
      %v1613 = vpop.permute.xlu0 %1612
      %1614 = vrot.lane.b32.xlu0 %v1162, 28
      %v1615 = vpop.permute.xlu0 %1614
      %1616 = vrot.lane.b32.xlu0 %v1164, 28
      %v1617 = vpop.permute.xlu0 %1616
      %1618 = vrot.lane.b32.xlu0 %v1166, 28
      %v1619 = vpop.permute.xlu0 %1618
      %1620 = vrot.lane.b32.xlu0 %v1168, 28
      %v1621 = vpop.permute.xlu0 %1620
      %1622 = vrot.lane.b32.xlu0 %v1170, 28
      %v1623 = vpop.permute.xlu0 %1622
      %v1632 = vsel %vm1001, %v1156, %v1465
      %v1633 = vsel %vm1001, %v1158, %v1467
      %v1634 = vsel %vm1001, %v1160, %v1469
      %v1635 = vsel %vm1001, %v1162, %v1471
      %v1636 = vsel %vm1001, %v1164, %v1473
      %v1637 = vsel %vm1001, %v1166, %v1475
      %v1638 = vsel %vm1001, %v1168, %v1477
      %v1639 = vsel %vm1001, %v1170, %v1479
      %v1640 = vsel %vm695, %v1632, %v1489
      %v1641 = vsel %vm695, %v1633, %v1491
      %v1642 = vsel %vm695, %v1634, %v1493
      %v1643 = vsel %vm695, %v1635, %v1495
      %v1644 = vsel %vm695, %v1636, %v1497
      %v1645 = vsel %vm695, %v1637, %v1499
      %v1646 = vsel %vm695, %v1638, %v1501
      %v1647 = vsel %vm695, %v1639, %v1503
      %v1648 = vsel %vm1403, %v1640, %v1513
      %v1649 = vsel %vm1403, %v1641, %v1515
      %v1650 = vsel %vm1403, %v1642, %v1517
      %v1651 = vsel %vm1403, %v1643, %v1519
      %v1652 = vsel %vm1403, %v1644, %v1521
      %v1653 = vsel %vm1403, %v1645, %v1523
      %v1654 = vsel %vm1403, %v1646, %v1525
      %v1655 = vsel %vm1403, %v1647, %v1527
      %v1656 = vsel %vm1412, %v1648, %v1537
      %v1657 = vsel %vm1412, %v1649, %v1539
      %v1658 = vsel %vm1412, %v1650, %v1541
      %v1659 = vsel %vm1412, %v1651, %v1543
      %v1660 = vsel %vm1412, %v1652, %v1545
      %v1661 = vsel %vm1412, %v1653, %v1547
      %v1662 = vsel %vm1412, %v1654, %v1549
      %v1663 = vsel %vm1412, %v1655, %v1551
      %v1664 = vsel %vm1421, %v1656, %v1561
      %v1665 = vsel %vm1421, %v1657, %v1563
      %v1666 = vsel %vm1421, %v1658, %v1565
      %v1667 = vsel %vm1421, %v1659, %v1567
      %v1668 = vsel %vm1421, %v1660, %v1569
      %v1669 = vsel %vm1421, %v1661, %v1571
      %v1670 = vsel %vm1421, %v1662, %v1573
      %v1671 = vsel %vm1421, %v1663, %v1575
      %v1672 = vsel %vm1430, %v1664, %v1585
      %v1673 = vsel %vm1430, %v1665, %v1587
      %v1674 = vsel %vm1430, %v1666, %v1589
      %v1675 = vsel %vm1430, %v1667, %v1591
      %v1676 = vsel %vm1430, %v1668, %v1593
      %v1677 = vsel %vm1430, %v1669, %v1595
      %v1678 = vsel %vm1430, %v1670, %v1597
      %v1679 = vsel %vm1430, %v1671, %v1599
      %v1680 = vsel %vm1439, %v1672, %v1609
      %v1681 = vsel %vm1439, %v1673, %v1611
      %v1682 = vsel %vm1439, %v1674, %v1613
      %v1683 = vsel %vm1439, %v1675, %v1615
      %v1684 = vsel %vm1439, %v1676, %v1617
      %v1685 = vsel %vm1439, %v1677, %v1619
      %v1686 = vsel %vm1439, %v1678, %v1621
      %v1687 = vsel %vm1439, %v1679, %v1623
      %v1688 = vmul.f32 %v1099, %v1680
      %v1689 = vmul.f32 %v1100, %v1681
      %v1690 = vmul.f32 %v1101, %v1682
      %v1691 = vmul.f32 %v1102, %v1683
      %v1692 = vmul.f32 %v1103, %v1684
      %v1693 = vmul.f32 %v1104, %v1685
      %v1694 = vmul.f32 %v1105, %v1686
      %v1695 = vmul.f32 %v1106, %v1687
      %v1696 = vadd.f32 %v1448, %v1688
      %v1697 = vadd.f32 %v1449, %v1689
      %v1698 = vadd.f32 %v1450, %v1690
      %v1699 = vadd.f32 %v1451, %v1691
      %v1700 = vadd.f32 %v1452, %v1692
      %v1701 = vadd.f32 %v1453, %v1693
      %v1702 = vadd.f32 %v1454, %v1694
      %v1703 = vadd.f32 %v1455, %v1695
      %1704 = vst.msk [vmem:[#allocation4] sm:$0xff] %vm872, %v1696
      %1705 = vst.msk [vmem:[#allocation4 + $0x8] sm:$0xff] %vm872, %v1697
      %1706 = vst.msk [vmem:[#allocation4 + $0x10] sm:$0xff] %vm872, %v1698
      %1707 = vst.msk [vmem:[#allocation4 + $0x18] sm:$0xff] %vm872, %v1699
      %1708 = vst.msk [vmem:[#allocation4 + $0x20] sm:$0xff] %vm872, %v1700
      %1709 = vst.msk [vmem:[#allocation4 + $0x28] sm:$0xff] %vm872, %v1701
      %1710 = vst.msk [vmem:[#allocation4 + $0x30] sm:$0xff] %vm872, %v1702
      %1711 = vst.msk [vmem:[#allocation4 + $0x38] sm:$0xff] %vm872, %v1703
      %1712 = vst.msk [vmem:[#allocation2] sm:$0xff] %vm1001, %v1115
      %1713 = vst.msk [vmem:[#allocation2 + $0x8] sm:$0xff] %vm1001, %v1116
      %1714 = vst.msk [vmem:[#allocation2 + $0x10] sm:$0xff] %vm1001, %v1117
      %1715 = vst.msk [vmem:[#allocation2 + $0x18] sm:$0xff] %vm1001, %v1118
      %1716 = vst.msk [vmem:[#allocation2 + $0x20] sm:$0xff] %vm1001, %v1119
      %1717 = vst.msk [vmem:[#allocation2 + $0x28] sm:$0xff] %vm1001, %v1120
      %1718 = vst.msk [vmem:[#allocation2 + $0x30] sm:$0xff] %vm1001, %v1121
      %1719 = vst.msk [vmem:[#allocation2 + $0x38] sm:$0xff] %vm1001, %v1122
      %p1720 = scmp.eq.s32.totalorder %s32, 15
      // Predicated region
      $region81: #{boundary_transformer_block_forward.11} parent=75 // pred_check
        %p1721 = pneg %p1720
      $region82: #{boundary_transformer_block_forward.11} parent=75 // pred_check_branch
        %1723 = sbr.rel (%p1721) target = $region84
      $region83: #{boundary_transformer_block_forward.11} parent=75 // pred_region
        %v1724 = vld [vmem:[#allocation3] sm:$0xff]
        %v1725 = vld [vmem:[#allocation3 + $0x8] sm:$0xff]
        %v1726 = vld [vmem:[#allocation3 + $0x10] sm:$0xff]
        %v1727 = vld [vmem:[#allocation3 + $0x18] sm:$0xff]
        %v1728 = vld [vmem:[#allocation3 + $0x20] sm:$0xff]
        %v1729 = vld [vmem:[#allocation3 + $0x28] sm:$0xff]
        %v1730 = vld [vmem:[#allocation3 + $0x30] sm:$0xff]
        %v1731 = vld [vmem:[#allocation3 + $0x38] sm:$0xff]
        %v1732 = vrcp.pop %v1724
        %v1733 = vmul.f32 1.0, %v1732
        %v1734 = vrcp.pop %v1725
        %v1735 = vmul.f32 1.0, %v1734
        %v1736 = vrcp.pop %v1726
        %v1737 = vmul.f32 1.0, %v1736
        %v1738 = vrcp.pop %v1727
        %v1739 = vmul.f32 1.0, %v1738
        %v1740 = vrcp.pop %v1728
        %v1741 = vmul.f32 1.0, %v1740
        %v1742 = vrcp.pop %v1729
        %v1743 = vmul.f32 1.0, %v1742
        %v1744 = vrcp.pop %v1730
        %v1745 = vmul.f32 1.0, %v1744
        %v1746 = vrcp.pop %v1731
        %v1747 = vmul.f32 1.0, %v1746
        %v1748 = vld [vmem:[#allocation4] sm:$0xff]
        %v1749 = vld [vmem:[#allocation4 + $0x8] sm:$0xff]
        %v1750 = vld [vmem:[#allocation4 + $0x10] sm:$0xff]
        %v1751 = vld [vmem:[#allocation4 + $0x18] sm:$0xff]
        %v1752 = vld [vmem:[#allocation4 + $0x20] sm:$0xff]
        %v1753 = vld [vmem:[#allocation4 + $0x28] sm:$0xff]
        %v1754 = vld [vmem:[#allocation4 + $0x30] sm:$0xff]
        %v1755 = vld [vmem:[#allocation4 + $0x38] sm:$0xff]
        %1764 = vrot.lane.b32.xlu0 %v1733, 4
        %v1765 = vpop.permute.xlu0 %1764
        %1766 = vrot.lane.b32.xlu0 %v1735, 4
        %v1767 = vpop.permute.xlu0 %1766
        %1768 = vrot.lane.b32.xlu0 %v1737, 4
        %v1769 = vpop.permute.xlu0 %1768
        %1770 = vrot.lane.b32.xlu0 %v1739, 4
        %v1771 = vpop.permute.xlu0 %1770
        %1772 = vrot.lane.b32.xlu0 %v1741, 4
        %v1773 = vpop.permute.xlu0 %1772
        %1774 = vrot.lane.b32.xlu0 %v1743, 4
        %v1775 = vpop.permute.xlu0 %1774
        %1776 = vrot.lane.b32.xlu0 %v1745, 4
        %v1777 = vpop.permute.xlu0 %1776
        %1778 = vrot.lane.b32.xlu0 %v1747, 4
        %v1779 = vpop.permute.xlu0 %1778
        %1788 = vrot.lane.b32.xlu0 %v1733, 8
        %v1789 = vpop.permute.xlu0 %1788
        %1790 = vrot.lane.b32.xlu0 %v1735, 8
        %v1791 = vpop.permute.xlu0 %1790
        %1792 = vrot.lane.b32.xlu0 %v1737, 8
        %v1793 = vpop.permute.xlu0 %1792
        %1794 = vrot.lane.b32.xlu0 %v1739, 8
        %v1795 = vpop.permute.xlu0 %1794
        %1796 = vrot.lane.b32.xlu0 %v1741, 8
        %v1797 = vpop.permute.xlu0 %1796
        %1798 = vrot.lane.b32.xlu0 %v1743, 8
        %v1799 = vpop.permute.xlu0 %1798
        %1800 = vrot.lane.b32.xlu0 %v1745, 8
        %v1801 = vpop.permute.xlu0 %1800
        %1802 = vrot.lane.b32.xlu0 %v1747, 8
        %v1803 = vpop.permute.xlu0 %1802
        %1812 = vrot.lane.b32.xlu0 %v1733, 12
        %v1813 = vpop.permute.xlu0 %1812
        %1814 = vrot.lane.b32.xlu0 %v1735, 12
        %v1815 = vpop.permute.xlu0 %1814
        %1816 = vrot.lane.b32.xlu0 %v1737, 12
        %v1817 = vpop.permute.xlu0 %1816
        %1818 = vrot.lane.b32.xlu0 %v1739, 12
        %v1819 = vpop.permute.xlu0 %1818
        %1820 = vrot.lane.b32.xlu0 %v1741, 12
        %v1821 = vpop.permute.xlu0 %1820
        %1822 = vrot.lane.b32.xlu0 %v1743, 12
        %v1823 = vpop.permute.xlu0 %1822
        %1824 = vrot.lane.b32.xlu0 %v1745, 12
        %v1825 = vpop.permute.xlu0 %1824
        %1826 = vrot.lane.b32.xlu0 %v1747, 12
        %v1827 = vpop.permute.xlu0 %1826
        %1836 = vrot.lane.b32.xlu0 %v1733, 16
        %v1837 = vpop.permute.xlu0 %1836
        %1838 = vrot.lane.b32.xlu0 %v1735, 16
        %v1839 = vpop.permute.xlu0 %1838
        %1840 = vrot.lane.b32.xlu0 %v1737, 16
        %v1841 = vpop.permute.xlu0 %1840
        %1842 = vrot.lane.b32.xlu0 %v1739, 16
        %v1843 = vpop.permute.xlu0 %1842
        %1844 = vrot.lane.b32.xlu0 %v1741, 16
        %v1845 = vpop.permute.xlu0 %1844
        %1846 = vrot.lane.b32.xlu0 %v1743, 16
        %v1847 = vpop.permute.xlu0 %1846
        %1848 = vrot.lane.b32.xlu0 %v1745, 16
        %v1849 = vpop.permute.xlu0 %1848
        %1850 = vrot.lane.b32.xlu0 %v1747, 16
        %v1851 = vpop.permute.xlu0 %1850
        %1860 = vrot.lane.b32.xlu0 %v1733, 20
        %v1861 = vpop.permute.xlu0 %1860
        %1862 = vrot.lane.b32.xlu0 %v1735, 20
        %v1863 = vpop.permute.xlu0 %1862
        %1864 = vrot.lane.b32.xlu0 %v1737, 20
        %v1865 = vpop.permute.xlu0 %1864
        %1866 = vrot.lane.b32.xlu0 %v1739, 20
        %v1867 = vpop.permute.xlu0 %1866
        %1868 = vrot.lane.b32.xlu0 %v1741, 20
        %v1869 = vpop.permute.xlu0 %1868
        %1870 = vrot.lane.b32.xlu0 %v1743, 20
        %v1871 = vpop.permute.xlu0 %1870
        %1872 = vrot.lane.b32.xlu0 %v1745, 20
        %v1873 = vpop.permute.xlu0 %1872
        %1874 = vrot.lane.b32.xlu0 %v1747, 20
        %v1875 = vpop.permute.xlu0 %1874
        %1884 = vrot.lane.b32.xlu0 %v1733, 24
        %v1885 = vpop.permute.xlu0 %1884
        %1886 = vrot.lane.b32.xlu0 %v1735, 24
        %v1887 = vpop.permute.xlu0 %1886
        %1888 = vrot.lane.b32.xlu0 %v1737, 24
        %v1889 = vpop.permute.xlu0 %1888
        %1890 = vrot.lane.b32.xlu0 %v1739, 24
        %v1891 = vpop.permute.xlu0 %1890
        %1892 = vrot.lane.b32.xlu0 %v1741, 24
        %v1893 = vpop.permute.xlu0 %1892
        %1894 = vrot.lane.b32.xlu0 %v1743, 24
        %v1895 = vpop.permute.xlu0 %1894
        %1896 = vrot.lane.b32.xlu0 %v1745, 24
        %v1897 = vpop.permute.xlu0 %1896
        %1898 = vrot.lane.b32.xlu0 %v1747, 24
        %v1899 = vpop.permute.xlu0 %1898
        %1908 = vrot.lane.b32.xlu0 %v1733, 28
        %v1909 = vpop.permute.xlu0 %1908
        %1910 = vrot.lane.b32.xlu0 %v1735, 28
        %v1911 = vpop.permute.xlu0 %1910
        %1912 = vrot.lane.b32.xlu0 %v1737, 28
        %v1913 = vpop.permute.xlu0 %1912
        %1914 = vrot.lane.b32.xlu0 %v1739, 28
        %v1915 = vpop.permute.xlu0 %1914
        %1916 = vrot.lane.b32.xlu0 %v1741, 28
        %v1917 = vpop.permute.xlu0 %1916
        %1918 = vrot.lane.b32.xlu0 %v1743, 28
        %v1919 = vpop.permute.xlu0 %1918
        %1920 = vrot.lane.b32.xlu0 %v1745, 28
        %v1921 = vpop.permute.xlu0 %1920
        %1922 = vrot.lane.b32.xlu0 %v1747, 28
        %v1923 = vpop.permute.xlu0 %1922
        %v1932 = vsel %vm1001, %v1733, %v1765
        %v1933 = vsel %vm1001, %v1735, %v1767
        %v1934 = vsel %vm1001, %v1737, %v1769
        %v1935 = vsel %vm1001, %v1739, %v1771
        %v1936 = vsel %vm1001, %v1741, %v1773
        %v1937 = vsel %vm1001, %v1743, %v1775
        %v1938 = vsel %vm1001, %v1745, %v1777
        %v1939 = vsel %vm1001, %v1747, %v1779
        %v1940 = vsel %vm695, %v1932, %v1789
        %v1941 = vsel %vm695, %v1933, %v1791
        %v1942 = vsel %vm695, %v1934, %v1793
        %v1943 = vsel %vm695, %v1935, %v1795
        %v1944 = vsel %vm695, %v1936, %v1797
        %v1945 = vsel %vm695, %v1937, %v1799
        %v1946 = vsel %vm695, %v1938, %v1801
        %v1947 = vsel %vm695, %v1939, %v1803
        %v1948 = vsel %vm1403, %v1940, %v1813
        %v1949 = vsel %vm1403, %v1941, %v1815
        %v1950 = vsel %vm1403, %v1942, %v1817
        %v1951 = vsel %vm1403, %v1943, %v1819
        %v1952 = vsel %vm1403, %v1944, %v1821
        %v1953 = vsel %vm1403, %v1945, %v1823
        %v1954 = vsel %vm1403, %v1946, %v1825
        %v1955 = vsel %vm1403, %v1947, %v1827
        %v1956 = vsel %vm1412, %v1948, %v1837
        %v1957 = vsel %vm1412, %v1949, %v1839
        %v1958 = vsel %vm1412, %v1950, %v1841
        %v1959 = vsel %vm1412, %v1951, %v1843
        %v1960 = vsel %vm1412, %v1952, %v1845
        %v1961 = vsel %vm1412, %v1953, %v1847
        %v1962 = vsel %vm1412, %v1954, %v1849
        %v1963 = vsel %vm1412, %v1955, %v1851
        %v1964 = vsel %vm1421, %v1956, %v1861
        %v1965 = vsel %vm1421, %v1957, %v1863
        %v1966 = vsel %vm1421, %v1958, %v1865
        %v1967 = vsel %vm1421, %v1959, %v1867
        %v1968 = vsel %vm1421, %v1960, %v1869
        %v1969 = vsel %vm1421, %v1961, %v1871
        %v1970 = vsel %vm1421, %v1962, %v1873
        %v1971 = vsel %vm1421, %v1963, %v1875
        %v1972 = vsel %vm1430, %v1964, %v1885
        %v1973 = vsel %vm1430, %v1965, %v1887
        %v1974 = vsel %vm1430, %v1966, %v1889
        %v1975 = vsel %vm1430, %v1967, %v1891
        %v1976 = vsel %vm1430, %v1968, %v1893
        %v1977 = vsel %vm1430, %v1969, %v1895
        %v1978 = vsel %vm1430, %v1970, %v1897
        %v1979 = vsel %vm1430, %v1971, %v1899
        %v1980 = vsel %vm1439, %v1972, %v1909
        %v1981 = vsel %vm1439, %v1973, %v1911
        %v1982 = vsel %vm1439, %v1974, %v1913
        %v1983 = vsel %vm1439, %v1975, %v1915
        %v1984 = vsel %vm1439, %v1976, %v1917
        %v1985 = vsel %vm1439, %v1977, %v1919
        %v1986 = vsel %vm1439, %v1978, %v1921
        %v1987 = vsel %vm1439, %v1979, %v1923
        %v1988 = vmul.f32 %v1748, %v1980
        %v1989 = vmul.f32 %v1749, %v1981
        %v1990 = vmul.f32 %v1750, %v1982
        %v1991 = vmul.f32 %v1751, %v1983
        %v1992 = vmul.f32 %v1752, %v1984
        %v1993 = vmul.f32 %v1753, %v1985
        %v1994 = vmul.f32 %v1754, %v1986
        %v1995 = vmul.f32 %v1755, %v1987
        %1996 = vst.msk [vmem:[%s622] sm:$0xff] %vm872, %v1988
        %1997 = vst.msk [vmem:[%s622 + $0x8] sm:$0xff] %vm872, %v1989
        %1998 = vst.msk [vmem:[%s622 + $0x10] sm:$0xff] %vm872, %v1990
        %1999 = vst.msk [vmem:[%s622 + $0x18] sm:$0xff] %vm872, %v1991
        %2000 = vst.msk [vmem:[%s622 + $0x20] sm:$0xff] %vm872, %v1992
        %2001 = vst.msk [vmem:[%s622 + $0x28] sm:$0xff] %vm872, %v1993
        %2002 = vst.msk [vmem:[%s622 + $0x30] sm:$0xff] %vm872, %v1994
        %2003 = vst.msk [vmem:[%s622 + $0x38] sm:$0xff] %vm872, %v1995
        %v2004 = vsel %vm872, %v1988, 0.0
        %v2005 = vsel %vm872, %v1989, 0.0
        %v2006 = vadd.f32 %v2004, %v2005
        %v2007 = vsel %vm872, %v1990, 0.0
        %v2008 = vadd.f32 %v2006, %v2007
        %v2009 = vsel %vm872, %v1991, 0.0
        %v2010 = vadd.f32 %v2008, %v2009
        %v2011 = vsel %vm872, %v1992, 0.0
        %v2012 = vadd.f32 %v2010, %v2011
        %v2013 = vsel %vm872, %v1993, 0.0
        %v2014 = vadd.f32 %v2012, %v2013
        %v2015 = vsel %vm872, %v1994, 0.0
        %v2016 = vadd.f32 %v2014, %v2015
        %v2017 = vsel %vm872, %v1995, 0.0
        %v2018 = vadd.f32 %v2016, %v2017
        %v2019 = vrot.slane %v2018, 4
        %v2020 = vadd.f32 %v2018, %v2019
        %v2021 = vrot.slane %v2020, 2
        %v2022 = vadd.f32 %v2020, %v2021
        %v2023 = vrot.slane %v2022, 1
        %v2024 = vadd.f32 %v2022, %v2023
        %v2025 = vmul.f32 %v1988, %v1988
        %v2026 = vmul.f32 %v1989, %v1989
        %v2027 = vmul.f32 %v1990, %v1990
        %v2028 = vmul.f32 %v1991, %v1991
        %v2029 = vmul.f32 %v1992, %v1992
        %v2030 = vmul.f32 %v1993, %v1993
        %v2031 = vmul.f32 %v1994, %v1994
        %v2032 = vmul.f32 %v1995, %v1995
        %v2033 = vsel %vm872, %v2025, 0.0
        %v2034 = vsel %vm872, %v2026, 0.0
        %v2035 = vadd.f32 %v2033, %v2034
        %v2036 = vsel %vm872, %v2027, 0.0
        %v2037 = vadd.f32 %v2035, %v2036
        %v2038 = vsel %vm872, %v2028, 0.0
        %v2039 = vadd.f32 %v2037, %v2038
        %v2040 = vsel %vm872, %v2029, 0.0
        %v2041 = vadd.f32 %v2039, %v2040
        %v2042 = vsel %vm872, %v2030, 0.0
        %v2043 = vadd.f32 %v2041, %v2042
        %v2044 = vsel %vm872, %v2031, 0.0
        %v2045 = vadd.f32 %v2043, %v2044
        %v2046 = vsel %vm872, %v2032, 0.0
        %v2047 = vadd.f32 %v2045, %v2046
        %v2048 = vrot.slane %v2047, 4
        %v2049 = vadd.f32 %v2047, %v2048
        %v2050 = vrot.slane %v2049, 2
        %v2051 = vadd.f32 %v2049, %v2050
        %v2052 = vrot.slane %v2051, 1
        %v2053 = vadd.f32 %v2051, %v2052
        %2055 = vrot.lane.b32.xlu0 %v2053, 32
        %v2056 = vpop.permute.xlu0 %2055
        %v2058 = vsel %vm872, %v2024, %v2056
        %vm2059 = vcmask 516096
        %2060 = vst.msk [vmem:[%s626] sm:$0x1] %vm2059, %v2058
      $region84: #{boundary_transformer_block_forward.11} parent=75 // pred_fallthru
        _
      %s2061 = smul.u32 8, %s31
      %p2062 = scmp.lt.s32.totalorder %s2061, 7
      %s2063 = scalar_select %p2062, %s2061, 7
      %s2064 = smul.addr %s2063, 8
      %s2065 = scalar_lea.vmem %s14, %s2064
      %p2066 = scmp.lt.s32.totalorder %s31, 0
      %s2067 = scalar_select %p2066, %s31, 0
      %s2068 = scalar_lea.vmem %s15, %s2067
      // Predicated region
      $region85: #{boundary_transformer_block_forward.11} parent=75 // pred_check
        %p2069 = pneg %p377
      $region86: #{boundary_transformer_block_forward.11} parent=75 // pred_check_branch
        %2071 = sbr.rel (%p2069) target = $region88
      $region87: #{boundary_transformer_block_forward.11} parent=75 // pred_region
        %s2072 = smul.u32 8, %s31
      $region88: #{boundary_transformer_block_forward.11} parent=75 // pred_fallthru
        _
      // Predicated region
      $region89: #{boundary_transformer_block_forward.11} parent=75 // pred_check
        %p2073 = pneg %p403
      $region90: #{boundary_transformer_block_forward.11} parent=75 // pred_check_branch
        %2075 = sbr.rel (%p2073) target = $region92
      $region91: #{boundary_transformer_block_forward.11} parent=75 // pred_region
        _
      $region92: #{boundary_transformer_block_forward.11} parent=75 // pred_fallthru
        _
      // Predicated region
      $region93: #{boundary_transformer_block_forward.11} parent=75 // pred_check
        %p2076 = pneg %p377
      $region94: #{boundary_transformer_block_forward.11} parent=75 // pred_check_branch
        %2078 = sbr.rel (%p2076) target = $region96
      $region95: #{boundary_transformer_block_forward.11} parent=75 // pred_region
        %s2079 = smul.u32 8, %s31
        %p2080 = scmp.lt.s32.totalorder %s2079, 7
        %s2081 = scalar_select %p2080, %s2079, 7
        %s2082 = smul.addr %s2081, 8
        %s2083 = scalar_lea.vmem %s14, %s2082
      $region96: #{boundary_transformer_block_forward.11} parent=75 // pred_fallthru
        _
      // Predicated region
      $region97: #{boundary_transformer_block_forward.11} parent=75 // pred_check
        %p2084 = pneg %p403
      $region98: #{boundary_transformer_block_forward.11} parent=75 // pred_check_branch
        %2086 = sbr.rel (%p2084) target = $region100
      $region99: #{boundary_transformer_block_forward.11} parent=75 // pred_region
        %p2087 = scmp.lt.s32.totalorder %s31, 0
        %s2088 = scalar_select %p2087, %s31, 0
        %s2089 = scalar_lea.vmem %s15, %s2088
      $region100: #{boundary_transformer_block_forward.11} parent=75 // pred_fallthru
        _
    $region76: #{boundary_transformer_block_forward.11} parent=5 // pred_fallthru
      _
    %p2090 = scmp.le.s32.totalorder 2, %s22
    // Predicated region
    $region101: #{boundary_transformer_block_forward.11} parent=5 // pred_check
      %p2091 = pneg %p2090
    $region102: #{boundary_transformer_block_forward.11} parent=5 // pred_check_branch
      %2093 = sbr.rel (%p2091) target = $region104
    $region103: #{boundary_transformer_block_forward.11} parent=5 // pred_region
      %s2094 = ssub.s32 %s22, 2
    $region104: #{boundary_transformer_block_forward.11} parent=5 // pred_fallthru
      _
  $region6: #{boundary_transformer_block_forward.11} parent=0 // loop_footer
    %s26 = sadd.s32 1, %s22
  $region7: #{boundary_transformer_block_forward.11} parent=0 // loop_footer_branch
    %21 = sbr.rel target = $region3
  $region8: #{boundary_transformer_block_forward.11} parent=0 // loop_exit
    _

</llo_original>
